<compile_context>
chip_gen: v6e
topology: v6e:2x2x1
jax: 0.10.0
libtpu: 0.0.40
codegen_flags: <defaults>
</compile_context>

<pallas_src>
from functools import partial

import numpy as np
import jax
import jax.numpy as jnp
from jax import lax
from jax.experimental import pallas as pl
from jax.experimental.pallas import tpu as pltpu


# --------------------------------------------------------------------------- kernel

def _kmeans_pipeline_kernel(x_ref, sil_ref, labels_ref, cost_ref,
                            *, n, d, max_iters, tol):
    """Fused: standardize + distances + batched Lloyd (all k at once) + silhouettes."""
    X = x_ref[...].astype(jnp.float32)                            # (n, d)

    n_k = n - 2                                                   # candidate k's: 2..n-1
    maxk = n - 1
    ks = list(range(2, n))
    starts = []
    off = 0
    for k in ks:
        starts.append(off)
        off += k
    K_tot = off                                                   # stacked centroid columns

    big = jnp.float32(1e30)
    Kf = jnp.float32(K_tot)
    ones_1d = jnp.ones((1, d), jnp.float32)

    # ---- StandardScaler (population std, zero-variance guard) -------------------
    mu = jnp.mean(X, axis=0, keepdims=True)
    var = jnp.mean((X - mu) ** 2, axis=0, keepdims=True)
    inv_std = jnp.where(var > 0.0, lax.rsqrt(var), 1.0)
    Xs = (X - mu) * inv_std                                        # (n, d)

    # ---- pairwise distances in standardized space (norms off the MXU path) ------
    Xs2 = Xs * Xs
    gn_col = jnp.sum(Xs2, axis=1, keepdims=True)                   # (n, 1)
    gn_row = lax.dot_general(ones_1d, Xs2, (((1,), (1,)), ((), ())),
                             preferred_element_type=jnp.float32)   # (1, n)
    G = lax.dot_general(Xs, Xs, (((1,), (1,)), ((), ())),
                        preferred_element_type=jnp.float32)        # (n, n)
    D2 = jnp.maximum(gn_col + gn_row - 2.0 * G, 0.0)
    Dpts = jnp.sqrt(D2)                                            # for silhouette

    # ---- raw-space cost matrix ---------------------------------------------------
    # TODO(synk): C(input, n) is undefined in the reference; pairwise Euclidean
    #             distance between client vectors is used as the cost matrix.
    X2 = X * X
    rn_col = jnp.sum(X2, axis=1, keepdims=True)
    rn_row = lax.dot_general(ones_1d, X2, (((1,), (1,)), ((), ())),
                             preferred_element_type=jnp.float32)
    Gr = lax.dot_general(X, X, (((1,), (1,)), ((), ())),
                         preferred_element_type=jnp.float32)
    cost_ref[...] = jnp.sqrt(jnp.maximum(rn_col + rn_row - 2.0 * Gr, 0.0))

    # ---- per-column metadata for the stacked-centroid layout (iota-built) -------
    colg = lax.broadcasted_iota(jnp.int32, (1, K_tot), 1)
    blockid = jnp.zeros((1, K_tot), jnp.int32)
    for c in range(1, n_k):
        blockid = blockid + (colg >= starts[c]).astype(jnp.int32)
    startcol = jnp.zeros((1, K_tot), jnp.int32)
    for c in range(n_k):
        startcol = startcol + jnp.where(blockid == c, starts[c], 0)
    locidx = (colg - startcol).astype(jnp.float32)                 # local label per column
    masks = [(blockid == c).astype(jnp.float32) for c in range(n_k)]
    member = (lax.broadcasted_iota(jnp.int32, (n_k, K_tot), 0)
              == blockid).astype(jnp.float32)                      # (n_k, K_tot)

    # ---- farthest-point ordering: computed ONCE, shared by every candidate k ----
    # TODO(synk): sklearn KMeans(init='k-means++') is stochastic; a deterministic
    #             farthest-point init is used for reproducibility.
    col_n = lax.broadcasted_iota(jnp.int32, (1, n), 1)
    col_nf = col_n.astype(jnp.float32)
    row_nf = lax.broadcasted_iota(jnp.int32, (n, 1), 0).astype(jnp.float32)
    rowt = lax.broadcasted_iota(jnp.int32, (maxk, n), 0)
    ordS = ((rowt == 0).astype(jnp.float32)
            * (lax.broadcasted_iota(jnp.int32, (maxk, n), 1) == 0).astype(jnp.float32))
    chosen = (col_n == 0).astype(jnp.float32)
    for t in range(1, maxk):
        mind = jnp.min(jnp.where(chosen > 0.0, D2, big), axis=1, keepdims=True)   # (n,1)
        mmax = jnp.max(mind, axis=0, keepdims=True)                               # (1,1)
        nxt = jnp.min(jnp.where(mind >= mmax, row_nf, jnp.float32(n)),
                      axis=0, keepdims=True)                                      # (1,1)
        sel = (col_nf == nxt).astype(jnp.float32)                                 # (1,n)
        ordS = ordS + (rowt == t).astype(jnp.float32) * sel
        chosen = jnp.maximum(chosen, sel)

    ord_cent = lax.dot_general(Xs, ordS, (((0,), (1,)), ((), ())),
                               preferred_element_type=jnp.float32)                # (d, maxk)
    locsel = (lax.broadcasted_iota(jnp.int32, (maxk, K_tot), 0).astype(jnp.float32)
              == locidx).astype(jnp.float32)                                      # (maxk, K_tot)
    C0 = lax.dot_general(ord_cent, locsel, (((1,), (0,)), ((), ())),
                         preferred_element_type=jnp.float32)                      # (d, K_tot)

    # ---- labeling for ALL candidates with ONE matmul ----------------------------
    def assign(cent, want_labels):
        cn = jnp.sum(cent * cent, axis=0, keepdims=True)                          # (1, K_tot)
        cross = lax.dot_general(Xs, cent, (((1,), (0,)), ((), ())),
                                preferred_element_type=jnp.float32)               # (n, K_tot)
        score = cn - 2.0 * cross                                                   # + ||x||^2 const/row
        onehot = jnp.zeros((n, K_tot), jnp.float32)
        labs = []
        for c in range(n_k):                                                       # pure VPU/XLU
            m = masks[c]
            sm = jnp.where(m > 0.0, score, big)
            bmin = jnp.min(sm, axis=1, keepdims=True)                              # (n, 1)
            lmin = jnp.min(jnp.where(sm <= bmin, locidx, Kf), axis=1, keepdims=True)
            onehot = onehot + m * (locidx == lmin).astype(jnp.float32)
            if want_labels:
                labs.append(lmin)
        return onehot, labs

    tol2 = jnp.float32(tol) * jnp.float32(tol)

    # ---- SINGLE Lloyd while-loop over all candidates, per-candidate freeze ------
    def lloyd_body(carry):
        i, cent, frozen = carry
        onehot, _ = assign(cent, False)
        counts = jnp.sum(onehot, axis=0, keepdims=True)                            # (1, K_tot)
        sums = lax.dot_general(Xs, onehot, (((0,), (0,)), ((), ())),
                               preferred_element_type=jnp.float32)                 # (d, K_tot)
        new = sums * (1.0 / jnp.maximum(counts, 1.0))
        new = jnp.where(counts > 0.0, new, cent)                                   # empty clusters
        new = jnp.where(frozen > 0.0, cent, new)                                   # frozen candidates
        shift2 = jnp.sum((new - cent) ** 2, axis=0, keepdims=True)                 # (1, K_tot)
        cand_max = jnp.max(member * shift2, axis=1, keepdims=True)                 # (n_k, 1)
        newly = (cand_max < tol2).astype(jnp.float32)
        frozen = jnp.maximum(frozen, jnp.max(member * newly, axis=0, keepdims=True))
        return i + 1, new, frozen

    def lloyd_cond(carry):
        i, _, frozen = carry
        return jnp.logical_and(i < max_iters, jnp.min(frozen) < 0.5)

    _, cent, _ = lax.while_loop(
        lloyd_cond, lloyd_body,
        (jnp.int32(0), C0, jnp.zeros((1, K_tot), jnp.float32)))

    # ---- final labels + silhouette score per candidate k -------------------------
    onehot, labs = assign(cent, True)
    counts = jnp.sum(onehot, axis=0, keepdims=True)                                # (1, K_tot)
    dsum = lax.dot_general(Dpts, onehot, (((1,), (0,)), ((), ())),
                           preferred_element_type=jnp.float32)                     # (n, K_tot)
    mean_other = dsum * (1.0 / jnp.maximum(counts, 1.0))
    mean_other = jnp.where(jnp.logical_or(onehot > 0.0, counts == 0.0), big, mean_other)

    lab_out = jnp.zeros((n, n_k), jnp.float32)
    kcol = lax.broadcasted_iota(jnp.int32, (n, n_k), 1)
    sil_out = jnp.zeros((1, n_k), jnp.float32)
    silcol = lax.broadcasted_iota(jnp.int32, (1, n_k), 1)
    inv_n = jnp.float32(1.0 / n)
    for c in range(n_k):
        m = masks[c]
        oc = m * onehot
        own_counts = jnp.sum(oc * counts, axis=1, keepdims=True)                   # (n, 1)
        own_sums = jnp.sum(oc * dsum, axis=1, keepdims=True)                       # (n, 1)
        a = own_sums / jnp.maximum(own_counts - 1.0, 1.0)
        b = jnp.min(jnp.where(m > 0.0, mean_other, big), axis=1, keepdims=True)
        denom = jnp.maximum(a, b)
        valid = jnp.logical_and(jnp.logical_and(own_counts > 1.0, b < big),
                                denom > 0.0)
        s = jnp.where(valid, (b - a) / jnp.where(valid, denom, 1.0), 0.0)
        sil_out = sil_out + jnp.where(silcol == c, jnp.sum(s) * inv_n, 0.0)
        lab_out = lab_out + jnp.where(kcol == c, labs[c], 0.0)

    sil_ref[...] = sil_out
    labels_ref[...] = lab_out


def _run_fused_kmeans(X, max_iters, tol):
    """One pallas_call for the whole k-sweep; fixed shapes -> single compile."""
    n, d = X.shape
    n_k = n - 2
    kern = partial(_kmeans_pipeline_kernel, n=n, d=d, max_iters=max_iters, tol=tol)

    def full(shape):
        nd = len(shape)
        return pl.BlockSpec(shape, lambda i, _nd=nd: (0,) * _nd)

    out_shape = (
        jax.ShapeDtypeStruct((1, n_k), jnp.float32),    # silhouette score per k
        jax.ShapeDtypeStruct((n, n_k), jnp.float32),    # labels (column k-2 = labels for k)
        jax.ShapeDtypeStruct((n, n), jnp.float32),      # raw-space cost matrix
    )
    return pl.pallas_call(
        kern,
        grid=(1,),
        in_specs=[full((n, d))],
        out_specs=tuple(full(s.shape) for s in out_shape),
        out_shape=out_shape,
        compiler_params=pltpu.CompilerParams(dimension_semantics=("arbitrary",)),
    )(X)


# --------------------------------------------------------------------------- on-device selection

def _select_and_aggregate(x, sil, labels_all, cost):
    """Best-k pick, per-cluster pair medians, benign mask, masked mean — all on device."""
    n = x.shape[-1]
    best_idx = jnp.argmax(sil[0])                          # best_k = best_idx + 2
    labels = labels_all[:, best_idx].astype(jnp.int32)     # (n,)

    kmax = n - 1                                           # max possible cluster id + 1
    c_ids = jnp.arange(kmax, dtype=jnp.int32)
    in_c = labels[None, :] == c_ids[:, None]               # (kmax, n)
    iu = jnp.arange(n)[:, None] < jnp.arange(n)[None, :]   # strict upper triangle (i < j)
    pair_mask = in_c[:, :, None] & in_c[:, None, :] & iu[None, :, :]
    flat_mask = pair_mask.reshape(kmax, n * n)
    vals = jnp.where(flat_mask, cost.reshape(1, n * n), jnp.inf)
    svals = jnp.sort(vals, axis=1)
    cnt = jnp.sum(flat_mask, axis=1)                       # number of in-cluster pairs
    lo = jnp.take_along_axis(svals, jnp.maximum((cnt - 1) // 2, 0)[:, None], axis=1)[:, 0]
    hi = jnp.take_along_axis(svals, (cnt // 2)[:, None], axis=1)[:, 0]
    med = jnp.where(cnt > 0, 0.5 * (lo + hi), jnp.inf)     # np.median semantics

    min_med = jnp.min(med)
    min_cluster = jnp.argmin(med)
    # reference: only medians < n qualify (it would KeyError otherwise);
    # fall back to the largest cluster instead of crashing.
    sizes = jnp.sum(in_c, axis=1)
    min_cluster = jnp.where(min_med < jnp.float32(n), min_cluster, jnp.argmax(sizes))

    benign = labels == min_cluster                          # (n,) bool
    bm = benign.astype(jnp.float32)
    out = (jnp.sum(x[0] * bm[None, :], axis=1, keepdims=True)
           / jnp.maximum(jnp.sum(bm), 1.0))                 # (d, 1), guarded
    return out, benign


@partial(jax.jit, static_argnames=("max_iters", "tol"))
def _device_forward(x, max_iters=500, tol=1e-4):
    x = x.astype(jnp.float32)
    X = jnp.transpose(x[0])                                 # (n, d): rows = client vectors
    sil, labels_all, cost = _run_fused_kmeans(X, max_iters, tol)
    return _select_and_aggregate(x, sil, labels_all, cost)


# --------------------------------------------------------------------------- public API

def k_means(x, max_k=5, max_iters=500, tol=1e-4):
    """JAX/Pallas port of the reference k_means(). x: (1, d, n) -> ((d, 1), attackers)."""
    del max_k  # reference loops over k in range(2, n) regardless of max_k
    n = int(x.shape[-1])
    if n < 2:
        raise ValueError("Not enough points for clustering.")
    if n < 3:
        raise ValueError("Need at least 3 points to select k in range(2, n).")
    out, benign_mask = _device_forward(x, max_iters=int(max_iters), tol=float(tol))
    benign_np = np.asarray(benign_mask)                     # single device->host transfer
    attackers = [i for i in range(n) if not bool(benign_np[i])]
    return out, attackers


class Net:
    """Pallas equivalent of the reference torch Net (no learnable parameters)."""

    def __call__(self, x):
        return k_means(x)


# --------------------------------------------------------------------------- main

if __name__ == "__main__":
    d, n = 32, 8
    k0, k1, k2, _ = jax.random.split(jax.random.PRNGKey(0), 4)
    # 6 benign clients clustered around a common center, 2 outlier "attackers".
    center = jax.random.normal(k0, (d, 1), dtype=jnp.float32)
    benign = center + 0.05 * jax.random.normal(k1, (d, 6), dtype=jnp.float32)
    attack = 5.0 + 2.0 * jax.random.normal(k2, (d, 2), dtype=jnp.float32)
    x = jnp.concatenate([benign, attack], axis=1)[None, :, :].astype(jnp.float32)  # (1, d, n)

    net = Net()
    out, attackers = net(x)
    out = jax.block_until_ready(out)
    assert out.shape == (d, 1)
    print("KERNEL_OK")
</pallas_src>

<mosaic_0001>
module attributes {stable_mosaic.version = 11 : i64} {
  func.func @_kmeans_pipeline_kernel(%arg0: i32, %arg1: memref<8x32xf32, #tpu.memory_space<vmem>>, %arg2: memref<1x6xf32, #tpu.memory_space<vmem>>, %arg3: memref<8x6xf32, #tpu.memory_space<vmem>>, %arg4: memref<8x8xf32, #tpu.memory_space<vmem>>) attributes {dimension_semantics = [#tpu.dimension_semantics<arbitrary>], iteration_bounds = array<i64: 1>, scalar_prefetch = 0 : i64, scratch_operands = 0 : i64, tpu.core_type = #tpu.core_type<tc>, window_params = [{pipeline_mode = #tpu.pipeline_mode<synchronous>, transform_indices = @transform_0, window_bounds = array<i64: 8, 32>}, {pipeline_mode = #tpu.pipeline_mode<synchronous>, transform_indices = @transform_1, window_bounds = array<i64: 1, 6>}, {pipeline_mode = #tpu.pipeline_mode<synchronous>, transform_indices = @transform_2, window_bounds = array<i64: 8, 6>}, {pipeline_mode = #tpu.pipeline_mode<synchronous>, transform_indices = @transform_3, window_bounds = array<i64: 8, 8>}]} {
    %c0 = arith.constant 0 : index
    %c0_0 = arith.constant 0 : index
    %0 = vector.load %arg1[%c0, %c0_0] : memref<8x32xf32, #tpu.memory_space<vmem>>, vector<8x32xf32>
    %cst = arith.constant 1.000000e+00 : f32
    %1 = vector.broadcast %cst : f32 to vector<1x32xf32>
    %cst_1 = arith.constant dense<0.000000e+00> : vector<32xf32>
    %2 = vector.multi_reduction <add>, %0, %cst_1 [0] : vector<8x32xf32> to vector<32xf32>
    %3 = vector.shape_cast %2 : vector<32xf32> to vector<1x32xf32>
    %cst_2 = arith.constant 8.000000e+00 : f32
    %4 = vector.broadcast %cst_2 : f32 to vector<1x32xf32>
    %5 = arith.divf %3, %4 : vector<1x32xf32>
    %6 = vector.broadcast %5 : vector<1x32xf32> to vector<8x32xf32>
    %7 = arith.subf %0, %6 : vector<8x32xf32>
    %8 = arith.mulf %7, %7 : vector<8x32xf32>
    %cst_3 = arith.constant dense<0.000000e+00> : vector<32xf32>
    %9 = vector.multi_reduction <add>, %8, %cst_3 [0] : vector<8x32xf32> to vector<32xf32>
    %10 = vector.shape_cast %9 : vector<32xf32> to vector<1x32xf32>
    %cst_4 = arith.constant 8.000000e+00 : f32
    %11 = vector.broadcast %cst_4 : f32 to vector<1x32xf32>
    %12 = arith.divf %10, %11 : vector<1x32xf32>
    %cst_5 = arith.constant 0.000000e+00 : f32
    %13 = vector.broadcast %cst_5 : f32 to vector<1x32xf32>
    %14 = arith.cmpf ogt, %12, %13 : vector<1x32xf32>
    %15 = math.rsqrt %12 : vector<1x32xf32>
    %cst_6 = arith.constant 1.000000e+00 : f32
    %16 = vector.broadcast %cst_6 : f32 to vector<1x32xf32>
    %17 = arith.select %14, %15, %16 : vector<1x32xi1>, vector<1x32xf32>
    %18 = vector.broadcast %5 : vector<1x32xf32> to vector<8x32xf32>
    %19 = arith.subf %0, %18 : vector<8x32xf32>
    %20 = vector.broadcast %17 : vector<1x32xf32> to vector<8x32xf32>
    %21 = arith.mulf %19, %20 : vector<8x32xf32>
    %22 = arith.mulf %21, %21 : vector<8x32xf32>
    %cst_7 = arith.constant dense<0.000000e+00> : vector<8xf32>
    %23 = vector.multi_reduction <add>, %22, %cst_7 [1] : vector<8x32xf32> to vector<8xf32>
    %24 = vector.shape_cast %23 : vector<8xf32> to vector<8x1xf32>
    %cst_8 = arith.constant dense<0.000000e+00> : vector<1x8xf32>
    %25 = tpu.matmul %1, %22, %cst_8 {dimension_numbers = #tpu.dot_dimension_numbers<[1], [1], [0], [0], [0, 0, 1, 0], [], []>} : vector<1x32xf32>, vector<8x32xf32>, vector<1x8xf32> -> vector<1x8xf32>
    %cst_9 = arith.constant dense<0.000000e+00> : vector<8x8xf32>
    %26 = tpu.matmul %21, %21, %cst_9 {dimension_numbers = #tpu.dot_dimension_numbers<[1], [1], [0], [0], [0, 0, 1, 0], [], []>} : vector<8x32xf32>, vector<8x32xf32>, vector<8x8xf32> -> vector<8x8xf32>
    %27 = vector.broadcast %24 : vector<8x1xf32> to vector<8x8xf32>
    %28 = vector.broadcast %25 : vector<1x8xf32> to vector<8x8xf32>
    %29 = arith.addf %27, %28 : vector<8x8xf32>
    %cst_10 = arith.constant 2.000000e+00 : f32
    %30 = vector.broadcast %cst_10 : f32 to vector<8x8xf32>
    %31 = arith.mulf %30, %26 : vector<8x8xf32>
    %32 = arith.subf %29, %31 : vector<8x8xf32>
    %cst_11 = arith.constant 0.000000e+00 : f32
    %33 = vector.broadcast %cst_11 : f32 to vector<8x8xf32>
    %34 = arith.maximumf %32, %33 : vector<8x8xf32>
    %35 = math.sqrt %34 : vector<8x8xf32>
    %36 = arith.mulf %0, %0 : vector<8x32xf32>
    %cst_12 = arith.constant dense<0.000000e+00> : vector<8xf32>
    %37 = vector.multi_reduction <add>, %36, %cst_12 [1] : vector<8x32xf32> to vector<8xf32>
    %38 = vector.shape_cast %37 : vector<8xf32> to vector<8x1xf32>
    %cst_13 = arith.constant dense<0.000000e+00> : vector<1x8xf32>
    %39 = tpu.matmul %1, %36, %cst_13 {dimension_numbers = #tpu.dot_dimension_numbers<[1], [1], [0], [0], [0, 0, 1, 0], [], []>} : vector<1x32xf32>, vector<8x32xf32>, vector<1x8xf32> -> vector<1x8xf32>
    %cst_14 = arith.constant dense<0.000000e+00> : vector<8x8xf32>
    %40 = tpu.matmul %0, %0, %cst_14 {dimension_numbers = #tpu.dot_dimension_numbers<[1], [1], [0], [0], [0, 0, 1, 0], [], []>} : vector<8x32xf32>, vector<8x32xf32>, vector<8x8xf32> -> vector<8x8xf32>
    %41 = vector.broadcast %38 : vector<8x1xf32> to vector<8x8xf32>
    %42 = vector.broadcast %39 : vector<1x8xf32> to vector<8x8xf32>
    %43 = arith.addf %41, %42 : vector<8x8xf32>
    %cst_15 = arith.constant 2.000000e+00 : f32
    %44 = vector.broadcast %cst_15 : f32 to vector<8x8xf32>
    %45 = arith.mulf %44, %40 : vector<8x8xf32>
    %46 = arith.subf %43, %45 : vector<8x8xf32>
    %cst_16 = arith.constant 0.000000e+00 : f32
    %47 = vector.broadcast %cst_16 : f32 to vector<8x8xf32>
    %48 = arith.maximumf %46, %47 : vector<8x8xf32>
    %49 = math.sqrt %48 : vector<8x8xf32>
    %c0_17 = arith.constant 0 : index
    %c0_18 = arith.constant 0 : index
    %50 = vector.load %arg4[%c0_17, %c0_18] : memref<8x8xf32, #tpu.memory_space<vmem>>, vector<8x8xf32>
    tpu.vector_store %arg4[%c0_17, %c0_18], %49 {strides = array<i32>} : memref<8x8xf32, #tpu.memory_space<vmem>>, vector<8x8xf32>,
    %51 = tpu.iota {dimensions = array<i32: 1>} : vector<1x27xi32>
    %c0_i32 = arith.constant 0 : i32
    %52 = vector.broadcast %c0_i32 : i32 to vector<1x27xi32>
    %c2_i32 = arith.constant 2 : i32
    %53 = vector.broadcast %c2_i32 : i32 to vector<1x27xi32>
    %54 = arith.cmpi sge, %51, %53 : vector<1x27xi32>
    %55 = arith.extui %54 : vector<1x27xi1> to vector<1x27xi32>
    %56 = arith.addi %52, %55 : vector<1x27xi32>
    %c5_i32 = arith.constant 5 : i32
    %57 = vector.broadcast %c5_i32 : i32 to vector<1x27xi32>
    %58 = arith.cmpi sge, %51, %57 : vector<1x27xi32>
    %59 = arith.extui %58 : vector<1x27xi1> to vector<1x27xi32>
    %60 = arith.addi %56, %59 : vector<1x27xi32>
    %c9_i32 = arith.constant 9 : i32
    %61 = vector.broadcast %c9_i32 : i32 to vector<1x27xi32>
    %62 = arith.cmpi sge, %51, %61 : vector<1x27xi32>
    %63 = arith.extui %62 : vector<1x27xi1> to vector<1x27xi32>
    %64 = arith.addi %60, %63 : vector<1x27xi32>
    %c14_i32 = arith.constant 14 : i32
    %65 = vector.broadcast %c14_i32 : i32 to vector<1x27xi32>
    %66 = arith.cmpi sge, %51, %65 : vector<1x27xi32>
    %67 = arith.extui %66 : vector<1x27xi1> to vector<1x27xi32>
    %68 = arith.addi %64, %67 : vector<1x27xi32>
    %c20_i32 = arith.constant 20 : i32
    %69 = vector.broadcast %c20_i32 : i32 to vector<1x27xi32>
    %70 = arith.cmpi sge, %51, %69 : vector<1x27xi32>
    %71 = arith.extui %70 : vector<1x27xi1> to vector<1x27xi32>
    %72 = arith.addi %68, %71 : vector<1x27xi32>
    %c0_i32_19 = arith.constant 0 : i32
    %73 = vector.broadcast %c0_i32_19 : i32 to vector<1x27xi32>
    %c0_i32_20 = arith.constant 0 : i32
    %74 = vector.broadcast %c0_i32_20 : i32 to vector<1x27xi32>
    %75 = arith.cmpi eq, %72, %74 : vector<1x27xi32>
    %c0_i32_21 = arith.constant 0 : i32
    %c0_i32_22 = arith.constant 0 : i32
    %76 = vector.broadcast %c0_i32_21 : i32 to vector<1x27xi32>
    %77 = vector.broadcast %c0_i32_22 : i32 to vector<1x27xi32>
    %78 = arith.select %75, %76, %77 : vector<1x27xi1>, vector<1x27xi32>
    %79 = arith.addi %73, %78 : vector<1x27xi32>
    %c1_i32 = arith.constant 1 : i32
    %80 = vector.broadcast %c1_i32 : i32 to vector<1x27xi32>
    %81 = arith.cmpi eq, %72, %80 : vector<1x27xi32>
    %c2_i32_23 = arith.constant 2 : i32
    %c0_i32_24 = arith.constant 0 : i32
    %82 = vector.broadcast %c2_i32_23 : i32 to vector<1x27xi32>
    %83 = vector.broadcast %c0_i32_24 : i32 to vector<1x27xi32>
    %84 = arith.select %81, %82, %83 : vector<1x27xi1>, vector<1x27xi32>
    %85 = arith.addi %79, %84 : vector<1x27xi32>
    %c2_i32_25 = arith.constant 2 : i32
    %86 = vector.broadcast %c2_i32_25 : i32 to vector<1x27xi32>
    %87 = arith.cmpi eq, %72, %86 : vector<1x27xi32>
    %c5_i32_26 = arith.constant 5 : i32
    %c0_i32_27 = arith.constant 0 : i32
    %88 = vector.broadcast %c5_i32_26 : i32 to vector<1x27xi32>
    %89 = vector.broadcast %c0_i32_27 : i32 to vector<1x27xi32>
    %90 = arith.select %87, %88, %89 : vector<1x27xi1>, vector<1x27xi32>
    %91 = arith.addi %85, %90 : vector<1x27xi32>
    %c3_i32 = arith.constant 3 : i32
    %92 = vector.broadcast %c3_i32 : i32 to vector<1x27xi32>
    %93 = arith.cmpi eq, %72, %92 : vector<1x27xi32>
    %c9_i32_28 = arith.constant 9 : i32
    %c0_i32_29 = arith.constant 0 : i32
    %94 = vector.broadcast %c9_i32_28 : i32 to vector<1x27xi32>
    %95 = vector.broadcast %c0_i32_29 : i32 to vector<1x27xi32>
    %96 = arith.select %93, %94, %95 : vector<1x27xi1>, vector<1x27xi32>
    %97 = arith.addi %91, %96 : vector<1x27xi32>
    %c4_i32 = arith.constant 4 : i32
    %98 = vector.broadcast %c4_i32 : i32 to vector<1x27xi32>
    %99 = arith.cmpi eq, %72, %98 : vector<1x27xi32>
    %c14_i32_30 = arith.constant 14 : i32
    %c0_i32_31 = arith.constant 0 : i32
    %100 = vector.broadcast %c14_i32_30 : i32 to vector<1x27xi32>
    %101 = vector.broadcast %c0_i32_31 : i32 to vector<1x27xi32>
    %102 = arith.select %99, %100, %101 : vector<1x27xi1>, vector<1x27xi32>
    %103 = arith.addi %97, %102 : vector<1x27xi32>
    %c5_i32_32 = arith.constant 5 : i32
    %104 = vector.broadcast %c5_i32_32 : i32 to vector<1x27xi32>
    %105 = arith.cmpi eq, %72, %104 : vector<1x27xi32>
    %c20_i32_33 = arith.constant 20 : i32
    %c0_i32_34 = arith.constant 0 : i32
    %106 = vector.broadcast %c20_i32_33 : i32 to vector<1x27xi32>
    %107 = vector.broadcast %c0_i32_34 : i32 to vector<1x27xi32>
    %108 = arith.select %105, %106, %107 : vector<1x27xi1>, vector<1x27xi32>
    %109 = arith.addi %103, %108 : vector<1x27xi32>
    %110 = arith.subi %51, %109 : vector<1x27xi32>
    %111 = arith.sitofp %110 : vector<1x27xi32> to vector<1x27xf32>
    %c0_i32_35 = arith.constant 0 : i32
    %112 = vector.broadcast %c0_i32_35 : i32 to vector<1x27xi32>
    %113 = arith.cmpi eq, %72, %112 : vector<1x27xi32>
    %114 = arith.extui %113 : vector<1x27xi1> to vector<1x27xi32>
    %115 = arith.sitofp %114 : vector<1x27xi32> to vector<1x27xf32>
    %c1_i32_36 = arith.constant 1 : i32
    %116 = vector.broadcast %c1_i32_36 : i32 to vector<1x27xi32>
    %117 = arith.cmpi eq, %72, %116 : vector<1x27xi32>
    %118 = arith.extui %117 : vector<1x27xi1> to vector<1x27xi32>
    %119 = arith.sitofp %118 : vector<1x27xi32> to vector<1x27xf32>
    %c2_i32_37 = arith.constant 2 : i32
    %120 = vector.broadcast %c2_i32_37 : i32 to vector<1x27xi32>
    %121 = arith.cmpi eq, %72, %120 : vector<1x27xi32>
    %122 = arith.extui %121 : vector<1x27xi1> to vector<1x27xi32>
    %123 = arith.sitofp %122 : vector<1x27xi32> to vector<1x27xf32>
    %c3_i32_38 = arith.constant 3 : i32
    %124 = vector.broadcast %c3_i32_38 : i32 to vector<1x27xi32>
    %125 = arith.cmpi eq, %72, %124 : vector<1x27xi32>
    %126 = arith.extui %125 : vector<1x27xi1> to vector<1x27xi32>
    %127 = arith.sitofp %126 : vector<1x27xi32> to vector<1x27xf32>
    %c4_i32_39 = arith.constant 4 : i32
    %128 = vector.broadcast %c4_i32_39 : i32 to vector<1x27xi32>
    %129 = arith.cmpi eq, %72, %128 : vector<1x27xi32>
    %130 = arith.extui %129 : vector<1x27xi1> to vector<1x27xi32>
    %131 = arith.sitofp %130 : vector<1x27xi32> to vector<1x27xf32>
    %c5_i32_40 = arith.constant 5 : i32
    %132 = vector.broadcast %c5_i32_40 : i32 to vector<1x27xi32>
    %133 = arith.cmpi eq, %72, %132 : vector<1x27xi32>
    %134 = arith.extui %133 : vector<1x27xi1> to vector<1x27xi32>
    %135 = arith.sitofp %134 : vector<1x27xi32> to vector<1x27xf32>
    %136 = tpu.iota {dimensions = array<i32: 0>} : vector<6x27xi32>
    %137 = vector.broadcast %72 : vector<1x27xi32> to vector<6x27xi32>
    %138 = arith.cmpi eq, %136, %137 : vector<6x27xi32>
    %139 = arith.extui %138 : vector<6x27xi1> to vector<6x27xi32>
    %140 = arith.sitofp %139 : vector<6x27xi32> to vector<6x27xf32>
    %141 = tpu.iota {dimensions = array<i32: 1>} : vector<1x8xi32>
    %142 = arith.sitofp %141 : vector<1x8xi32> to vector<1x8xf32>
    %143 = tpu.iota {dimensions = array<i32: 0>} : vector<8x1xi32>
    %144 = arith.sitofp %143 : vector<8x1xi32> to vector<8x1xf32>
    %145 = tpu.iota {dimensions = array<i32: 0>} : vector<7x8xi32>
    %c0_i32_41 = arith.constant 0 : i32
    %146 = vector.broadcast %c0_i32_41 : i32 to vector<7x8xi32>
    %147 = arith.cmpi eq, %145, %146 : vector<7x8xi32>
    %148 = arith.extui %147 : vector<7x8xi1> to vector<7x8xi32>
    %149 = arith.sitofp %148 : vector<7x8xi32> to vector<7x8xf32>
    %150 = tpu.iota {dimensions = array<i32: 1>} : vector<7x8xi32>
    %c0_i32_42 = arith.constant 0 : i32
    %151 = vector.broadcast %c0_i32_42 : i32 to vector<7x8xi32>
    %152 = arith.cmpi eq, %150, %151 : vector<7x8xi32>
    %153 = arith.extui %152 : vector<7x8xi1> to vector<7x8xi32>
    %154 = arith.sitofp %153 : vector<7x8xi32> to vector<7x8xf32>
    %155 = arith.mulf %149, %154 : vector<7x8xf32>
    %c0_i32_43 = arith.constant 0 : i32
    %156 = vector.broadcast %c0_i32_43 : i32 to vector<1x8xi32>
    %157 = arith.cmpi eq, %141, %156 : vector<1x8xi32>
    %158 = arith.extui %157 : vector<1x8xi1> to vector<1x8xi32>
    %159 = arith.sitofp %158 : vector<1x8xi32> to vector<1x8xf32>
    %cst_44 = arith.constant 0.000000e+00 : f32
    %160 = vector.broadcast %cst_44 : f32 to vector<1x8xf32>
    %161 = arith.cmpf ogt, %159, %160 : vector<1x8xf32>
    %cst_45 = arith.constant 1.000000e+30 : f32
    %162 = vector.shape_cast %161 : vector<1x8xi1> to vector<1x8xi1>
    %163 = vector.broadcast %162 : vector<1x8xi1> to vector<8x8xi1>
    %164 = vector.broadcast %cst_45 : f32 to vector<8x8xf32>
    %165 = arith.select %163, %34, %164 : vector<8x8xi1>, vector<8x8xf32>
    %cst_46 = arith.constant dense<0x7F800000> : vector<8xf32>
    %166 = vector.multi_reduction <minimumf>, %165, %cst_46 [1] : vector<8x8xf32> to vector<8xf32>
    %167 = vector.shape_cast %166 : vector<8xf32> to vector<8x1xf32>
    %cst_47 = arith.constant dense<0xFF800000> : vector<1xf32>
    %168 = vector.multi_reduction <maximumf>, %167, %cst_47 [0] : vector<8x1xf32> to vector<1xf32>
    %169 = vector.shape_cast %168 : vector<1xf32> to vector<1x1xf32>
    %170 = vector.broadcast %169 : vector<1x1xf32> to vector<8x1xf32>
    %171 = arith.cmpf oge, %167, %170 : vector<8x1xf32>
    %cst_48 = arith.constant 8.000000e+00 : f32
    %172 = vector.broadcast %cst_48 : f32 to vector<8x1xf32>
    %173 = arith.select %171, %144, %172 : vector<8x1xi1>, vector<8x1xf32>
    %cst_49 = arith.constant dense<0x7F800000> : vector<1xf32>
    %174 = vector.multi_reduction <minimumf>, %173, %cst_49 [0] : vector<8x1xf32> to vector<1xf32>
    %175 = vector.shape_cast %174 : vector<1xf32> to vector<1x1xf32>
    %176 = vector.broadcast %175 : vector<1x1xf32> to vector<1x8xf32>
    %177 = arith.cmpf oeq, %142, %176 : vector<1x8xf32>
    %178 = arith.extui %177 : vector<1x8xi1> to vector<1x8xi32>
    %179 = arith.sitofp %178 : vector<1x8xi32> to vector<1x8xf32>
    %c1_i32_50 = arith.constant 1 : i32
    %180 = vector.broadcast %c1_i32_50 : i32 to vector<7x8xi32>
    %181 = arith.cmpi eq, %145, %180 : vector<7x8xi32>
    %182 = arith.extui %181 : vector<7x8xi1> to vector<7x8xi32>
    %183 = arith.sitofp %182 : vector<7x8xi32> to vector<7x8xf32>
    %184 = vector.broadcast %179 : vector<1x8xf32> to vector<7x8xf32>
    %185 = arith.mulf %183, %184 : vector<7x8xf32>
    %186 = arith.addf %155, %185 : vector<7x8xf32>
    %187 = arith.maximumf %159, %179 : vector<1x8xf32>
    %cst_51 = arith.constant 0.000000e+00 : f32
    %188 = vector.broadcast %cst_51 : f32 to vector<1x8xf32>
    %189 = arith.cmpf ogt, %187, %188 : vector<1x8xf32>
    %cst_52 = arith.constant 1.000000e+30 : f32
    %190 = vector.shape_cast %189 : vector<1x8xi1> to vector<1x8xi1>
    %191 = vector.broadcast %190 : vector<1x8xi1> to vector<8x8xi1>
    %192 = vector.broadcast %cst_52 : f32 to vector<8x8xf32>
    %193 = arith.select %191, %34, %192 : vector<8x8xi1>, vector<8x8xf32>
    %cst_53 = arith.constant dense<0x7F800000> : vector<8xf32>
    %194 = vector.multi_reduction <minimumf>, %193, %cst_53 [1] : vector<8x8xf32> to vector<8xf32>
    %195 = vector.shape_cast %194 : vector<8xf32> to vector<8x1xf32>
    %cst_54 = arith.constant dense<0xFF800000> : vector<1xf32>
    %196 = vector.multi_reduction <maximumf>, %195, %cst_54 [0] : vector<8x1xf32> to vector<1xf32>
    %197 = vector.shape_cast %196 : vector<1xf32> to vector<1x1xf32>
    %198 = vector.broadcast %197 : vector<1x1xf32> to vector<8x1xf32>
    %199 = arith.cmpf oge, %195, %198 : vector<8x1xf32>
    %cst_55 = arith.constant 8.000000e+00 : f32
    %200 = vector.broadcast %cst_55 : f32 to vector<8x1xf32>
    %201 = arith.select %199, %144, %200 : vector<8x1xi1>, vector<8x1xf32>
    %cst_56 = arith.constant dense<0x7F800000> : vector<1xf32>
    %202 = vector.multi_reduction <minimumf>, %201, %cst_56 [0] : vector<8x1xf32> to vector<1xf32>
    %203 = vector.shape_cast %202 : vector<1xf32> to vector<1x1xf32>
    %204 = vector.broadcast %203 : vector<1x1xf32> to vector<1x8xf32>
    %205 = arith.cmpf oeq, %142, %204 : vector<1x8xf32>
    %206 = arith.extui %205 : vector<1x8xi1> to vector<1x8xi32>
    %207 = arith.sitofp %206 : vector<1x8xi32> to vector<1x8xf32>
    %c2_i32_57 = arith.constant 2 : i32
    %208 = vector.broadcast %c2_i32_57 : i32 to vector<7x8xi32>
    %209 = arith.cmpi eq, %145, %208 : vector<7x8xi32>
    %210 = arith.extui %209 : vector<7x8xi1> to vector<7x8xi32>
    %211 = arith.sitofp %210 : vector<7x8xi32> to vector<7x8xf32>
    %212 = vector.broadcast %207 : vector<1x8xf32> to vector<7x8xf32>
    %213 = arith.mulf %211, %212 : vector<7x8xf32>
    %214 = arith.addf %186, %213 : vector<7x8xf32>
    %215 = arith.maximumf %187, %207 : vector<1x8xf32>
    %cst_58 = arith.constant 0.000000e+00 : f32
    %216 = vector.broadcast %cst_58 : f32 to vector<1x8xf32>
    %217 = arith.cmpf ogt, %215, %216 : vector<1x8xf32>
    %cst_59 = arith.constant 1.000000e+30 : f32
    %218 = vector.shape_cast %217 : vector<1x8xi1> to vector<1x8xi1>
    %219 = vector.broadcast %218 : vector<1x8xi1> to vector<8x8xi1>
    %220 = vector.broadcast %cst_59 : f32 to vector<8x8xf32>
    %221 = arith.select %219, %34, %220 : vector<8x8xi1>, vector<8x8xf32>
    %cst_60 = arith.constant dense<0x7F800000> : vector<8xf32>
    %222 = vector.multi_reduction <minimumf>, %221, %cst_60 [1] : vector<8x8xf32> to vector<8xf32>
    %223 = vector.shape_cast %222 : vector<8xf32> to vector<8x1xf32>
    %cst_61 = arith.constant dense<0xFF800000> : vector<1xf32>
    %224 = vector.multi_reduction <maximumf>, %223, %cst_61 [0] : vector<8x1xf32> to vector<1xf32>
    %225 = vector.shape_cast %224 : vector<1xf32> to vector<1x1xf32>
    %226 = vector.broadcast %225 : vector<1x1xf32> to vector<8x1xf32>
    %227 = arith.cmpf oge, %223, %226 : vector<8x1xf32>
    %cst_62 = arith.constant 8.000000e+00 : f32
    %228 = vector.broadcast %cst_62 : f32 to vector<8x1xf32>
    %229 = arith.select %227, %144, %228 : vector<8x1xi1>, vector<8x1xf32>
    %cst_63 = arith.constant dense<0x7F800000> : vector<1xf32>
    %230 = vector.multi_reduction <minimumf>, %229, %cst_63 [0] : vector<8x1xf32> to vector<1xf32>
    %231 = vector.shape_cast %230 : vector<1xf32> to vector<1x1xf32>
    %232 = vector.broadcast %231 : vector<1x1xf32> to vector<1x8xf32>
    %233 = arith.cmpf oeq, %142, %232 : vector<1x8xf32>
    %234 = arith.extui %233 : vector<1x8xi1> to vector<1x8xi32>
    %235 = arith.sitofp %234 : vector<1x8xi32> to vector<1x8xf32>
    %c3_i32_64 = arith.constant 3 : i32
    %236 = vector.broadcast %c3_i32_64 : i32 to vector<7x8xi32>
    %237 = arith.cmpi eq, %145, %236 : vector<7x8xi32>
    %238 = arith.extui %237 : vector<7x8xi1> to vector<7x8xi32>
    %239 = arith.sitofp %238 : vector<7x8xi32> to vector<7x8xf32>
    %240 = vector.broadcast %235 : vector<1x8xf32> to vector<7x8xf32>
    %241 = arith.mulf %239, %240 : vector<7x8xf32>
    %242 = arith.addf %214, %241 : vector<7x8xf32>
    %243 = arith.maximumf %215, %235 : vector<1x8xf32>
    %cst_65 = arith.constant 0.000000e+00 : f32
    %244 = vector.broadcast %cst_65 : f32 to vector<1x8xf32>
    %245 = arith.cmpf ogt, %243, %244 : vector<1x8xf32>
    %cst_66 = arith.constant 1.000000e+30 : f32
    %246 = vector.shape_cast %245 : vector<1x8xi1> to vector<1x8xi1>
    %247 = vector.broadcast %246 : vector<1x8xi1> to vector<8x8xi1>
    %248 = vector.broadcast %cst_66 : f32 to vector<8x8xf32>
    %249 = arith.select %247, %34, %248 : vector<8x8xi1>, vector<8x8xf32>
    %cst_67 = arith.constant dense<0x7F800000> : vector<8xf32>
    %250 = vector.multi_reduction <minimumf>, %249, %cst_67 [1] : vector<8x8xf32> to vector<8xf32>
    %251 = vector.shape_cast %250 : vector<8xf32> to vector<8x1xf32>
    %cst_68 = arith.constant dense<0xFF800000> : vector<1xf32>
    %252 = vector.multi_reduction <maximumf>, %251, %cst_68 [0] : vector<8x1xf32> to vector<1xf32>
    %253 = vector.shape_cast %252 : vector<1xf32> to vector<1x1xf32>
    %254 = vector.broadcast %253 : vector<1x1xf32> to vector<8x1xf32>
    %255 = arith.cmpf oge, %251, %254 : vector<8x1xf32>
    %cst_69 = arith.constant 8.000000e+00 : f32
    %256 = vector.broadcast %cst_69 : f32 to vector<8x1xf32>
    %257 = arith.select %255, %144, %256 : vector<8x1xi1>, vector<8x1xf32>
    %cst_70 = arith.constant dense<0x7F800000> : vector<1xf32>
    %258 = vector.multi_reduction <minimumf>, %257, %cst_70 [0] : vector<8x1xf32> to vector<1xf32>
    %259 = vector.shape_cast %258 : vector<1xf32> to vector<1x1xf32>
    %260 = vector.broadcast %259 : vector<1x1xf32> to vector<1x8xf32>
    %261 = arith.cmpf oeq, %142, %260 : vector<1x8xf32>
    %262 = arith.extui %261 : vector<1x8xi1> to vector<1x8xi32>
    %263 = arith.sitofp %262 : vector<1x8xi32> to vector<1x8xf32>
    %c4_i32_71 = arith.constant 4 : i32
    %264 = vector.broadcast %c4_i32_71 : i32 to vector<7x8xi32>
    %265 = arith.cmpi eq, %145, %264 : vector<7x8xi32>
    %266 = arith.extui %265 : vector<7x8xi1> to vector<7x8xi32>
    %267 = arith.sitofp %266 : vector<7x8xi32> to vector<7x8xf32>
    %268 = vector.broadcast %263 : vector<1x8xf32> to vector<7x8xf32>
    %269 = arith.mulf %267, %268 : vector<7x8xf32>
    %270 = arith.addf %242, %269 : vector<7x8xf32>
    %271 = arith.maximumf %243, %263 : vector<1x8xf32>
    %cst_72 = arith.constant 0.000000e+00 : f32
    %272 = vector.broadcast %cst_72 : f32 to vector<1x8xf32>
    %273 = arith.cmpf ogt, %271, %272 : vector<1x8xf32>
    %cst_73 = arith.constant 1.000000e+30 : f32
    %274 = vector.shape_cast %273 : vector<1x8xi1> to vector<1x8xi1>
    %275 = vector.broadcast %274 : vector<1x8xi1> to vector<8x8xi1>
    %276 = vector.broadcast %cst_73 : f32 to vector<8x8xf32>
    %277 = arith.select %275, %34, %276 : vector<8x8xi1>, vector<8x8xf32>
    %cst_74 = arith.constant dense<0x7F800000> : vector<8xf32>
    %278 = vector.multi_reduction <minimumf>, %277, %cst_74 [1] : vector<8x8xf32> to vector<8xf32>
    %279 = vector.shape_cast %278 : vector<8xf32> to vector<8x1xf32>
    %cst_75 = arith.constant dense<0xFF800000> : vector<1xf32>
    %280 = vector.multi_reduction <maximumf>, %279, %cst_75 [0] : vector<8x1xf32> to vector<1xf32>
    %281 = vector.shape_cast %280 : vector<1xf32> to vector<1x1xf32>
    %282 = vector.broadcast %281 : vector<1x1xf32> to vector<8x1xf32>
    %283 = arith.cmpf oge, %279, %282 : vector<8x1xf32>
    %cst_76 = arith.constant 8.000000e+00 : f32
    %284 = vector.broadcast %cst_76 : f32 to vector<8x1xf32>
    %285 = arith.select %283, %144, %284 : vector<8x1xi1>, vector<8x1xf32>
    %cst_77 = arith.constant dense<0x7F800000> : vector<1xf32>
    %286 = vector.multi_reduction <minimumf>, %285, %cst_77 [0] : vector<8x1xf32> to vector<1xf32>
    %287 = vector.shape_cast %286 : vector<1xf32> to vector<1x1xf32>
    %288 = vector.broadcast %287 : vector<1x1xf32> to vector<1x8xf32>
    %289 = arith.cmpf oeq, %142, %288 : vector<1x8xf32>
    %290 = arith.extui %289 : vector<1x8xi1> to vector<1x8xi32>
    %291 = arith.sitofp %290 : vector<1x8xi32> to vector<1x8xf32>
    %c5_i32_78 = arith.constant 5 : i32
    %292 = vector.broadcast %c5_i32_78 : i32 to vector<7x8xi32>
    %293 = arith.cmpi eq, %145, %292 : vector<7x8xi32>
    %294 = arith.extui %293 : vector<7x8xi1> to vector<7x8xi32>
    %295 = arith.sitofp %294 : vector<7x8xi32> to vector<7x8xf32>
    %296 = vector.broadcast %291 : vector<1x8xf32> to vector<7x8xf32>
    %297 = arith.mulf %295, %296 : vector<7x8xf32>
    %298 = arith.addf %270, %297 : vector<7x8xf32>
    %299 = arith.maximumf %271, %291 : vector<1x8xf32>
    %cst_79 = arith.constant 0.000000e+00 : f32
    %300 = vector.broadcast %cst_79 : f32 to vector<1x8xf32>
    %301 = arith.cmpf ogt, %299, %300 : vector<1x8xf32>
    %cst_80 = arith.constant 1.000000e+30 : f32
    %302 = vector.shape_cast %301 : vector<1x8xi1> to vector<1x8xi1>
    %303 = vector.broadcast %302 : vector<1x8xi1> to vector<8x8xi1>
    %304 = vector.broadcast %cst_80 : f32 to vector<8x8xf32>
    %305 = arith.select %303, %34, %304 : vector<8x8xi1>, vector<8x8xf32>
    %cst_81 = arith.constant dense<0x7F800000> : vector<8xf32>
    %306 = vector.multi_reduction <minimumf>, %305, %cst_81 [1] : vector<8x8xf32> to vector<8xf32>
    %307 = vector.shape_cast %306 : vector<8xf32> to vector<8x1xf32>
    %cst_82 = arith.constant dense<0xFF800000> : vector<1xf32>
    %308 = vector.multi_reduction <maximumf>, %307, %cst_82 [0] : vector<8x1xf32> to vector<1xf32>
    %309 = vector.shape_cast %308 : vector<1xf32> to vector<1x1xf32>
    %310 = vector.broadcast %309 : vector<1x1xf32> to vector<8x1xf32>
    %311 = arith.cmpf oge, %307, %310 : vector<8x1xf32>
    %cst_83 = arith.constant 8.000000e+00 : f32
    %312 = vector.broadcast %cst_83 : f32 to vector<8x1xf32>
    %313 = arith.select %311, %144, %312 : vector<8x1xi1>, vector<8x1xf32>
    %cst_84 = arith.constant dense<0x7F800000> : vector<1xf32>
    %314 = vector.multi_reduction <minimumf>, %313, %cst_84 [0] : vector<8x1xf32> to vector<1xf32>
    %315 = vector.shape_cast %314 : vector<1xf32> to vector<1x1xf32>
    %316 = vector.broadcast %315 : vector<1x1xf32> to vector<1x8xf32>
    %317 = arith.cmpf oeq, %142, %316 : vector<1x8xf32>
    %318 = arith.extui %317 : vector<1x8xi1> to vector<1x8xi32>
    %319 = arith.sitofp %318 : vector<1x8xi32> to vector<1x8xf32>
    %c6_i32 = arith.constant 6 : i32
    %320 = vector.broadcast %c6_i32 : i32 to vector<7x8xi32>
    %321 = arith.cmpi eq, %145, %320 : vector<7x8xi32>
    %322 = arith.extui %321 : vector<7x8xi1> to vector<7x8xi32>
    %323 = arith.sitofp %322 : vector<7x8xi32> to vector<7x8xf32>
    %324 = vector.broadcast %319 : vector<1x8xf32> to vector<7x8xf32>
    %325 = arith.mulf %323, %324 : vector<7x8xf32>
    %326 = arith.addf %298, %325 : vector<7x8xf32>
    %cst_85 = arith.constant dense<0.000000e+00> : vector<32x7xf32>
    %327 = tpu.matmul %21, %326, %cst_85 {dimension_numbers = #tpu.dot_dimension_numbers<[0], [1], [1], [0], [0, 1, 1, 0], [], []>} : vector<8x32xf32>, vector<7x8xf32>, vector<32x7xf32> -> vector<32x7xf32>
    %328 = tpu.iota {dimensions = array<i32: 0>} : vector<7x27xi32>
    %329 = arith.sitofp %328 : vector<7x27xi32> to vector<7x27xf32>
    %330 = vector.broadcast %111 : vector<1x27xf32> to vector<7x27xf32>
    %331 = arith.cmpf oeq, %329, %330 : vector<7x27xf32>
    %332 = arith.extui %331 : vector<7x27xi1> to vector<7x27xi32>
    %333 = arith.sitofp %332 : vector<7x27xi32> to vector<7x27xf32>
    %cst_86 = arith.constant dense<0.000000e+00> : vector<32x27xf32>
    %334 = tpu.matmul %327, %333, %cst_86 {dimension_numbers = #tpu.dot_dimension_numbers<[1], [0], [0], [1], [0, 0, 1, 1], [], []>} : vector<32x7xf32>, vector<7x27xf32>, vector<32x27xf32> -> vector<32x27xf32>
    %cst_87 = arith.constant 9.99999974E-5 : f32
    %cst_88 = arith.constant 9.99999974E-5 : f32
    %335 = arith.mulf %cst_87, %cst_88 : f32
    %cst_89 = arith.constant 0.000000e+00 : f32
    %336 = vector.broadcast %cst_89 : f32 to vector<1x27xf32>
    %cst_90 = arith.constant 1.000000e+30 : f32
    %cst_91 = arith.constant 2.700000e+01 : f32
    %c0_i32_92 = arith.constant 0 : i32
    %337:3 = scf.while (%arg5 = %c0_i32_92, %arg6 = %334, %arg7 = %336) : (i32, vector<32x27xf32>, vector<1x27xf32>) -> (i32, vector<32x27xf32>, vector<1x27xf32>) {
      %c500_i32 = arith.constant 500 : i32
      %844 = arith.cmpi slt, %arg5, %c500_i32 : i32
      %845 = vector.shape_cast %arg7 : vector<1x27xf32> to vector<1x1x27xf32>
      %cst_248 = arith.constant dense<0x7F800000> : vector<1xf32>
      %846 = vector.multi_reduction <minimumf>, %845, %cst_248 [1, 2] : vector<1x1x27xf32> to vector<1xf32>
      %847 = vector.shape_cast %846 : vector<1xf32> to vector<1x1x1xf32>
      %848 = vector.extract %847[0, 0, 0] : f32 from vector<1x1x1xf32>
      %cst_249 = arith.constant 5.000000e-01 : f32
      %849 = arith.cmpf olt, %848, %cst_249 : f32
      %850 = arith.andi %844, %849 : i1
      scf.condition(%850) %arg5, %arg6, %arg7 : i32, vector<32x27xf32>, vector<1x27xf32>
    } do {
    ^bb0(%arg5: i32, %arg6: vector<32x27xf32>, %arg7: vector<1x27xf32>):
      %844 = arith.mulf %arg6, %arg6 : vector<32x27xf32>
      %cst_248 = arith.constant dense<0.000000e+00> : vector<27xf32>
      %845 = vector.multi_reduction <add>, %844, %cst_248 [0] : vector<32x27xf32> to vector<27xf32>
      %846 = vector.shape_cast %845 : vector<27xf32> to vector<1x27xf32>
      %cst_249 = arith.constant dense<0.000000e+00> : vector<8x27xf32>
      %847 = tpu.matmul %21, %arg6, %cst_249 {dimension_numbers = #tpu.dot_dimension_numbers<[1], [0], [0], [1], [0, 0, 1, 1], [], []>} : vector<8x32xf32>, vector<32x27xf32>, vector<8x27xf32> -> vector<8x27xf32>
      %cst_250 = arith.constant 2.000000e+00 : f32
      %848 = vector.broadcast %cst_250 : f32 to vector<8x27xf32>
      %849 = arith.mulf %848, %847 : vector<8x27xf32>
      %850 = vector.broadcast %846 : vector<1x27xf32> to vector<8x27xf32>
      %851 = arith.subf %850, %849 : vector<8x27xf32>
      %cst_251 = arith.constant 0.000000e+00 : f32
      %852 = vector.broadcast %cst_251 : f32 to vector<8x27xf32>
      %cst_252 = arith.constant 0.000000e+00 : f32
      %853 = vector.broadcast %cst_252 : f32 to vector<1x27xf32>
      %854 = arith.cmpf ogt, %115, %853 : vector<1x27xf32>
      %855 = vector.shape_cast %854 : vector<1x27xi1> to vector<1x27xi1>
      %856 = vector.broadcast %855 : vector<1x27xi1> to vector<8x27xi1>
      %857 = vector.broadcast %cst_90 : f32 to vector<8x27xf32>
      %858 = arith.select %856, %851, %857 : vector<8x27xi1>, vector<8x27xf32>
      %cst_253 = arith.constant dense<0x7F800000> : vector<8xf32>
      %859 = vector.multi_reduction <minimumf>, %858, %cst_253 [1] : vector<8x27xf32> to vector<8xf32>
      %860 = vector.shape_cast %859 : vector<8xf32> to vector<8x1xf32>
      %861 = vector.broadcast %860 : vector<8x1xf32> to vector<8x27xf32>
      %862 = arith.cmpf ole, %858, %861 : vector<8x27xf32>
      %863 = vector.shape_cast %111 : vector<1x27xf32> to vector<1x27xf32>
      %864 = vector.broadcast %863 : vector<1x27xf32> to vector<8x27xf32>
      %865 = vector.broadcast %cst_91 : f32 to vector<8x27xf32>
      %866 = arith.select %862, %864, %865 : vector<8x27xi1>, vector<8x27xf32>
      %cst_254 = arith.constant dense<0x7F800000> : vector<8xf32>
      %867 = vector.multi_reduction <minimumf>, %866, %cst_254 [1] : vector<8x27xf32> to vector<8xf32>
      %868 = vector.shape_cast %867 : vector<8xf32> to vector<8x1xf32>
      %869 = vector.broadcast %111 : vector<1x27xf32> to vector<8x27xf32>
      %870 = vector.broadcast %868 : vector<8x1xf32> to vector<8x27xf32>
      %871 = arith.cmpf oeq, %869, %870 : vector<8x27xf32>
      %872 = arith.extui %871 : vector<8x27xi1> to vector<8x27xi32>
      %873 = arith.sitofp %872 : vector<8x27xi32> to vector<8x27xf32>
      %874 = vector.broadcast %115 : vector<1x27xf32> to vector<8x27xf32>
      %875 = arith.mulf %874, %873 : vector<8x27xf32>
      %876 = arith.addf %852, %875 : vector<8x27xf32>
      %cst_255 = arith.constant 0.000000e+00 : f32
      %877 = vector.broadcast %cst_255 : f32 to vector<1x27xf32>
      %878 = arith.cmpf ogt, %119, %877 : vector<1x27xf32>
      %879 = vector.shape_cast %878 : vector<1x27xi1> to vector<1x27xi1>
      %880 = vector.broadcast %879 : vector<1x27xi1> to vector<8x27xi1>
      %881 = vector.broadcast %cst_90 : f32 to vector<8x27xf32>
      %882 = arith.select %880, %851, %881 : vector<8x27xi1>, vector<8x27xf32>
      %cst_256 = arith.constant dense<0x7F800000> : vector<8xf32>
      %883 = vector.multi_reduction <minimumf>, %882, %cst_256 [1] : vector<8x27xf32> to vector<8xf32>
      %884 = vector.shape_cast %883 : vector<8xf32> to vector<8x1xf32>
      %885 = vector.broadcast %884 : vector<8x1xf32> to vector<8x27xf32>
      %886 = arith.cmpf ole, %882, %885 : vector<8x27xf32>
      %887 = vector.shape_cast %111 : vector<1x27xf32> to vector<1x27xf32>
      %888 = vector.broadcast %887 : vector<1x27xf32> to vector<8x27xf32>
      %889 = vector.broadcast %cst_91 : f32 to vector<8x27xf32>
      %890 = arith.select %886, %888, %889 : vector<8x27xi1>, vector<8x27xf32>
      %cst_257 = arith.constant dense<0x7F800000> : vector<8xf32>
      %891 = vector.multi_reduction <minimumf>, %890, %cst_257 [1] : vector<8x27xf32> to vector<8xf32>
      %892 = vector.shape_cast %891 : vector<8xf32> to vector<8x1xf32>
      %893 = vector.broadcast %111 : vector<1x27xf32> to vector<8x27xf32>
      %894 = vector.broadcast %892 : vector<8x1xf32> to vector<8x27xf32>
      %895 = arith.cmpf oeq, %893, %894 : vector<8x27xf32>
      %896 = arith.extui %895 : vector<8x27xi1> to vector<8x27xi32>
      %897 = arith.sitofp %896 : vector<8x27xi32> to vector<8x27xf32>
      %898 = vector.broadcast %119 : vector<1x27xf32> to vector<8x27xf32>
      %899 = arith.mulf %898, %897 : vector<8x27xf32>
      %900 = arith.addf %876, %899 : vector<8x27xf32>
      %cst_258 = arith.constant 0.000000e+00 : f32
      %901 = vector.broadcast %cst_258 : f32 to vector<1x27xf32>
      %902 = arith.cmpf ogt, %123, %901 : vector<1x27xf32>
      %903 = vector.shape_cast %902 : vector<1x27xi1> to vector<1x27xi1>
      %904 = vector.broadcast %903 : vector<1x27xi1> to vector<8x27xi1>
      %905 = vector.broadcast %cst_90 : f32 to vector<8x27xf32>
      %906 = arith.select %904, %851, %905 : vector<8x27xi1>, vector<8x27xf32>
      %cst_259 = arith.constant dense<0x7F800000> : vector<8xf32>
      %907 = vector.multi_reduction <minimumf>, %906, %cst_259 [1] : vector<8x27xf32> to vector<8xf32>
      %908 = vector.shape_cast %907 : vector<8xf32> to vector<8x1xf32>
      %909 = vector.broadcast %908 : vector<8x1xf32> to vector<8x27xf32>
      %910 = arith.cmpf ole, %906, %909 : vector<8x27xf32>
      %911 = vector.shape_cast %111 : vector<1x27xf32> to vector<1x27xf32>
      %912 = vector.broadcast %911 : vector<1x27xf32> to vector<8x27xf32>
      %913 = vector.broadcast %cst_91 : f32 to vector<8x27xf32>
      %914 = arith.select %910, %912, %913 : vector<8x27xi1>, vector<8x27xf32>
      %cst_260 = arith.constant dense<0x7F800000> : vector<8xf32>
      %915 = vector.multi_reduction <minimumf>, %914, %cst_260 [1] : vector<8x27xf32> to vector<8xf32>
      %916 = vector.shape_cast %915 : vector<8xf32> to vector<8x1xf32>
      %917 = vector.broadcast %111 : vector<1x27xf32> to vector<8x27xf32>
      %918 = vector.broadcast %916 : vector<8x1xf32> to vector<8x27xf32>
      %919 = arith.cmpf oeq, %917, %918 : vector<8x27xf32>
      %920 = arith.extui %919 : vector<8x27xi1> to vector<8x27xi32>
      %921 = arith.sitofp %920 : vector<8x27xi32> to vector<8x27xf32>
      %922 = vector.broadcast %123 : vector<1x27xf32> to vector<8x27xf32>
      %923 = arith.mulf %922, %921 : vector<8x27xf32>
      %924 = arith.addf %900, %923 : vector<8x27xf32>
      %cst_261 = arith.constant 0.000000e+00 : f32
      %925 = vector.broadcast %cst_261 : f32 to vector<1x27xf32>
      %926 = arith.cmpf ogt, %127, %925 : vector<1x27xf32>
      %927 = vector.shape_cast %926 : vector<1x27xi1> to vector<1x27xi1>
      %928 = vector.broadcast %927 : vector<1x27xi1> to vector<8x27xi1>
      %929 = vector.broadcast %cst_90 : f32 to vector<8x27xf32>
      %930 = arith.select %928, %851, %929 : vector<8x27xi1>, vector<8x27xf32>
      %cst_262 = arith.constant dense<0x7F800000> : vector<8xf32>
      %931 = vector.multi_reduction <minimumf>, %930, %cst_262 [1] : vector<8x27xf32> to vector<8xf32>
      %932 = vector.shape_cast %931 : vector<8xf32> to vector<8x1xf32>
      %933 = vector.broadcast %932 : vector<8x1xf32> to vector<8x27xf32>
      %934 = arith.cmpf ole, %930, %933 : vector<8x27xf32>
      %935 = vector.shape_cast %111 : vector<1x27xf32> to vector<1x27xf32>
      %936 = vector.broadcast %935 : vector<1x27xf32> to vector<8x27xf32>
      %937 = vector.broadcast %cst_91 : f32 to vector<8x27xf32>
      %938 = arith.select %934, %936, %937 : vector<8x27xi1>, vector<8x27xf32>
      %cst_263 = arith.constant dense<0x7F800000> : vector<8xf32>
      %939 = vector.multi_reduction <minimumf>, %938, %cst_263 [1] : vector<8x27xf32> to vector<8xf32>
      %940 = vector.shape_cast %939 : vector<8xf32> to vector<8x1xf32>
      %941 = vector.broadcast %111 : vector<1x27xf32> to vector<8x27xf32>
      %942 = vector.broadcast %940 : vector<8x1xf32> to vector<8x27xf32>
      %943 = arith.cmpf oeq, %941, %942 : vector<8x27xf32>
      %944 = arith.extui %943 : vector<8x27xi1> to vector<8x27xi32>
      %945 = arith.sitofp %944 : vector<8x27xi32> to vector<8x27xf32>
      %946 = vector.broadcast %127 : vector<1x27xf32> to vector<8x27xf32>
      %947 = arith.mulf %946, %945 : vector<8x27xf32>
      %948 = arith.addf %924, %947 : vector<8x27xf32>
      %cst_264 = arith.constant 0.000000e+00 : f32
      %949 = vector.broadcast %cst_264 : f32 to vector<1x27xf32>
      %950 = arith.cmpf ogt, %131, %949 : vector<1x27xf32>
      %951 = vector.shape_cast %950 : vector<1x27xi1> to vector<1x27xi1>
      %952 = vector.broadcast %951 : vector<1x27xi1> to vector<8x27xi1>
      %953 = vector.broadcast %cst_90 : f32 to vector<8x27xf32>
      %954 = arith.select %952, %851, %953 : vector<8x27xi1>, vector<8x27xf32>
      %cst_265 = arith.constant dense<0x7F800000> : vector<8xf32>
      %955 = vector.multi_reduction <minimumf>, %954, %cst_265 [1] : vector<8x27xf32> to vector<8xf32>
      %956 = vector.shape_cast %955 : vector<8xf32> to vector<8x1xf32>
      %957 = vector.broadcast %956 : vector<8x1xf32> to vector<8x27xf32>
      %958 = arith.cmpf ole, %954, %957 : vector<8x27xf32>
      %959 = vector.shape_cast %111 : vector<1x27xf32> to vector<1x27xf32>
      %960 = vector.broadcast %959 : vector<1x27xf32> to vector<8x27xf32>
      %961 = vector.broadcast %cst_91 : f32 to vector<8x27xf32>
      %962 = arith.select %958, %960, %961 : vector<8x27xi1>, vector<8x27xf32>
      %cst_266 = arith.constant dense<0x7F800000> : vector<8xf32>
      %963 = vector.multi_reduction <minimumf>, %962, %cst_266 [1] : vector<8x27xf32> to vector<8xf32>
      %964 = vector.shape_cast %963 : vector<8xf32> to vector<8x1xf32>
      %965 = vector.broadcast %111 : vector<1x27xf32> to vector<8x27xf32>
      %966 = vector.broadcast %964 : vector<8x1xf32> to vector<8x27xf32>
      %967 = arith.cmpf oeq, %965, %966 : vector<8x27xf32>
      %968 = arith.extui %967 : vector<8x27xi1> to vector<8x27xi32>
      %969 = arith.sitofp %968 : vector<8x27xi32> to vector<8x27xf32>
      %970 = vector.broadcast %131 : vector<1x27xf32> to vector<8x27xf32>
      %971 = arith.mulf %970, %969 : vector<8x27xf32>
      %972 = arith.addf %948, %971 : vector<8x27xf32>
      %cst_267 = arith.constant 0.000000e+00 : f32
      %973 = vector.broadcast %cst_267 : f32 to vector<1x27xf32>
      %974 = arith.cmpf ogt, %135, %973 : vector<1x27xf32>
      %975 = vector.shape_cast %974 : vector<1x27xi1> to vector<1x27xi1>
      %976 = vector.broadcast %975 : vector<1x27xi1> to vector<8x27xi1>
      %977 = vector.broadcast %cst_90 : f32 to vector<8x27xf32>
      %978 = arith.select %976, %851, %977 : vector<8x27xi1>, vector<8x27xf32>
      %cst_268 = arith.constant dense<0x7F800000> : vector<8xf32>
      %979 = vector.multi_reduction <minimumf>, %978, %cst_268 [1] : vector<8x27xf32> to vector<8xf32>
      %980 = vector.shape_cast %979 : vector<8xf32> to vector<8x1xf32>
      %981 = vector.broadcast %980 : vector<8x1xf32> to vector<8x27xf32>
      %982 = arith.cmpf ole, %978, %981 : vector<8x27xf32>
      %983 = vector.shape_cast %111 : vector<1x27xf32> to vector<1x27xf32>
      %984 = vector.broadcast %983 : vector<1x27xf32> to vector<8x27xf32>
      %985 = vector.broadcast %cst_91 : f32 to vector<8x27xf32>
      %986 = arith.select %982, %984, %985 : vector<8x27xi1>, vector<8x27xf32>
      %cst_269 = arith.constant dense<0x7F800000> : vector<8xf32>
      %987 = vector.multi_reduction <minimumf>, %986, %cst_269 [1] : vector<8x27xf32> to vector<8xf32>
      %988 = vector.shape_cast %987 : vector<8xf32> to vector<8x1xf32>
      %989 = vector.broadcast %111 : vector<1x27xf32> to vector<8x27xf32>
      %990 = vector.broadcast %988 : vector<8x1xf32> to vector<8x27xf32>
      %991 = arith.cmpf oeq, %989, %990 : vector<8x27xf32>
      %992 = arith.extui %991 : vector<8x27xi1> to vector<8x27xi32>
      %993 = arith.sitofp %992 : vector<8x27xi32> to vector<8x27xf32>
      %994 = vector.broadcast %135 : vector<1x27xf32> to vector<8x27xf32>
      %995 = arith.mulf %994, %993 : vector<8x27xf32>
      %996 = arith.addf %972, %995 : vector<8x27xf32>
      %cst_270 = arith.constant dense<0.000000e+00> : vector<27xf32>
      %997 = vector.multi_reduction <add>, %996, %cst_270 [0] : vector<8x27xf32> to vector<27xf32>
      %998 = vector.shape_cast %997 : vector<27xf32> to vector<1x27xf32>
      %cst_271 = arith.constant dense<0.000000e+00> : vector<32x27xf32>
      %999 = tpu.matmul %21, %996, %cst_271 {dimension_numbers = #tpu.dot_dimension_numbers<[0], [0], [1], [1], [0, 1, 1, 1], [], []>} : vector<8x32xf32>, vector<8x27xf32>, vector<32x27xf32> -> vector<32x27xf32>
      %cst_272 = arith.constant 1.000000e+00 : f32
      %1000 = vector.broadcast %cst_272 : f32 to vector<1x27xf32>
      %1001 = arith.maximumf %998, %1000 : vector<1x27xf32>
      %cst_273 = arith.constant 1.000000e+00 : f32
      %1002 = vector.broadcast %cst_273 : f32 to vector<1x27xf32>
      %1003 = arith.divf %1002, %1001 : vector<1x27xf32>
      %1004 = vector.broadcast %1003 : vector<1x27xf32> to vector<32x27xf32>
      %1005 = arith.mulf %999, %1004 : vector<32x27xf32>
      %cst_274 = arith.constant 0.000000e+00 : f32
      %1006 = vector.broadcast %cst_274 : f32 to vector<1x27xf32>
      %1007 = arith.cmpf ogt, %998, %1006 : vector<1x27xf32>
      %1008 = vector.shape_cast %1007 : vector<1x27xi1> to vector<1x27xi1>
      %1009 = vector.broadcast %1008 : vector<1x27xi1> to vector<32x27xi1>
      %1010 = arith.select %1009, %1005, %arg6 : vector<32x27xi1>, vector<32x27xf32>
      %cst_275 = arith.constant 0.000000e+00 : f32
      %1011 = vector.broadcast %cst_275 : f32 to vector<1x27xf32>
      %1012 = arith.cmpf ogt, %arg7, %1011 : vector<1x27xf32>
      %1013 = vector.shape_cast %1012 : vector<1x27xi1> to vector<1x27xi1>
      %1014 = vector.broadcast %1013 : vector<1x27xi1> to vector<32x27xi1>
      %1015 = arith.select %1014, %arg6, %1010 : vector<32x27xi1>, vector<32x27xf32>
      %1016 = arith.subf %1015, %arg6 : vector<32x27xf32>
      %1017 = arith.mulf %1016, %1016 : vector<32x27xf32>
      %cst_276 = arith.constant dense<0.000000e+00> : vector<27xf32>
      %1018 = vector.multi_reduction <add>, %1017, %cst_276 [0] : vector<32x27xf32> to vector<27xf32>
      %1019 = vector.shape_cast %1018 : vector<27xf32> to vector<1x27xf32>
      %1020 = vector.broadcast %1019 : vector<1x27xf32> to vector<6x27xf32>
      %1021 = arith.mulf %140, %1020 : vector<6x27xf32>
      %cst_277 = arith.constant dense<0xFF800000> : vector<6xf32>
      %1022 = vector.multi_reduction <maximumf>, %1021, %cst_277 [1] : vector<6x27xf32> to vector<6xf32>
      %1023 = vector.shape_cast %1022 : vector<6xf32> to vector<6x1xf32>
      %1024 = vector.broadcast %335 : f32 to vector<6x1xf32>
      %1025 = arith.cmpf olt, %1023, %1024 : vector<6x1xf32>
      %1026 = arith.extui %1025 : vector<6x1xi1> to vector<6x1xi32>
      %1027 = arith.sitofp %1026 : vector<6x1xi32> to vector<6x1xf32>
      %1028 = vector.broadcast %1027 : vector<6x1xf32> to vector<6x27xf32>
      %1029 = arith.mulf %140, %1028 : vector<6x27xf32>
      %cst_278 = arith.constant dense<0xFF800000> : vector<27xf32>
      %1030 = vector.multi_reduction <maximumf>, %1029, %cst_278 [0] : vector<6x27xf32> to vector<27xf32>
      %1031 = vector.shape_cast %1030 : vector<27xf32> to vector<1x27xf32>
      %1032 = arith.maximumf %arg7, %1031 : vector<1x27xf32>
      %c1_i32_279 = arith.constant 1 : i32
      %1033 = arith.addi %arg5, %c1_i32_279 : i32
      scf.yield %1033, %1015, %1032 : i32, vector<32x27xf32>, vector<1x27xf32>
    }
    %338 = arith.mulf %337#1, %337#1 : vector<32x27xf32>
    %cst_93 = arith.constant dense<0.000000e+00> : vector<27xf32>
    %339 = vector.multi_reduction <add>, %338, %cst_93 [0] : vector<32x27xf32> to vector<27xf32>
    %340 = vector.shape_cast %339 : vector<27xf32> to vector<1x27xf32>
    %cst_94 = arith.constant dense<0.000000e+00> : vector<8x27xf32>
    %341 = tpu.matmul %21, %337#1, %cst_94 {dimension_numbers = #tpu.dot_dimension_numbers<[1], [0], [0], [1], [0, 0, 1, 1], [], []>} : vector<8x32xf32>, vector<32x27xf32>, vector<8x27xf32> -> vector<8x27xf32>
    %cst_95 = arith.constant 2.000000e+00 : f32
    %342 = vector.broadcast %cst_95 : f32 to vector<8x27xf32>
    %343 = arith.mulf %342, %341 : vector<8x27xf32>
    %344 = vector.broadcast %340 : vector<1x27xf32> to vector<8x27xf32>
    %345 = arith.subf %344, %343 : vector<8x27xf32>
    %cst_96 = arith.constant 0.000000e+00 : f32
    %346 = vector.broadcast %cst_96 : f32 to vector<8x27xf32>
    %cst_97 = arith.constant 0.000000e+00 : f32
    %347 = vector.broadcast %cst_97 : f32 to vector<1x27xf32>
    %348 = arith.cmpf ogt, %115, %347 : vector<1x27xf32>
    %cst_98 = arith.constant 1.000000e+30 : f32
    %349 = vector.shape_cast %348 : vector<1x27xi1> to vector<1x27xi1>
    %350 = vector.broadcast %349 : vector<1x27xi1> to vector<8x27xi1>
    %351 = vector.broadcast %cst_98 : f32 to vector<8x27xf32>
    %352 = arith.select %350, %345, %351 : vector<8x27xi1>, vector<8x27xf32>
    %cst_99 = arith.constant dense<0x7F800000> : vector<8xf32>
    %353 = vector.multi_reduction <minimumf>, %352, %cst_99 [1] : vector<8x27xf32> to vector<8xf32>
    %354 = vector.shape_cast %353 : vector<8xf32> to vector<8x1xf32>
    %355 = vector.broadcast %354 : vector<8x1xf32> to vector<8x27xf32>
    %356 = arith.cmpf ole, %352, %355 : vector<8x27xf32>
    %cst_100 = arith.constant 2.700000e+01 : f32
    %357 = vector.shape_cast %111 : vector<1x27xf32> to vector<1x27xf32>
    %358 = vector.broadcast %357 : vector<1x27xf32> to vector<8x27xf32>
    %359 = vector.broadcast %cst_100 : f32 to vector<8x27xf32>
    %360 = arith.select %356, %358, %359 : vector<8x27xi1>, vector<8x27xf32>
    %cst_101 = arith.constant dense<0x7F800000> : vector<8xf32>
    %361 = vector.multi_reduction <minimumf>, %360, %cst_101 [1] : vector<8x27xf32> to vector<8xf32>
    %362 = vector.shape_cast %361 : vector<8xf32> to vector<8x1xf32>
    %363 = vector.broadcast %111 : vector<1x27xf32> to vector<8x27xf32>
    %364 = vector.broadcast %362 : vector<8x1xf32> to vector<8x27xf32>
    %365 = arith.cmpf oeq, %363, %364 : vector<8x27xf32>
    %366 = arith.extui %365 : vector<8x27xi1> to vector<8x27xi32>
    %367 = arith.sitofp %366 : vector<8x27xi32> to vector<8x27xf32>
    %368 = vector.broadcast %115 : vector<1x27xf32> to vector<8x27xf32>
    %369 = arith.mulf %368, %367 : vector<8x27xf32>
    %370 = arith.addf %346, %369 : vector<8x27xf32>
    %cst_102 = arith.constant 0.000000e+00 : f32
    %371 = vector.broadcast %cst_102 : f32 to vector<1x27xf32>
    %372 = arith.cmpf ogt, %119, %371 : vector<1x27xf32>
    %cst_103 = arith.constant 1.000000e+30 : f32
    %373 = vector.shape_cast %372 : vector<1x27xi1> to vector<1x27xi1>
    %374 = vector.broadcast %373 : vector<1x27xi1> to vector<8x27xi1>
    %375 = vector.broadcast %cst_103 : f32 to vector<8x27xf32>
    %376 = arith.select %374, %345, %375 : vector<8x27xi1>, vector<8x27xf32>
    %cst_104 = arith.constant dense<0x7F800000> : vector<8xf32>
    %377 = vector.multi_reduction <minimumf>, %376, %cst_104 [1] : vector<8x27xf32> to vector<8xf32>
    %378 = vector.shape_cast %377 : vector<8xf32> to vector<8x1xf32>
    %379 = vector.broadcast %378 : vector<8x1xf32> to vector<8x27xf32>
    %380 = arith.cmpf ole, %376, %379 : vector<8x27xf32>
    %cst_105 = arith.constant 2.700000e+01 : f32
    %381 = vector.shape_cast %111 : vector<1x27xf32> to vector<1x27xf32>
    %382 = vector.broadcast %381 : vector<1x27xf32> to vector<8x27xf32>
    %383 = vector.broadcast %cst_105 : f32 to vector<8x27xf32>
    %384 = arith.select %380, %382, %383 : vector<8x27xi1>, vector<8x27xf32>
    %cst_106 = arith.constant dense<0x7F800000> : vector<8xf32>
    %385 = vector.multi_reduction <minimumf>, %384, %cst_106 [1] : vector<8x27xf32> to vector<8xf32>
    %386 = vector.shape_cast %385 : vector<8xf32> to vector<8x1xf32>
    %387 = vector.broadcast %111 : vector<1x27xf32> to vector<8x27xf32>
    %388 = vector.broadcast %386 : vector<8x1xf32> to vector<8x27xf32>
    %389 = arith.cmpf oeq, %387, %388 : vector<8x27xf32>
    %390 = arith.extui %389 : vector<8x27xi1> to vector<8x27xi32>
    %391 = arith.sitofp %390 : vector<8x27xi32> to vector<8x27xf32>
    %392 = vector.broadcast %119 : vector<1x27xf32> to vector<8x27xf32>
    %393 = arith.mulf %392, %391 : vector<8x27xf32>
    %394 = arith.addf %370, %393 : vector<8x27xf32>
    %cst_107 = arith.constant 0.000000e+00 : f32
    %395 = vector.broadcast %cst_107 : f32 to vector<1x27xf32>
    %396 = arith.cmpf ogt, %123, %395 : vector<1x27xf32>
    %cst_108 = arith.constant 1.000000e+30 : f32
    %397 = vector.shape_cast %396 : vector<1x27xi1> to vector<1x27xi1>
    %398 = vector.broadcast %397 : vector<1x27xi1> to vector<8x27xi1>
    %399 = vector.broadcast %cst_108 : f32 to vector<8x27xf32>
    %400 = arith.select %398, %345, %399 : vector<8x27xi1>, vector<8x27xf32>
    %cst_109 = arith.constant dense<0x7F800000> : vector<8xf32>
    %401 = vector.multi_reduction <minimumf>, %400, %cst_109 [1] : vector<8x27xf32> to vector<8xf32>
    %402 = vector.shape_cast %401 : vector<8xf32> to vector<8x1xf32>
    %403 = vector.broadcast %402 : vector<8x1xf32> to vector<8x27xf32>
    %404 = arith.cmpf ole, %400, %403 : vector<8x27xf32>
    %cst_110 = arith.constant 2.700000e+01 : f32
    %405 = vector.shape_cast %111 : vector<1x27xf32> to vector<1x27xf32>
    %406 = vector.broadcast %405 : vector<1x27xf32> to vector<8x27xf32>
    %407 = vector.broadcast %cst_110 : f32 to vector<8x27xf32>
    %408 = arith.select %404, %406, %407 : vector<8x27xi1>, vector<8x27xf32>
    %cst_111 = arith.constant dense<0x7F800000> : vector<8xf32>
    %409 = vector.multi_reduction <minimumf>, %408, %cst_111 [1] : vector<8x27xf32> to vector<8xf32>
    %410 = vector.shape_cast %409 : vector<8xf32> to vector<8x1xf32>
    %411 = vector.broadcast %111 : vector<1x27xf32> to vector<8x27xf32>
    %412 = vector.broadcast %410 : vector<8x1xf32> to vector<8x27xf32>
    %413 = arith.cmpf oeq, %411, %412 : vector<8x27xf32>
    %414 = arith.extui %413 : vector<8x27xi1> to vector<8x27xi32>
    %415 = arith.sitofp %414 : vector<8x27xi32> to vector<8x27xf32>
    %416 = vector.broadcast %123 : vector<1x27xf32> to vector<8x27xf32>
    %417 = arith.mulf %416, %415 : vector<8x27xf32>
    %418 = arith.addf %394, %417 : vector<8x27xf32>
    %cst_112 = arith.constant 0.000000e+00 : f32
    %419 = vector.broadcast %cst_112 : f32 to vector<1x27xf32>
    %420 = arith.cmpf ogt, %127, %419 : vector<1x27xf32>
    %cst_113 = arith.constant 1.000000e+30 : f32
    %421 = vector.shape_cast %420 : vector<1x27xi1> to vector<1x27xi1>
    %422 = vector.broadcast %421 : vector<1x27xi1> to vector<8x27xi1>
    %423 = vector.broadcast %cst_113 : f32 to vector<8x27xf32>
    %424 = arith.select %422, %345, %423 : vector<8x27xi1>, vector<8x27xf32>
    %cst_114 = arith.constant dense<0x7F800000> : vector<8xf32>
    %425 = vector.multi_reduction <minimumf>, %424, %cst_114 [1] : vector<8x27xf32> to vector<8xf32>
    %426 = vector.shape_cast %425 : vector<8xf32> to vector<8x1xf32>
    %427 = vector.broadcast %426 : vector<8x1xf32> to vector<8x27xf32>
    %428 = arith.cmpf ole, %424, %427 : vector<8x27xf32>
    %cst_115 = arith.constant 2.700000e+01 : f32
    %429 = vector.shape_cast %111 : vector<1x27xf32> to vector<1x27xf32>
    %430 = vector.broadcast %429 : vector<1x27xf32> to vector<8x27xf32>
    %431 = vector.broadcast %cst_115 : f32 to vector<8x27xf32>
    %432 = arith.select %428, %430, %431 : vector<8x27xi1>, vector<8x27xf32>
    %cst_116 = arith.constant dense<0x7F800000> : vector<8xf32>
    %433 = vector.multi_reduction <minimumf>, %432, %cst_116 [1] : vector<8x27xf32> to vector<8xf32>
    %434 = vector.shape_cast %433 : vector<8xf32> to vector<8x1xf32>
    %435 = vector.broadcast %111 : vector<1x27xf32> to vector<8x27xf32>
    %436 = vector.broadcast %434 : vector<8x1xf32> to vector<8x27xf32>
    %437 = arith.cmpf oeq, %435, %436 : vector<8x27xf32>
    %438 = arith.extui %437 : vector<8x27xi1> to vector<8x27xi32>
    %439 = arith.sitofp %438 : vector<8x27xi32> to vector<8x27xf32>
    %440 = vector.broadcast %127 : vector<1x27xf32> to vector<8x27xf32>
    %441 = arith.mulf %440, %439 : vector<8x27xf32>
    %442 = arith.addf %418, %441 : vector<8x27xf32>
    %cst_117 = arith.constant 0.000000e+00 : f32
    %443 = vector.broadcast %cst_117 : f32 to vector<1x27xf32>
    %444 = arith.cmpf ogt, %131, %443 : vector<1x27xf32>
    %cst_118 = arith.constant 1.000000e+30 : f32
    %445 = vector.shape_cast %444 : vector<1x27xi1> to vector<1x27xi1>
    %446 = vector.broadcast %445 : vector<1x27xi1> to vector<8x27xi1>
    %447 = vector.broadcast %cst_118 : f32 to vector<8x27xf32>
    %448 = arith.select %446, %345, %447 : vector<8x27xi1>, vector<8x27xf32>
    %cst_119 = arith.constant dense<0x7F800000> : vector<8xf32>
    %449 = vector.multi_reduction <minimumf>, %448, %cst_119 [1] : vector<8x27xf32> to vector<8xf32>
    %450 = vector.shape_cast %449 : vector<8xf32> to vector<8x1xf32>
    %451 = vector.broadcast %450 : vector<8x1xf32> to vector<8x27xf32>
    %452 = arith.cmpf ole, %448, %451 : vector<8x27xf32>
    %cst_120 = arith.constant 2.700000e+01 : f32
    %453 = vector.shape_cast %111 : vector<1x27xf32> to vector<1x27xf32>
    %454 = vector.broadcast %453 : vector<1x27xf32> to vector<8x27xf32>
    %455 = vector.broadcast %cst_120 : f32 to vector<8x27xf32>
    %456 = arith.select %452, %454, %455 : vector<8x27xi1>, vector<8x27xf32>
    %cst_121 = arith.constant dense<0x7F800000> : vector<8xf32>
    %457 = vector.multi_reduction <minimumf>, %456, %cst_121 [1] : vector<8x27xf32> to vector<8xf32>
    %458 = vector.shape_cast %457 : vector<8xf32> to vector<8x1xf32>
    %459 = vector.broadcast %111 : vector<1x27xf32> to vector<8x27xf32>
    %460 = vector.broadcast %458 : vector<8x1xf32> to vector<8x27xf32>
    %461 = arith.cmpf oeq, %459, %460 : vector<8x27xf32>
    %462 = arith.extui %461 : vector<8x27xi1> to vector<8x27xi32>
    %463 = arith.sitofp %462 : vector<8x27xi32> to vector<8x27xf32>
    %464 = vector.broadcast %131 : vector<1x27xf32> to vector<8x27xf32>
    %465 = arith.mulf %464, %463 : vector<8x27xf32>
    %466 = arith.addf %442, %465 : vector<8x27xf32>
    %cst_122 = arith.constant 0.000000e+00 : f32
    %467 = vector.broadcast %cst_122 : f32 to vector<1x27xf32>
    %468 = arith.cmpf ogt, %135, %467 : vector<1x27xf32>
    %cst_123 = arith.constant 1.000000e+30 : f32
    %469 = vector.shape_cast %468 : vector<1x27xi1> to vector<1x27xi1>
    %470 = vector.broadcast %469 : vector<1x27xi1> to vector<8x27xi1>
    %471 = vector.broadcast %cst_123 : f32 to vector<8x27xf32>
    %472 = arith.select %470, %345, %471 : vector<8x27xi1>, vector<8x27xf32>
    %cst_124 = arith.constant dense<0x7F800000> : vector<8xf32>
    %473 = vector.multi_reduction <minimumf>, %472, %cst_124 [1] : vector<8x27xf32> to vector<8xf32>
    %474 = vector.shape_cast %473 : vector<8xf32> to vector<8x1xf32>
    %475 = vector.broadcast %474 : vector<8x1xf32> to vector<8x27xf32>
    %476 = arith.cmpf ole, %472, %475 : vector<8x27xf32>
    %cst_125 = arith.constant 2.700000e+01 : f32
    %477 = vector.shape_cast %111 : vector<1x27xf32> to vector<1x27xf32>
    %478 = vector.broadcast %477 : vector<1x27xf32> to vector<8x27xf32>
    %479 = vector.broadcast %cst_125 : f32 to vector<8x27xf32>
    %480 = arith.select %476, %478, %479 : vector<8x27xi1>, vector<8x27xf32>
    %cst_126 = arith.constant dense<0x7F800000> : vector<8xf32>
    %481 = vector.multi_reduction <minimumf>, %480, %cst_126 [1] : vector<8x27xf32> to vector<8xf32>
    %482 = vector.shape_cast %481 : vector<8xf32> to vector<8x1xf32>
    %483 = vector.broadcast %111 : vector<1x27xf32> to vector<8x27xf32>
    %484 = vector.broadcast %482 : vector<8x1xf32> to vector<8x27xf32>
    %485 = arith.cmpf oeq, %483, %484 : vector<8x27xf32>
    %486 = arith.extui %485 : vector<8x27xi1> to vector<8x27xi32>
    %487 = arith.sitofp %486 : vector<8x27xi32> to vector<8x27xf32>
    %488 = vector.broadcast %135 : vector<1x27xf32> to vector<8x27xf32>
    %489 = arith.mulf %488, %487 : vector<8x27xf32>
    %490 = arith.addf %466, %489 : vector<8x27xf32>
    %cst_127 = arith.constant dense<0.000000e+00> : vector<27xf32>
    %491 = vector.multi_reduction <add>, %490, %cst_127 [0] : vector<8x27xf32> to vector<27xf32>
    %492 = vector.shape_cast %491 : vector<27xf32> to vector<1x27xf32>
    %cst_128 = arith.constant dense<0.000000e+00> : vector<8x27xf32>
    %493 = tpu.matmul %35, %490, %cst_128 {dimension_numbers = #tpu.dot_dimension_numbers<[1], [0], [0], [1], [0, 0, 1, 1], [], []>} : vector<8x8xf32>, vector<8x27xf32>, vector<8x27xf32> -> vector<8x27xf32>
    %cst_129 = arith.constant 1.000000e+00 : f32
    %494 = vector.broadcast %cst_129 : f32 to vector<1x27xf32>
    %495 = arith.maximumf %492, %494 : vector<1x27xf32>
    %cst_130 = arith.constant 1.000000e+00 : f32
    %496 = vector.broadcast %cst_130 : f32 to vector<1x27xf32>
    %497 = arith.divf %496, %495 : vector<1x27xf32>
    %498 = vector.broadcast %497 : vector<1x27xf32> to vector<8x27xf32>
    %499 = arith.mulf %493, %498 : vector<8x27xf32>
    %cst_131 = arith.constant 0.000000e+00 : f32
    %500 = vector.broadcast %cst_131 : f32 to vector<8x27xf32>
    %501 = arith.cmpf ogt, %490, %500 : vector<8x27xf32>
    %cst_132 = arith.constant 0.000000e+00 : f32
    %502 = vector.broadcast %cst_132 : f32 to vector<1x27xf32>
    %503 = arith.cmpf oeq, %492, %502 : vector<1x27xf32>
    %504 = vector.broadcast %503 : vector<1x27xi1> to vector<8x27xi1>
    %505 = arith.ori %501, %504 : vector<8x27xi1>
    %cst_133 = arith.constant 1.000000e+30 : f32
    %506 = vector.broadcast %cst_133 : f32 to vector<8x27xf32>
    %507 = arith.select %505, %506, %499 : vector<8x27xi1>, vector<8x27xf32>
    %cst_134 = arith.constant 0.000000e+00 : f32
    %508 = vector.broadcast %cst_134 : f32 to vector<8x6xf32>
    %509 = tpu.iota {dimensions = array<i32: 1>} : vector<8x6xi32>
    %cst_135 = arith.constant 0.000000e+00 : f32
    %510 = vector.broadcast %cst_135 : f32 to vector<1x6xf32>
    %511 = tpu.iota {dimensions = array<i32: 1>} : vector<1x6xi32>
    %512 = vector.broadcast %115 : vector<1x27xf32> to vector<8x27xf32>
    %513 = arith.mulf %512, %490 : vector<8x27xf32>
    %514 = vector.broadcast %492 : vector<1x27xf32> to vector<8x27xf32>
    %515 = arith.mulf %513, %514 : vector<8x27xf32>
    %cst_136 = arith.constant dense<0.000000e+00> : vector<8xf32>
    %516 = vector.multi_reduction <add>, %515, %cst_136 [1] : vector<8x27xf32> to vector<8xf32>
    %517 = vector.shape_cast %516 : vector<8xf32> to vector<8x1xf32>
    %518 = arith.mulf %513, %493 : vector<8x27xf32>
    %cst_137 = arith.constant dense<0.000000e+00> : vector<8xf32>
    %519 = vector.multi_reduction <add>, %518, %cst_137 [1] : vector<8x27xf32> to vector<8xf32>
    %520 = vector.shape_cast %519 : vector<8xf32> to vector<8x1xf32>
    %cst_138 = arith.constant 1.000000e+00 : f32
    %521 = vector.broadcast %cst_138 : f32 to vector<8x1xf32>
    %522 = arith.subf %517, %521 : vector<8x1xf32>
    %cst_139 = arith.constant 1.000000e+00 : f32
    %523 = vector.broadcast %cst_139 : f32 to vector<8x1xf32>
    %524 = arith.maximumf %522, %523 : vector<8x1xf32>
    %525 = arith.divf %520, %524 : vector<8x1xf32>
    %cst_140 = arith.constant 0.000000e+00 : f32
    %526 = vector.broadcast %cst_140 : f32 to vector<1x27xf32>
    %527 = arith.cmpf ogt, %115, %526 : vector<1x27xf32>
    %cst_141 = arith.constant 1.000000e+30 : f32
    %528 = vector.shape_cast %527 : vector<1x27xi1> to vector<1x27xi1>
    %529 = vector.broadcast %528 : vector<1x27xi1> to vector<8x27xi1>
    %530 = vector.broadcast %cst_141 : f32 to vector<8x27xf32>
    %531 = arith.select %529, %507, %530 : vector<8x27xi1>, vector<8x27xf32>
    %cst_142 = arith.constant dense<0x7F800000> : vector<8xf32>
    %532 = vector.multi_reduction <minimumf>, %531, %cst_142 [1] : vector<8x27xf32> to vector<8xf32>
    %533 = vector.shape_cast %532 : vector<8xf32> to vector<8x1xf32>
    %534 = arith.maximumf %525, %533 : vector<8x1xf32>
    %cst_143 = arith.constant 1.000000e+00 : f32
    %535 = vector.broadcast %cst_143 : f32 to vector<8x1xf32>
    %536 = arith.cmpf ogt, %517, %535 : vector<8x1xf32>
    %cst_144 = arith.constant 1.000000e+30 : f32
    %537 = vector.broadcast %cst_144 : f32 to vector<8x1xf32>
    %538 = arith.cmpf olt, %533, %537 : vector<8x1xf32>
    %539 = arith.andi %536, %538 : vector<8x1xi1>
    %cst_145 = arith.constant 0.000000e+00 : f32
    %540 = vector.broadcast %cst_145 : f32 to vector<8x1xf32>
    %541 = arith.cmpf ogt, %534, %540 : vector<8x1xf32>
    %542 = arith.andi %539, %541 : vector<8x1xi1>
    %543 = arith.subf %533, %525 : vector<8x1xf32>
    %cst_146 = arith.constant 1.000000e+00 : f32
    %544 = vector.broadcast %cst_146 : f32 to vector<8x1xf32>
    %545 = arith.select %542, %534, %544 : vector<8x1xi1>, vector<8x1xf32>
    %546 = arith.divf %543, %545 : vector<8x1xf32>
    %cst_147 = arith.constant 0.000000e+00 : f32
    %547 = vector.broadcast %cst_147 : f32 to vector<8x1xf32>
    %548 = arith.select %542, %546, %547 : vector<8x1xi1>, vector<8x1xf32>
    %c0_i32_148 = arith.constant 0 : i32
    %549 = vector.broadcast %c0_i32_148 : i32 to vector<1x6xi32>
    %550 = arith.cmpi eq, %511, %549 : vector<1x6xi32>
    %551 = vector.shape_cast %548 : vector<8x1xf32> to vector<1x8x1xf32>
    %cst_149 = arith.constant dense<0.000000e+00> : vector<1xf32>
    %552 = vector.multi_reduction <add>, %551, %cst_149 [1, 2] : vector<1x8x1xf32> to vector<1xf32>
    %553 = vector.shape_cast %552 : vector<1xf32> to vector<1x1x1xf32>
    %554 = vector.extract %553[0, 0, 0] : f32 from vector<1x1x1xf32>
    %cst_150 = arith.constant 1.250000e-01 : f32
    %555 = arith.mulf %554, %cst_150 : f32
    %cst_151 = arith.constant 0.000000e+00 : f32
    %556 = vector.broadcast %555 : f32 to vector<1x6xf32>
    %557 = vector.broadcast %cst_151 : f32 to vector<1x6xf32>
    %558 = arith.select %550, %556, %557 : vector<1x6xi1>, vector<1x6xf32>
    %559 = arith.addf %510, %558 : vector<1x6xf32>
    %c0_i32_152 = arith.constant 0 : i32
    %560 = vector.broadcast %c0_i32_152 : i32 to vector<8x6xi32>
    %561 = arith.cmpi eq, %509, %560 : vector<8x6xi32>
    %cst_153 = arith.constant 0.000000e+00 : f32
    %562 = vector.shape_cast %362 : vector<8x1xf32> to vector<8x1xf32>
    %563 = vector.broadcast %562 : vector<8x1xf32> to vector<8x6xf32>
    %564 = vector.broadcast %cst_153 : f32 to vector<8x6xf32>
    %565 = arith.select %561, %563, %564 : vector<8x6xi1>, vector<8x6xf32>
    %566 = arith.addf %508, %565 : vector<8x6xf32>
    %567 = vector.broadcast %119 : vector<1x27xf32> to vector<8x27xf32>
    %568 = arith.mulf %567, %490 : vector<8x27xf32>
    %569 = vector.broadcast %492 : vector<1x27xf32> to vector<8x27xf32>
    %570 = arith.mulf %568, %569 : vector<8x27xf32>
    %cst_154 = arith.constant dense<0.000000e+00> : vector<8xf32>
    %571 = vector.multi_reduction <add>, %570, %cst_154 [1] : vector<8x27xf32> to vector<8xf32>
    %572 = vector.shape_cast %571 : vector<8xf32> to vector<8x1xf32>
    %573 = arith.mulf %568, %493 : vector<8x27xf32>
    %cst_155 = arith.constant dense<0.000000e+00> : vector<8xf32>
    %574 = vector.multi_reduction <add>, %573, %cst_155 [1] : vector<8x27xf32> to vector<8xf32>
    %575 = vector.shape_cast %574 : vector<8xf32> to vector<8x1xf32>
    %cst_156 = arith.constant 1.000000e+00 : f32
    %576 = vector.broadcast %cst_156 : f32 to vector<8x1xf32>
    %577 = arith.subf %572, %576 : vector<8x1xf32>
    %cst_157 = arith.constant 1.000000e+00 : f32
    %578 = vector.broadcast %cst_157 : f32 to vector<8x1xf32>
    %579 = arith.maximumf %577, %578 : vector<8x1xf32>
    %580 = arith.divf %575, %579 : vector<8x1xf32>
    %cst_158 = arith.constant 0.000000e+00 : f32
    %581 = vector.broadcast %cst_158 : f32 to vector<1x27xf32>
    %582 = arith.cmpf ogt, %119, %581 : vector<1x27xf32>
    %cst_159 = arith.constant 1.000000e+30 : f32
    %583 = vector.shape_cast %582 : vector<1x27xi1> to vector<1x27xi1>
    %584 = vector.broadcast %583 : vector<1x27xi1> to vector<8x27xi1>
    %585 = vector.broadcast %cst_159 : f32 to vector<8x27xf32>
    %586 = arith.select %584, %507, %585 : vector<8x27xi1>, vector<8x27xf32>
    %cst_160 = arith.constant dense<0x7F800000> : vector<8xf32>
    %587 = vector.multi_reduction <minimumf>, %586, %cst_160 [1] : vector<8x27xf32> to vector<8xf32>
    %588 = vector.shape_cast %587 : vector<8xf32> to vector<8x1xf32>
    %589 = arith.maximumf %580, %588 : vector<8x1xf32>
    %cst_161 = arith.constant 1.000000e+00 : f32
    %590 = vector.broadcast %cst_161 : f32 to vector<8x1xf32>
    %591 = arith.cmpf ogt, %572, %590 : vector<8x1xf32>
    %cst_162 = arith.constant 1.000000e+30 : f32
    %592 = vector.broadcast %cst_162 : f32 to vector<8x1xf32>
    %593 = arith.cmpf olt, %588, %592 : vector<8x1xf32>
    %594 = arith.andi %591, %593 : vector<8x1xi1>
    %cst_163 = arith.constant 0.000000e+00 : f32
    %595 = vector.broadcast %cst_163 : f32 to vector<8x1xf32>
    %596 = arith.cmpf ogt, %589, %595 : vector<8x1xf32>
    %597 = arith.andi %594, %596 : vector<8x1xi1>
    %598 = arith.subf %588, %580 : vector<8x1xf32>
    %cst_164 = arith.constant 1.000000e+00 : f32
    %599 = vector.broadcast %cst_164 : f32 to vector<8x1xf32>
    %600 = arith.select %597, %589, %599 : vector<8x1xi1>, vector<8x1xf32>
    %601 = arith.divf %598, %600 : vector<8x1xf32>
    %cst_165 = arith.constant 0.000000e+00 : f32
    %602 = vector.broadcast %cst_165 : f32 to vector<8x1xf32>
    %603 = arith.select %597, %601, %602 : vector<8x1xi1>, vector<8x1xf32>
    %c1_i32_166 = arith.constant 1 : i32
    %604 = vector.broadcast %c1_i32_166 : i32 to vector<1x6xi32>
    %605 = arith.cmpi eq, %511, %604 : vector<1x6xi32>
    %606 = vector.shape_cast %603 : vector<8x1xf32> to vector<1x8x1xf32>
    %cst_167 = arith.constant dense<0.000000e+00> : vector<1xf32>
    %607 = vector.multi_reduction <add>, %606, %cst_167 [1, 2] : vector<1x8x1xf32> to vector<1xf32>
    %608 = vector.shape_cast %607 : vector<1xf32> to vector<1x1x1xf32>
    %609 = vector.extract %608[0, 0, 0] : f32 from vector<1x1x1xf32>
    %cst_168 = arith.constant 1.250000e-01 : f32
    %610 = arith.mulf %609, %cst_168 : f32
    %cst_169 = arith.constant 0.000000e+00 : f32
    %611 = vector.broadcast %610 : f32 to vector<1x6xf32>
    %612 = vector.broadcast %cst_169 : f32 to vector<1x6xf32>
    %613 = arith.select %605, %611, %612 : vector<1x6xi1>, vector<1x6xf32>
    %614 = arith.addf %559, %613 : vector<1x6xf32>
    %c1_i32_170 = arith.constant 1 : i32
    %615 = vector.broadcast %c1_i32_170 : i32 to vector<8x6xi32>
    %616 = arith.cmpi eq, %509, %615 : vector<8x6xi32>
    %cst_171 = arith.constant 0.000000e+00 : f32
    %617 = vector.shape_cast %386 : vector<8x1xf32> to vector<8x1xf32>
    %618 = vector.broadcast %617 : vector<8x1xf32> to vector<8x6xf32>
    %619 = vector.broadcast %cst_171 : f32 to vector<8x6xf32>
    %620 = arith.select %616, %618, %619 : vector<8x6xi1>, vector<8x6xf32>
    %621 = arith.addf %566, %620 : vector<8x6xf32>
    %622 = vector.broadcast %123 : vector<1x27xf32> to vector<8x27xf32>
    %623 = arith.mulf %622, %490 : vector<8x27xf32>
    %624 = vector.broadcast %492 : vector<1x27xf32> to vector<8x27xf32>
    %625 = arith.mulf %623, %624 : vector<8x27xf32>
    %cst_172 = arith.constant dense<0.000000e+00> : vector<8xf32>
    %626 = vector.multi_reduction <add>, %625, %cst_172 [1] : vector<8x27xf32> to vector<8xf32>
    %627 = vector.shape_cast %626 : vector<8xf32> to vector<8x1xf32>
    %628 = arith.mulf %623, %493 : vector<8x27xf32>
    %cst_173 = arith.constant dense<0.000000e+00> : vector<8xf32>
    %629 = vector.multi_reduction <add>, %628, %cst_173 [1] : vector<8x27xf32> to vector<8xf32>
    %630 = vector.shape_cast %629 : vector<8xf32> to vector<8x1xf32>
    %cst_174 = arith.constant 1.000000e+00 : f32
    %631 = vector.broadcast %cst_174 : f32 to vector<8x1xf32>
    %632 = arith.subf %627, %631 : vector<8x1xf32>
    %cst_175 = arith.constant 1.000000e+00 : f32
    %633 = vector.broadcast %cst_175 : f32 to vector<8x1xf32>
    %634 = arith.maximumf %632, %633 : vector<8x1xf32>
    %635 = arith.divf %630, %634 : vector<8x1xf32>
    %cst_176 = arith.constant 0.000000e+00 : f32
    %636 = vector.broadcast %cst_176 : f32 to vector<1x27xf32>
    %637 = arith.cmpf ogt, %123, %636 : vector<1x27xf32>
    %cst_177 = arith.constant 1.000000e+30 : f32
    %638 = vector.shape_cast %637 : vector<1x27xi1> to vector<1x27xi1>
    %639 = vector.broadcast %638 : vector<1x27xi1> to vector<8x27xi1>
    %640 = vector.broadcast %cst_177 : f32 to vector<8x27xf32>
    %641 = arith.select %639, %507, %640 : vector<8x27xi1>, vector<8x27xf32>
    %cst_178 = arith.constant dense<0x7F800000> : vector<8xf32>
    %642 = vector.multi_reduction <minimumf>, %641, %cst_178 [1] : vector<8x27xf32> to vector<8xf32>
    %643 = vector.shape_cast %642 : vector<8xf32> to vector<8x1xf32>
    %644 = arith.maximumf %635, %643 : vector<8x1xf32>
    %cst_179 = arith.constant 1.000000e+00 : f32
    %645 = vector.broadcast %cst_179 : f32 to vector<8x1xf32>
    %646 = arith.cmpf ogt, %627, %645 : vector<8x1xf32>
    %cst_180 = arith.constant 1.000000e+30 : f32
    %647 = vector.broadcast %cst_180 : f32 to vector<8x1xf32>
    %648 = arith.cmpf olt, %643, %647 : vector<8x1xf32>
    %649 = arith.andi %646, %648 : vector<8x1xi1>
    %cst_181 = arith.constant 0.000000e+00 : f32
    %650 = vector.broadcast %cst_181 : f32 to vector<8x1xf32>
    %651 = arith.cmpf ogt, %644, %650 : vector<8x1xf32>
    %652 = arith.andi %649, %651 : vector<8x1xi1>
    %653 = arith.subf %643, %635 : vector<8x1xf32>
    %cst_182 = arith.constant 1.000000e+00 : f32
    %654 = vector.broadcast %cst_182 : f32 to vector<8x1xf32>
    %655 = arith.select %652, %644, %654 : vector<8x1xi1>, vector<8x1xf32>
    %656 = arith.divf %653, %655 : vector<8x1xf32>
    %cst_183 = arith.constant 0.000000e+00 : f32
    %657 = vector.broadcast %cst_183 : f32 to vector<8x1xf32>
    %658 = arith.select %652, %656, %657 : vector<8x1xi1>, vector<8x1xf32>
    %c2_i32_184 = arith.constant 2 : i32
    %659 = vector.broadcast %c2_i32_184 : i32 to vector<1x6xi32>
    %660 = arith.cmpi eq, %511, %659 : vector<1x6xi32>
    %661 = vector.shape_cast %658 : vector<8x1xf32> to vector<1x8x1xf32>
    %cst_185 = arith.constant dense<0.000000e+00> : vector<1xf32>
    %662 = vector.multi_reduction <add>, %661, %cst_185 [1, 2] : vector<1x8x1xf32> to vector<1xf32>
    %663 = vector.shape_cast %662 : vector<1xf32> to vector<1x1x1xf32>
    %664 = vector.extract %663[0, 0, 0] : f32 from vector<1x1x1xf32>
    %cst_186 = arith.constant 1.250000e-01 : f32
    %665 = arith.mulf %664, %cst_186 : f32
    %cst_187 = arith.constant 0.000000e+00 : f32
    %666 = vector.broadcast %665 : f32 to vector<1x6xf32>
    %667 = vector.broadcast %cst_187 : f32 to vector<1x6xf32>
    %668 = arith.select %660, %666, %667 : vector<1x6xi1>, vector<1x6xf32>
    %669 = arith.addf %614, %668 : vector<1x6xf32>
    %c2_i32_188 = arith.constant 2 : i32
    %670 = vector.broadcast %c2_i32_188 : i32 to vector<8x6xi32>
    %671 = arith.cmpi eq, %509, %670 : vector<8x6xi32>
    %cst_189 = arith.constant 0.000000e+00 : f32
    %672 = vector.shape_cast %410 : vector<8x1xf32> to vector<8x1xf32>
    %673 = vector.broadcast %672 : vector<8x1xf32> to vector<8x6xf32>
    %674 = vector.broadcast %cst_189 : f32 to vector<8x6xf32>
    %675 = arith.select %671, %673, %674 : vector<8x6xi1>, vector<8x6xf32>
    %676 = arith.addf %621, %675 : vector<8x6xf32>
    %677 = vector.broadcast %127 : vector<1x27xf32> to vector<8x27xf32>
    %678 = arith.mulf %677, %490 : vector<8x27xf32>
    %679 = vector.broadcast %492 : vector<1x27xf32> to vector<8x27xf32>
    %680 = arith.mulf %678, %679 : vector<8x27xf32>
    %cst_190 = arith.constant dense<0.000000e+00> : vector<8xf32>
    %681 = vector.multi_reduction <add>, %680, %cst_190 [1] : vector<8x27xf32> to vector<8xf32>
    %682 = vector.shape_cast %681 : vector<8xf32> to vector<8x1xf32>
    %683 = arith.mulf %678, %493 : vector<8x27xf32>
    %cst_191 = arith.constant dense<0.000000e+00> : vector<8xf32>
    %684 = vector.multi_reduction <add>, %683, %cst_191 [1] : vector<8x27xf32> to vector<8xf32>
    %685 = vector.shape_cast %684 : vector<8xf32> to vector<8x1xf32>
    %cst_192 = arith.constant 1.000000e+00 : f32
    %686 = vector.broadcast %cst_192 : f32 to vector<8x1xf32>
    %687 = arith.subf %682, %686 : vector<8x1xf32>
    %cst_193 = arith.constant 1.000000e+00 : f32
    %688 = vector.broadcast %cst_193 : f32 to vector<8x1xf32>
    %689 = arith.maximumf %687, %688 : vector<8x1xf32>
    %690 = arith.divf %685, %689 : vector<8x1xf32>
    %cst_194 = arith.constant 0.000000e+00 : f32
    %691 = vector.broadcast %cst_194 : f32 to vector<1x27xf32>
    %692 = arith.cmpf ogt, %127, %691 : vector<1x27xf32>
    %cst_195 = arith.constant 1.000000e+30 : f32
    %693 = vector.shape_cast %692 : vector<1x27xi1> to vector<1x27xi1>
    %694 = vector.broadcast %693 : vector<1x27xi1> to vector<8x27xi1>
    %695 = vector.broadcast %cst_195 : f32 to vector<8x27xf32>
    %696 = arith.select %694, %507, %695 : vector<8x27xi1>, vector<8x27xf32>
    %cst_196 = arith.constant dense<0x7F800000> : vector<8xf32>
    %697 = vector.multi_reduction <minimumf>, %696, %cst_196 [1] : vector<8x27xf32> to vector<8xf32>
    %698 = vector.shape_cast %697 : vector<8xf32> to vector<8x1xf32>
    %699 = arith.maximumf %690, %698 : vector<8x1xf32>
    %cst_197 = arith.constant 1.000000e+00 : f32
    %700 = vector.broadcast %cst_197 : f32 to vector<8x1xf32>
    %701 = arith.cmpf ogt, %682, %700 : vector<8x1xf32>
    %cst_198 = arith.constant 1.000000e+30 : f32
    %702 = vector.broadcast %cst_198 : f32 to vector<8x1xf32>
    %703 = arith.cmpf olt, %698, %702 : vector<8x1xf32>
    %704 = arith.andi %701, %703 : vector<8x1xi1>
    %cst_199 = arith.constant 0.000000e+00 : f32
    %705 = vector.broadcast %cst_199 : f32 to vector<8x1xf32>
    %706 = arith.cmpf ogt, %699, %705 : vector<8x1xf32>
    %707 = arith.andi %704, %706 : vector<8x1xi1>
    %708 = arith.subf %698, %690 : vector<8x1xf32>
    %cst_200 = arith.constant 1.000000e+00 : f32
    %709 = vector.broadcast %cst_200 : f32 to vector<8x1xf32>
    %710 = arith.select %707, %699, %709 : vector<8x1xi1>, vector<8x1xf32>
    %711 = arith.divf %708, %710 : vector<8x1xf32>
    %cst_201 = arith.constant 0.000000e+00 : f32
    %712 = vector.broadcast %cst_201 : f32 to vector<8x1xf32>
    %713 = arith.select %707, %711, %712 : vector<8x1xi1>, vector<8x1xf32>
    %c3_i32_202 = arith.constant 3 : i32
    %714 = vector.broadcast %c3_i32_202 : i32 to vector<1x6xi32>
    %715 = arith.cmpi eq, %511, %714 : vector<1x6xi32>
    %716 = vector.shape_cast %713 : vector<8x1xf32> to vector<1x8x1xf32>
    %cst_203 = arith.constant dense<0.000000e+00> : vector<1xf32>
    %717 = vector.multi_reduction <add>, %716, %cst_203 [1, 2] : vector<1x8x1xf32> to vector<1xf32>
    %718 = vector.shape_cast %717 : vector<1xf32> to vector<1x1x1xf32>
    %719 = vector.extract %718[0, 0, 0] : f32 from vector<1x1x1xf32>
    %cst_204 = arith.constant 1.250000e-01 : f32
    %720 = arith.mulf %719, %cst_204 : f32
    %cst_205 = arith.constant 0.000000e+00 : f32
    %721 = vector.broadcast %720 : f32 to vector<1x6xf32>
    %722 = vector.broadcast %cst_205 : f32 to vector<1x6xf32>
    %723 = arith.select %715, %721, %722 : vector<1x6xi1>, vector<1x6xf32>
    %724 = arith.addf %669, %723 : vector<1x6xf32>
    %c3_i32_206 = arith.constant 3 : i32
    %725 = vector.broadcast %c3_i32_206 : i32 to vector<8x6xi32>
    %726 = arith.cmpi eq, %509, %725 : vector<8x6xi32>
    %cst_207 = arith.constant 0.000000e+00 : f32
    %727 = vector.shape_cast %434 : vector<8x1xf32> to vector<8x1xf32>
    %728 = vector.broadcast %727 : vector<8x1xf32> to vector<8x6xf32>
    %729 = vector.broadcast %cst_207 : f32 to vector<8x6xf32>
    %730 = arith.select %726, %728, %729 : vector<8x6xi1>, vector<8x6xf32>
    %731 = arith.addf %676, %730 : vector<8x6xf32>
    %732 = vector.broadcast %131 : vector<1x27xf32> to vector<8x27xf32>
    %733 = arith.mulf %732, %490 : vector<8x27xf32>
    %734 = vector.broadcast %492 : vector<1x27xf32> to vector<8x27xf32>
    %735 = arith.mulf %733, %734 : vector<8x27xf32>
    %cst_208 = arith.constant dense<0.000000e+00> : vector<8xf32>
    %736 = vector.multi_reduction <add>, %735, %cst_208 [1] : vector<8x27xf32> to vector<8xf32>
    %737 = vector.shape_cast %736 : vector<8xf32> to vector<8x1xf32>
    %738 = arith.mulf %733, %493 : vector<8x27xf32>
    %cst_209 = arith.constant dense<0.000000e+00> : vector<8xf32>
    %739 = vector.multi_reduction <add>, %738, %cst_209 [1] : vector<8x27xf32> to vector<8xf32>
    %740 = vector.shape_cast %739 : vector<8xf32> to vector<8x1xf32>
    %cst_210 = arith.constant 1.000000e+00 : f32
    %741 = vector.broadcast %cst_210 : f32 to vector<8x1xf32>
    %742 = arith.subf %737, %741 : vector<8x1xf32>
    %cst_211 = arith.constant 1.000000e+00 : f32
    %743 = vector.broadcast %cst_211 : f32 to vector<8x1xf32>
    %744 = arith.maximumf %742, %743 : vector<8x1xf32>
    %745 = arith.divf %740, %744 : vector<8x1xf32>
    %cst_212 = arith.constant 0.000000e+00 : f32
    %746 = vector.broadcast %cst_212 : f32 to vector<1x27xf32>
    %747 = arith.cmpf ogt, %131, %746 : vector<1x27xf32>
    %cst_213 = arith.constant 1.000000e+30 : f32
    %748 = vector.shape_cast %747 : vector<1x27xi1> to vector<1x27xi1>
    %749 = vector.broadcast %748 : vector<1x27xi1> to vector<8x27xi1>
    %750 = vector.broadcast %cst_213 : f32 to vector<8x27xf32>
    %751 = arith.select %749, %507, %750 : vector<8x27xi1>, vector<8x27xf32>
    %cst_214 = arith.constant dense<0x7F800000> : vector<8xf32>
    %752 = vector.multi_reduction <minimumf>, %751, %cst_214 [1] : vector<8x27xf32> to vector<8xf32>
    %753 = vector.shape_cast %752 : vector<8xf32> to vector<8x1xf32>
    %754 = arith.maximumf %745, %753 : vector<8x1xf32>
    %cst_215 = arith.constant 1.000000e+00 : f32
    %755 = vector.broadcast %cst_215 : f32 to vector<8x1xf32>
    %756 = arith.cmpf ogt, %737, %755 : vector<8x1xf32>
    %cst_216 = arith.constant 1.000000e+30 : f32
    %757 = vector.broadcast %cst_216 : f32 to vector<8x1xf32>
    %758 = arith.cmpf olt, %753, %757 : vector<8x1xf32>
    %759 = arith.andi %756, %758 : vector<8x1xi1>
    %cst_217 = arith.constant 0.000000e+00 : f32
    %760 = vector.broadcast %cst_217 : f32 to vector<8x1xf32>
    %761 = arith.cmpf ogt, %754, %760 : vector<8x1xf32>
    %762 = arith.andi %759, %761 : vector<8x1xi1>
    %763 = arith.subf %753, %745 : vector<8x1xf32>
    %cst_218 = arith.constant 1.000000e+00 : f32
    %764 = vector.broadcast %cst_218 : f32 to vector<8x1xf32>
    %765 = arith.select %762, %754, %764 : vector<8x1xi1>, vector<8x1xf32>
    %766 = arith.divf %763, %765 : vector<8x1xf32>
    %cst_219 = arith.constant 0.000000e+00 : f32
    %767 = vector.broadcast %cst_219 : f32 to vector<8x1xf32>
    %768 = arith.select %762, %766, %767 : vector<8x1xi1>, vector<8x1xf32>
    %c4_i32_220 = arith.constant 4 : i32
    %769 = vector.broadcast %c4_i32_220 : i32 to vector<1x6xi32>
    %770 = arith.cmpi eq, %511, %769 : vector<1x6xi32>
    %771 = vector.shape_cast %768 : vector<8x1xf32> to vector<1x8x1xf32>
    %cst_221 = arith.constant dense<0.000000e+00> : vector<1xf32>
    %772 = vector.multi_reduction <add>, %771, %cst_221 [1, 2] : vector<1x8x1xf32> to vector<1xf32>
    %773 = vector.shape_cast %772 : vector<1xf32> to vector<1x1x1xf32>
    %774 = vector.extract %773[0, 0, 0] : f32 from vector<1x1x1xf32>
    %cst_222 = arith.constant 1.250000e-01 : f32
    %775 = arith.mulf %774, %cst_222 : f32
    %cst_223 = arith.constant 0.000000e+00 : f32
    %776 = vector.broadcast %775 : f32 to vector<1x6xf32>
    %777 = vector.broadcast %cst_223 : f32 to vector<1x6xf32>
    %778 = arith.select %770, %776, %777 : vector<1x6xi1>, vector<1x6xf32>
    %779 = arith.addf %724, %778 : vector<1x6xf32>
    %c4_i32_224 = arith.constant 4 : i32
    %780 = vector.broadcast %c4_i32_224 : i32 to vector<8x6xi32>
    %781 = arith.cmpi eq, %509, %780 : vector<8x6xi32>
    %cst_225 = arith.constant 0.000000e+00 : f32
    %782 = vector.shape_cast %458 : vector<8x1xf32> to vector<8x1xf32>
    %783 = vector.broadcast %782 : vector<8x1xf32> to vector<8x6xf32>
    %784 = vector.broadcast %cst_225 : f32 to vector<8x6xf32>
    %785 = arith.select %781, %783, %784 : vector<8x6xi1>, vector<8x6xf32>
    %786 = arith.addf %731, %785 : vector<8x6xf32>
    %787 = vector.broadcast %135 : vector<1x27xf32> to vector<8x27xf32>
    %788 = arith.mulf %787, %490 : vector<8x27xf32>
    %789 = vector.broadcast %492 : vector<1x27xf32> to vector<8x27xf32>
    %790 = arith.mulf %788, %789 : vector<8x27xf32>
    %cst_226 = arith.constant dense<0.000000e+00> : vector<8xf32>
    %791 = vector.multi_reduction <add>, %790, %cst_226 [1] : vector<8x27xf32> to vector<8xf32>
    %792 = vector.shape_cast %791 : vector<8xf32> to vector<8x1xf32>
    %793 = arith.mulf %788, %493 : vector<8x27xf32>
    %cst_227 = arith.constant dense<0.000000e+00> : vector<8xf32>
    %794 = vector.multi_reduction <add>, %793, %cst_227 [1] : vector<8x27xf32> to vector<8xf32>
    %795 = vector.shape_cast %794 : vector<8xf32> to vector<8x1xf32>
    %cst_228 = arith.constant 1.000000e+00 : f32
    %796 = vector.broadcast %cst_228 : f32 to vector<8x1xf32>
    %797 = arith.subf %792, %796 : vector<8x1xf32>
    %cst_229 = arith.constant 1.000000e+00 : f32
    %798 = vector.broadcast %cst_229 : f32 to vector<8x1xf32>
    %799 = arith.maximumf %797, %798 : vector<8x1xf32>
    %800 = arith.divf %795, %799 : vector<8x1xf32>
    %cst_230 = arith.constant 0.000000e+00 : f32
    %801 = vector.broadcast %cst_230 : f32 to vector<1x27xf32>
    %802 = arith.cmpf ogt, %135, %801 : vector<1x27xf32>
    %cst_231 = arith.constant 1.000000e+30 : f32
    %803 = vector.shape_cast %802 : vector<1x27xi1> to vector<1x27xi1>
    %804 = vector.broadcast %803 : vector<1x27xi1> to vector<8x27xi1>
    %805 = vector.broadcast %cst_231 : f32 to vector<8x27xf32>
    %806 = arith.select %804, %507, %805 : vector<8x27xi1>, vector<8x27xf32>
    %cst_232 = arith.constant dense<0x7F800000> : vector<8xf32>
    %807 = vector.multi_reduction <minimumf>, %806, %cst_232 [1] : vector<8x27xf32> to vector<8xf32>
    %808 = vector.shape_cast %807 : vector<8xf32> to vector<8x1xf32>
    %809 = arith.maximumf %800, %808 : vector<8x1xf32>
    %cst_233 = arith.constant 1.000000e+00 : f32
    %810 = vector.broadcast %cst_233 : f32 to vector<8x1xf32>
    %811 = arith.cmpf ogt, %792, %810 : vector<8x1xf32>
    %cst_234 = arith.constant 1.000000e+30 : f32
    %812 = vector.broadcast %cst_234 : f32 to vector<8x1xf32>
    %813 = arith.cmpf olt, %808, %812 : vector<8x1xf32>
    %814 = arith.andi %811, %813 : vector<8x1xi1>
    %cst_235 = arith.constant 0.000000e+00 : f32
    %815 = vector.broadcast %cst_235 : f32 to vector<8x1xf32>
    %816 = arith.cmpf ogt, %809, %815 : vector<8x1xf32>
    %817 = arith.andi %814, %816 : vector<8x1xi1>
    %818 = arith.subf %808, %800 : vector<8x1xf32>
    %cst_236 = arith.constant 1.000000e+00 : f32
    %819 = vector.broadcast %cst_236 : f32 to vector<8x1xf32>
    %820 = arith.select %817, %809, %819 : vector<8x1xi1>, vector<8x1xf32>
    %821 = arith.divf %818, %820 : vector<8x1xf32>
    %cst_237 = arith.constant 0.000000e+00 : f32
    %822 = vector.broadcast %cst_237 : f32 to vector<8x1xf32>
    %823 = arith.select %817, %821, %822 : vector<8x1xi1>, vector<8x1xf32>
    %c5_i32_238 = arith.constant 5 : i32
    %824 = vector.broadcast %c5_i32_238 : i32 to vector<1x6xi32>
    %825 = arith.cmpi eq, %511, %824 : vector<1x6xi32>
    %826 = vector.shape_cast %823 : vector<8x1xf32> to vector<1x8x1xf32>
    %cst_239 = arith.constant dense<0.000000e+00> : vector<1xf32>
    %827 = vector.multi_reduction <add>, %826, %cst_239 [1, 2] : vector<1x8x1xf32> to vector<1xf32>
    %828 = vector.shape_cast %827 : vector<1xf32> to vector<1x1x1xf32>
    %829 = vector.extract %828[0, 0, 0] : f32 from vector<1x1x1xf32>
    %cst_240 = arith.constant 1.250000e-01 : f32
    %830 = arith.mulf %829, %cst_240 : f32
    %cst_241 = arith.constant 0.000000e+00 : f32
    %831 = vector.broadcast %830 : f32 to vector<1x6xf32>
    %832 = vector.broadcast %cst_241 : f32 to vector<1x6xf32>
    %833 = arith.select %825, %831, %832 : vector<1x6xi1>, vector<1x6xf32>
    %834 = arith.addf %779, %833 : vector<1x6xf32>
    %c5_i32_242 = arith.constant 5 : i32
    %835 = vector.broadcast %c5_i32_242 : i32 to vector<8x6xi32>
    %836 = arith.cmpi eq, %509, %835 : vector<8x6xi32>
    %cst_243 = arith.constant 0.000000e+00 : f32
    %837 = vector.shape_cast %482 : vector<8x1xf32> to vector<8x1xf32>
    %838 = vector.broadcast %837 : vector<8x1xf32> to vector<8x6xf32>
    %839 = vector.broadcast %cst_243 : f32 to vector<8x6xf32>
    %840 = arith.select %836, %838, %839 : vector<8x6xi1>, vector<8x6xf32>
    %841 = arith.addf %786, %840 : vector<8x6xf32>
    %c0_244 = arith.constant 0 : index
    %c0_245 = arith.constant 0 : index
    %842 = vector.load %arg2[%c0_244, %c0_245] : memref<1x6xf32, #tpu.memory_space<vmem>>, vector<1x6xf32>
    tpu.vector_store %arg2[%c0_244, %c0_245], %834 {strides = array<i32>} : memref<1x6xf32, #tpu.memory_space<vmem>>, vector<1x6xf32>,
    %c0_246 = arith.constant 0 : index
    %c0_247 = arith.constant 0 : index
    %843 = vector.load %arg3[%c0_246, %c0_247] : memref<8x6xf32, #tpu.memory_space<vmem>>, vector<8x6xf32>
    tpu.vector_store %arg3[%c0_246, %c0_247], %841 {strides = array<i32>} : memref<8x6xf32, #tpu.memory_space<vmem>>, vector<8x6xf32>,
    return
  }
  func.func @transform_0(%arg0: i32) -> (i32, i32) {
    %c0_i32 = arith.constant 0 : i32
    %c0_i32_0 = arith.constant 0 : i32
    %c0_i32_1 = arith.constant 0 : i32
    return %c0_i32, %c0_i32_0 : i32, i32
  }
  func.func @transform_1(%arg0: i32) -> (i32, i32) {
    %c0_i32 = arith.constant 0 : i32
    %c0_i32_0 = arith.constant 0 : i32
    %c0_i32_1 = arith.constant 0 : i32
    return %c0_i32, %c0_i32_0 : i32, i32
  }
  func.func @transform_2(%arg0: i32) -> (i32, i32) {
    %c0_i32 = arith.constant 0 : i32
    %c0_i32_0 = arith.constant 0 : i32
    %c0_i32_1 = arith.constant 0 : i32
    return %c0_i32, %c0_i32_0 : i32, i32
  }
  func.func @transform_3(%arg0: i32) -> (i32, i32) {
    %c0_i32 = arith.constant 0 : i32
    %c0_i32_0 = arith.constant 0 : i32
    %c0_i32_1 = arith.constant 0 : i32
    return %c0_i32, %c0_i32_0 : i32, i32
  }
}

</mosaic_0001>

<llo_original>
// kernel: _device_forward.1
$region0: #{_device_forward.1}
  #allocation0 [shape = 'u32[]', space=smem, size = 0x4, offset = 0x4, fixed_abs, tag = 'smem constant byte address 0x4 - core index']
  #allocation1 [shape = 'u32[144,128]{1,0:T(1,128)}', space=vmem, size = 0x12000, scoped, tag = 'internal scratch']
  %s0 = inlined_call_operand.hbm [shape: f32[8,32], index: 0, kind: input, shape index: {}]
  %s1 = inlined_call_operand.vmem [shape: f32[1,6], index: 1, kind: output, shape index: {0}]
  %s2 = inlined_call_operand.vmem [shape: f32[8,6], index: 2, kind: output, shape index: {1}]
  %s3 = inlined_call_operand.vmem [shape: f32[8,8], index: 3, kind: output, shape index: {2}]
  %4 = xla_tuple %s1, %s2, %s3
  %s5 = sld [smem:[#allocation0]]
  $region41: #{_device_forward.1} parent=0
    _
  %s7 = ssub.s32 1, %s5
  %s8 = scalar_select 0, %s7, %s5
  $region1: #{_device_forward.1} parent=0
    #allocation2 [shape = 'u8[4096]{0}', space=vmem, size = 0x1000, scoped, tag = 'input window, operand 0, single buffered']
    #allocation3 [shape = 's32[1]{0}', space=sflag, size = 0x4, scoped, tag = 'scoped memory for _device_forward.1']
    %9 = vsyncpa [#allocation3], 0
    // Predicated region
    $region2: #{_device_forward.1} parent=1 // pred_check
      _
    $region3: #{_device_forward.1} parent=1 // pred_check_branch
      %11 = sbr.rel (0) target = $region5
    $region4: #{_device_forward.1} parent=1 // pred_region
      %s13 = ssub.s32 128, 128
      %14 = vsyncadd [#allocation3], %s13
      %s16 = sshll.u32 [#allocation2], 4
      %s17 = int_to_ptr.vmem [resolvable:$true] %s16
      %19 = dma.hbm_to_vmem [thread:$0]  %s0, 128, %s17, [#allocation3]
    $region5: #{_device_forward.1} parent=1 // pred_fallthru
      _
    // Predicated region
    $region6: #{_device_forward.1} parent=1 // pred_check
      _
    $region7: #{_device_forward.1} parent=1 // pred_check_branch
      %21 = sbr.rel (0) target = $region9
    $region8: #{_device_forward.1} parent=1 // pred_region
      %22 = dma.done [#allocation3], 128
    $region9: #{_device_forward.1} parent=1 // pred_fallthru
      _
    %v23 = vld [vmem:[#allocation2] sm:$0xff]
    %vm24 = vcmask 261120
    %v25 = vsel %vm24, %v23, 0.0
    %v26 = vrot.slane %v25, 4
    %v27 = vadd.f32 %v25, %v26
    %v28 = vrot.slane %v27, 2
    %v29 = vadd.f32 %v27, %v28
    %v30 = vrot.slane %v29, 1
    %v31 = vadd.f32 %v29, %v30
    %v32 = vrcp.pop 8.0
    %v33 = vmul.f32 %v31, %v32
    %v34 = vsub.f32 %v23, %v33
    %v35 = vmul.f32 %v34, %v34
    %v36 = vsel %vm24, %v35, 0.0
    %v37 = vrot.slane %v36, 4
    %v38 = vadd.f32 %v36, %v37
    %v39 = vrot.slane %v38, 2
    %v40 = vadd.f32 %v38, %v39
    %v41 = vrot.slane %v40, 1
    %v42 = vadd.f32 %v40, %v41
    %v43 = vmul.f32 %v42, %v32
    %vm44 = vcmp.gt.f32.partialorder %v43, 0.0
    %v45 = vrsqrt.pop %v43
    %v46 = vsel %vm44, %v45, 1.0
    %v47 = vmul.f32 %v34, %v46
    %v48 = vmul.f32 %v47, %v47
    %v49 = vsel %vm24, %v48, 0.0
    %50 = vadd.xlane.f32.xlu0 %v49
    %v51 = vpop.xlane.xlu0 %50
    %v53 = vsel %vm24, 1.0, 0
    %v56 = vsel %vm24, %v48, 0
    %58 = vmatprep.subr.mxu0 0.0
    %59 = vmatpush1.xpose.msra.mxu0 0.0
    %60 = vmatprep.subr.mxu0 0.0
    %61 = vmatpush1.xpose.msra.mxu0 0.0
    %62 = vmatprep.subr.mxu0 0.0
    %63 = vmatpush1.xpose.msra.mxu0 0.0
    %64 = vmatprep.subr.mxu0 0.0
    %65 = vmatpush1.xpose.msra.mxu0 0.0
    %66 = vmatprep.subr.mxu0 0.0
    %67 = vmatpush1.xpose.msra.mxu0 0.0
    %68 = vmatprep.subr.mxu0 0.0
    %69 = vmatpush1.xpose.msra.mxu0 0.0
    %70 = vmatprep.subr.mxu0 0.0
    %71 = vmatpush1.xpose.msra.mxu0 0.0
    %72 = vmatprep.subr.mxu0 0.0
    %73 = vmatpush1.xpose.msra.mxu0 0.0
    %74 = vmatprep.subr.mxu0 0.0
    %75 = vmatpush1.xpose.msra.mxu0 0.0
    %76 = vmatprep.subr.mxu0 0.0
    %77 = vmatpush1.xpose.msra.mxu0 0.0
    %78 = vmatprep.subr.mxu0 0.0
    %79 = vmatpush1.xpose.msra.mxu0 0.0
    %80 = vmatprep.subr.mxu0 0.0
    %81 = vmatpush1.xpose.msra.mxu0 0.0
    %82 = vmatprep.subr.mxu0 0.0
    %83 = vmatpush1.xpose.msra.mxu0 0.0
    %84 = vmatprep.subr.mxu0 0.0
    %85 = vmatpush1.xpose.msra.mxu0 0.0
    %86 = vmatprep.subr.mxu0 0.0
    %87 = vmatpush1.xpose.msra.mxu0 0.0
    %88 = vmatprep.subr.mxu0 0.0
    %89 = vmatpush1.xpose.msra.mxu0 %v56
    %90 = vmatprep.subr.mxu0 0.0
    %91 = vmatpush2.xpose.msra.mxu0 0.0
    %92 = vmatprep.subr.mxu0 0.0
    %93 = vmatpush2.xpose.msra.mxu0 0.0
    %94 = vmatprep.subr.mxu0 0.0
    %95 = vmatpush2.xpose.msra.mxu0 0.0
    %96 = vmatprep.subr.mxu0 0.0
    %97 = vmatpush2.xpose.msra.mxu0 0.0
    %98 = vmatprep.subr.mxu0 0.0
    %99 = vmatpush2.xpose.msra.mxu0 0.0
    %100 = vmatprep.subr.mxu0 0.0
    %101 = vmatpush2.xpose.msra.mxu0 0.0
    %102 = vmatprep.subr.mxu0 0.0
    %103 = vmatpush2.xpose.msra.mxu0 0.0
    %104 = vmatprep.subr.mxu0 0.0
    %105 = vmatpush2.xpose.msra.mxu0 0.0
    %106 = vmatprep.subr.mxu0 0.0
    %107 = vmatpush2.xpose.msra.mxu0 0.0
    %108 = vmatprep.subr.mxu0 0.0
    %109 = vmatpush2.xpose.msra.mxu0 0.0
    %110 = vmatprep.subr.mxu0 0.0
    %111 = vmatpush2.xpose.msra.mxu0 0.0
    %112 = vmatprep.subr.mxu0 0.0
    %113 = vmatpush2.xpose.msra.mxu0 0.0
    %114 = vmatprep.subr.mxu0 0.0
    %115 = vmatpush2.xpose.msra.mxu0 0.0
    %116 = vmatprep.subr.mxu0 0.0
    %117 = vmatpush2.xpose.msra.mxu0 0.0
    %118 = vmatprep.subr.mxu0 0.0
    %119 = vmatpush2.xpose.msra.mxu0 0.0
    %120 = vmatprep.subr.mxu0 0.0
    %121 = vmatpush2.xpose.msra.mxu0 0.0
    %122 = vmatprep.mubr.f32.mxu0 0.0
    %123 = vmatmul.mubr.f32.gmra.mxu0 %v53
    %v124 = vpop.f32.mrf.mxu0
    %v125 = vadd.f32 0.0, %v124
    %v126 = vpop.f32.mrf.mxu0
    %127 = vdwg.mxu0
    %v129 = vsel %vm24, %v47, 0
    %131 = vmatprep.subr.mxu0 0.0
    %132 = vmatpush1.xpose.msra.mxu0 0.0
    %133 = vmatprep.subr.mxu0 0.0
    %134 = vmatpush1.xpose.msra.mxu0 0.0
    %135 = vmatprep.subr.mxu0 0.0
    %136 = vmatpush1.xpose.msra.mxu0 0.0
    %137 = vmatprep.subr.mxu0 0.0
    %138 = vmatpush1.xpose.msra.mxu0 0.0
    %139 = vmatprep.subr.mxu0 0.0
    %140 = vmatpush1.xpose.msra.mxu0 0.0
    %141 = vmatprep.subr.mxu0 0.0
    %142 = vmatpush1.xpose.msra.mxu0 0.0
    %143 = vmatprep.subr.mxu0 0.0
    %144 = vmatpush1.xpose.msra.mxu0 0.0
    %145 = vmatprep.subr.mxu0 0.0
    %146 = vmatpush1.xpose.msra.mxu0 0.0
    %147 = vmatprep.subr.mxu0 0.0
    %148 = vmatpush1.xpose.msra.mxu0 0.0
    %149 = vmatprep.subr.mxu0 0.0
    %150 = vmatpush1.xpose.msra.mxu0 0.0
    %151 = vmatprep.subr.mxu0 0.0
    %152 = vmatpush1.xpose.msra.mxu0 0.0
    %153 = vmatprep.subr.mxu0 0.0
    %154 = vmatpush1.xpose.msra.mxu0 0.0
    %155 = vmatprep.subr.mxu0 0.0
    %156 = vmatpush1.xpose.msra.mxu0 0.0
    %157 = vmatprep.subr.mxu0 0.0
    %158 = vmatpush1.xpose.msra.mxu0 0.0
    %159 = vmatprep.subr.mxu0 0.0
    %160 = vmatpush1.xpose.msra.mxu0 0.0
    %161 = vmatprep.subr.mxu0 0.0
    %162 = vmatpush1.xpose.msra.mxu0 %v129
    %163 = vmatprep.subr.mxu0 0.0
    %164 = vmatpush2.xpose.msra.mxu0 0.0
    %165 = vmatprep.subr.mxu0 0.0
    %166 = vmatpush2.xpose.msra.mxu0 0.0
    %167 = vmatprep.subr.mxu0 0.0
    %168 = vmatpush2.xpose.msra.mxu0 0.0
    %169 = vmatprep.subr.mxu0 0.0
    %170 = vmatpush2.xpose.msra.mxu0 0.0
    %171 = vmatprep.subr.mxu0 0.0
    %172 = vmatpush2.xpose.msra.mxu0 0.0
    %173 = vmatprep.subr.mxu0 0.0
    %174 = vmatpush2.xpose.msra.mxu0 0.0
    %175 = vmatprep.subr.mxu0 0.0
    %176 = vmatpush2.xpose.msra.mxu0 0.0
    %177 = vmatprep.subr.mxu0 0.0
    %178 = vmatpush2.xpose.msra.mxu0 0.0
    %179 = vmatprep.subr.mxu0 0.0
    %180 = vmatpush2.xpose.msra.mxu0 0.0
    %181 = vmatprep.subr.mxu0 0.0
    %182 = vmatpush2.xpose.msra.mxu0 0.0
    %183 = vmatprep.subr.mxu0 0.0
    %184 = vmatpush2.xpose.msra.mxu0 0.0
    %185 = vmatprep.subr.mxu0 0.0
    %186 = vmatpush2.xpose.msra.mxu0 0.0
    %187 = vmatprep.subr.mxu0 0.0
    %188 = vmatpush2.xpose.msra.mxu0 0.0
    %189 = vmatprep.subr.mxu0 0.0
    %190 = vmatpush2.xpose.msra.mxu0 0.0
    %191 = vmatprep.subr.mxu0 0.0
    %192 = vmatpush2.xpose.msra.mxu0 0.0
    %193 = vmatprep.subr.mxu0 0.0
    %194 = vmatpush2.xpose.msra.mxu0 0.0
    %195 = vmatprep.mubr.f32.mxu0 0.0
    %196 = vmatmul.mubr.f32.gmra.mxu0 %v129
    %v197 = vpop.f32.mrf.mxu0
    %v198 = vadd.f32 0.0, %v197
    %v199 = vpop.f32.mrf.mxu0
    %200 = vdwg.mxu0
    %v201 = vlaneseq
    %v202 = vshrl.u32 %v201, 7
    %v203 = vsub.s32 0, %v202
    %v204 = vrot.slane %v125, %v203
    %v205 = vadd.f32 %v51, %v204
    %v206 = vmul.f32 %v198, 2.0
    %v207 = vsub.f32 %v205, %v206
    %v208 = vmax.f32 %v207, 0.0
    %v209 = vrsqrt.pop %v208
    %v210 = vmul.f32 %v208, %v209
    %vm211 = vcmp.eq.f32.partialorder %v208, inf
    %v212 = vsel %vm211, %v208, %v210
    %vm213 = vcmp.eq.f32.partialorder %v208, 0.0
    %v214 = vand.u32 %v208, 2147483648
    %v215 = vsel %vm213, %v214, %v212
    %v216 = vmul.f32 %v23, %v23
    %v217 = vsel %vm24, %v216, 0.0
    %218 = vadd.xlane.f32.xlu0 %v217
    %v219 = vpop.xlane.xlu0 %218
    %v221 = vsel %vm24, %v216, 0
    %223 = vmatprep.subr.mxu0 0.0
    %224 = vmatpush1.xpose.msra.mxu0 0.0
    %225 = vmatprep.subr.mxu0 0.0
    %226 = vmatpush1.xpose.msra.mxu0 0.0
    %227 = vmatprep.subr.mxu0 0.0
    %228 = vmatpush1.xpose.msra.mxu0 0.0
    %229 = vmatprep.subr.mxu0 0.0
    %230 = vmatpush1.xpose.msra.mxu0 0.0
    %231 = vmatprep.subr.mxu0 0.0
    %232 = vmatpush1.xpose.msra.mxu0 0.0
    %233 = vmatprep.subr.mxu0 0.0
    %234 = vmatpush1.xpose.msra.mxu0 0.0
    %235 = vmatprep.subr.mxu0 0.0
    %236 = vmatpush1.xpose.msra.mxu0 0.0
    %237 = vmatprep.subr.mxu0 0.0
    %238 = vmatpush1.xpose.msra.mxu0 0.0
    %239 = vmatprep.subr.mxu0 0.0
    %240 = vmatpush1.xpose.msra.mxu0 0.0
    %241 = vmatprep.subr.mxu0 0.0
    %242 = vmatpush1.xpose.msra.mxu0 0.0
    %243 = vmatprep.subr.mxu0 0.0
    %244 = vmatpush1.xpose.msra.mxu0 0.0
    %245 = vmatprep.subr.mxu0 0.0
    %246 = vmatpush1.xpose.msra.mxu0 0.0
    %247 = vmatprep.subr.mxu0 0.0
    %248 = vmatpush1.xpose.msra.mxu0 0.0
    %249 = vmatprep.subr.mxu0 0.0
    %250 = vmatpush1.xpose.msra.mxu0 0.0
    %251 = vmatprep.subr.mxu0 0.0
    %252 = vmatpush1.xpose.msra.mxu0 0.0
    %253 = vmatprep.subr.mxu0 0.0
    %254 = vmatpush1.xpose.msra.mxu0 %v221
    %255 = vmatprep.subr.mxu0 0.0
    %256 = vmatpush2.xpose.msra.mxu0 0.0
    %257 = vmatprep.subr.mxu0 0.0
    %258 = vmatpush2.xpose.msra.mxu0 0.0
    %259 = vmatprep.subr.mxu0 0.0
    %260 = vmatpush2.xpose.msra.mxu0 0.0
    %261 = vmatprep.subr.mxu0 0.0
    %262 = vmatpush2.xpose.msra.mxu0 0.0
    %263 = vmatprep.subr.mxu0 0.0
    %264 = vmatpush2.xpose.msra.mxu0 0.0
    %265 = vmatprep.subr.mxu0 0.0
    %266 = vmatpush2.xpose.msra.mxu0 0.0
    %267 = vmatprep.subr.mxu0 0.0
    %268 = vmatpush2.xpose.msra.mxu0 0.0
    %269 = vmatprep.subr.mxu0 0.0
    %270 = vmatpush2.xpose.msra.mxu0 0.0
    %271 = vmatprep.subr.mxu0 0.0
    %272 = vmatpush2.xpose.msra.mxu0 0.0
    %273 = vmatprep.subr.mxu0 0.0
    %274 = vmatpush2.xpose.msra.mxu0 0.0
    %275 = vmatprep.subr.mxu0 0.0
    %276 = vmatpush2.xpose.msra.mxu0 0.0
    %277 = vmatprep.subr.mxu0 0.0
    %278 = vmatpush2.xpose.msra.mxu0 0.0
    %279 = vmatprep.subr.mxu0 0.0
    %280 = vmatpush2.xpose.msra.mxu0 0.0
    %281 = vmatprep.subr.mxu0 0.0
    %282 = vmatpush2.xpose.msra.mxu0 0.0
    %283 = vmatprep.subr.mxu0 0.0
    %284 = vmatpush2.xpose.msra.mxu0 0.0
    %285 = vmatprep.subr.mxu0 0.0
    %286 = vmatpush2.xpose.msra.mxu0 0.0
    %287 = vmatprep.mubr.f32.mxu0 0.0
    %288 = vmatmul.mubr.f32.gmra.mxu0 %v53
    %v289 = vpop.f32.mrf.mxu0
    %v290 = vadd.f32 0.0, %v289
    %v291 = vpop.f32.mrf.mxu0
    %292 = vdwg.mxu0
    %v294 = vsel %vm24, %v23, 0
    %296 = vmatprep.subr.mxu0 0.0
    %297 = vmatpush1.xpose.msra.mxu0 0.0
    %298 = vmatprep.subr.mxu0 0.0
    %299 = vmatpush1.xpose.msra.mxu0 0.0
    %300 = vmatprep.subr.mxu0 0.0
    %301 = vmatpush1.xpose.msra.mxu0 0.0
    %302 = vmatprep.subr.mxu0 0.0
    %303 = vmatpush1.xpose.msra.mxu0 0.0
    %304 = vmatprep.subr.mxu0 0.0
    %305 = vmatpush1.xpose.msra.mxu0 0.0
    %306 = vmatprep.subr.mxu0 0.0
    %307 = vmatpush1.xpose.msra.mxu0 0.0
    %308 = vmatprep.subr.mxu0 0.0
    %309 = vmatpush1.xpose.msra.mxu0 0.0
    %310 = vmatprep.subr.mxu0 0.0
    %311 = vmatpush1.xpose.msra.mxu0 0.0
    %312 = vmatprep.subr.mxu0 0.0
    %313 = vmatpush1.xpose.msra.mxu0 0.0
    %314 = vmatprep.subr.mxu0 0.0
    %315 = vmatpush1.xpose.msra.mxu0 0.0
    %316 = vmatprep.subr.mxu0 0.0
    %317 = vmatpush1.xpose.msra.mxu0 0.0
    %318 = vmatprep.subr.mxu0 0.0
    %319 = vmatpush1.xpose.msra.mxu0 0.0
    %320 = vmatprep.subr.mxu0 0.0
    %321 = vmatpush1.xpose.msra.mxu0 0.0
    %322 = vmatprep.subr.mxu0 0.0
    %323 = vmatpush1.xpose.msra.mxu0 0.0
    %324 = vmatprep.subr.mxu0 0.0
    %325 = vmatpush1.xpose.msra.mxu0 0.0
    %326 = vmatprep.subr.mxu0 0.0
    %327 = vmatpush1.xpose.msra.mxu0 %v294
    %328 = vmatprep.subr.mxu0 0.0
    %329 = vmatpush2.xpose.msra.mxu0 0.0
    %330 = vmatprep.subr.mxu0 0.0
    %331 = vmatpush2.xpose.msra.mxu0 0.0
    %332 = vmatprep.subr.mxu0 0.0
    %333 = vmatpush2.xpose.msra.mxu0 0.0
    %334 = vmatprep.subr.mxu0 0.0
    %335 = vmatpush2.xpose.msra.mxu0 0.0
    %336 = vmatprep.subr.mxu0 0.0
    %337 = vmatpush2.xpose.msra.mxu0 0.0
    %338 = vmatprep.subr.mxu0 0.0
    %339 = vmatpush2.xpose.msra.mxu0 0.0
    %340 = vmatprep.subr.mxu0 0.0
    %341 = vmatpush2.xpose.msra.mxu0 0.0
    %342 = vmatprep.subr.mxu0 0.0
    %343 = vmatpush2.xpose.msra.mxu0 0.0
    %344 = vmatprep.subr.mxu0 0.0
    %345 = vmatpush2.xpose.msra.mxu0 0.0
    %346 = vmatprep.subr.mxu0 0.0
    %347 = vmatpush2.xpose.msra.mxu0 0.0
    %348 = vmatprep.subr.mxu0 0.0
    %349 = vmatpush2.xpose.msra.mxu0 0.0
    %350 = vmatprep.subr.mxu0 0.0
    %351 = vmatpush2.xpose.msra.mxu0 0.0
    %352 = vmatprep.subr.mxu0 0.0
    %353 = vmatpush2.xpose.msra.mxu0 0.0
    %354 = vmatprep.subr.mxu0 0.0
    %355 = vmatpush2.xpose.msra.mxu0 0.0
    %356 = vmatprep.subr.mxu0 0.0
    %357 = vmatpush2.xpose.msra.mxu0 0.0
    %358 = vmatprep.subr.mxu0 0.0
    %359 = vmatpush2.xpose.msra.mxu0 0.0
    %360 = vmatprep.mubr.f32.mxu0 0.0
    %361 = vmatmul.mubr.f32.gmra.mxu0 %v294
    %v362 = vpop.f32.mrf.mxu0
    %v363 = vadd.f32 0.0, %v362
    %v364 = vpop.f32.mrf.mxu0
    %365 = vdwg.mxu0
    %v366 = vlaneseq
    %v367 = vshrl.u32 %v366, 7
    %v368 = vsub.s32 0, %v367
    %v369 = vrot.slane %v290, %v368
    %v370 = vadd.f32 %v219, %v369
    %v371 = vmul.f32 %v363, 2.0
    %v372 = vsub.f32 %v370, %v371
    %v373 = vmax.f32 %v372, 0.0
    %v374 = vrsqrt.pop %v373
    %v375 = vmul.f32 %v373, %v374
    %vm376 = vcmp.eq.f32.partialorder %v373, inf
    %v377 = vsel %vm376, %v373, %v375
    %vm378 = vcmp.eq.f32.partialorder %v373, 0.0
    %v379 = vand.u32 %v373, 2147483648
    %v380 = vsel %vm378, %v379, %v377
    %vm381 = vcmask 64512
    %382 = vst.msk [vmem:[%s3] sm:$0xff] %vm381, %v380
    %v383 = vlaneseq
    %v384 = vand.u32 %v383, 127
    %vm385 = vcmp.ge.s32.totalorder %v384, 2
    %v386 = vsel %vm385, 1, 0
    %vm387 = vcmp.ge.s32.totalorder %v384, 5
    %v388 = vsel %vm387, 1, 0
    %v389 = vadd.s32 %v386, %v388
    %vm390 = vcmp.ge.s32.totalorder %v384, 9
    %v391 = vsel %vm390, 1, 0
    %v392 = vadd.s32 %v389, %v391
    %vm393 = vcmp.ge.s32.totalorder %v384, 14
    %v394 = vsel %vm393, 1, 0
    %v395 = vadd.s32 %v392, %v394
    %vm396 = vcmp.ge.s32.totalorder %v384, 20
    %v397 = vsel %vm396, 1, 0
    %v398 = vadd.s32 %v395, %v397
    %vm399 = vcmp.eq.s32.totalorder %v398, 1
    %v400 = vsel %vm399, 2, 0
    %vm401 = vcmp.eq.s32.totalorder %v398, 2
    %v402 = vsel %vm401, 5, 0
    %v403 = vadd.s32 %v400, %v402
    %vm404 = vcmp.eq.s32.totalorder %v398, 3
    %v405 = vsel %vm404, 9, 0
    %v406 = vadd.s32 %v403, %v405
    %vm407 = vcmp.eq.s32.totalorder %v398, 4
    %v408 = vsel %vm407, 14, 0
    %v409 = vadd.s32 %v406, %v408
    %vm410 = vcmp.eq.s32.totalorder %v398, 5
    %v411 = vsel %vm410, 20, 0
    %v412 = vadd.s32 %v409, %v411
    %v413 = vsub.s32 %v384, %v412
    %v414 = vcvt.s32.f32 %v413
    %vm415 = vcmp.eq.s32.totalorder %v398, 0
    %v416 = vsel %vm415, 1, 0
    %v417 = vcvt.s32.f32 %v416
    %v418 = vsel %vm399, 1, 0
    %v419 = vcvt.s32.f32 %v418
    %v420 = vsel %vm401, 1, 0
    %v421 = vcvt.s32.f32 %v420
    %v422 = vsel %vm404, 1, 0
    %v423 = vcvt.s32.f32 %v422
    %v424 = vsel %vm407, 1, 0
    %v425 = vcvt.s32.f32 %v424
    %v426 = vsel %vm410, 1, 0
    %v427 = vcvt.s32.f32 %v426
    %v428 = vlaneseq
    %v429 = vshrl.u32 %v428, 7
    %vm430 = vcmp.eq.s32.totalorder %v429, %v398
    %v431 = vsel %vm430, 1, 0
    %v432 = vcvt.s32.f32 %v431
    %v433 = vcvt.s32.f32 %v384
    %v434 = vcvt.s32.f32 %v429
    %vm435 = vcmp.eq.s32.totalorder %v429, 0
    %v436 = vsel %vm435, 1, 0
    %v437 = vcvt.s32.f32 %v436
    %vm438 = vcmp.eq.s32.totalorder %v384, 0
    %v439 = vsel %vm438, 1, 0
    %v440 = vcvt.s32.f32 %v439
    %v441 = vmul.f32 %v437, %v440
    %vm442 = vcmp.gt.f32.partialorder %v440, 0.0
    %v443 = vsel %vm442, 1, 0
    %vm444 = vcmp.eq.s32.totalorder %v443, 1
    %v445 = vsel %vm444, %v208, 1e+30
    %v446 = vsel %vm381, %v445, inf
    %447 = vmin.xlane.f32.xlu0 %v446
    %v448 = vpop.xlane.xlu0 %447
    %v449 = vrot.slane %v448, 4
    %v450 = vmax.f32 %v448, %v449
    %v451 = vrot.slane %v450, 2
    %v452 = vmax.f32 %v450, %v451
    %v453 = vrot.slane %v452, 1
    %v454 = vmax.f32 %v452, %v453
    %vm455 = vcmp.ge.f32.partialorder %v448, %v454
    %v456 = vsel %vm455, %v434, 8.0
    %v457 = vrot.slane %v456, 4
    %v458 = vmin.f32 %v456, %v457
    %v459 = vrot.slane %v458, 2
    %v460 = vmin.f32 %v458, %v459
    %v461 = vrot.slane %v460, 1
    %v462 = vmin.f32 %v460, %v461
    %vm463 = vcmp.eq.f32.partialorder %v433, %v462
    %v464 = vsel %vm463, 1, 0
    %v465 = vcvt.s32.f32 %v464
    %vm466 = vcmp.eq.s32.totalorder %v429, 1
    %v467 = vsel %vm466, 1, 0
    %v468 = vcvt.s32.f32 %v467
    %v469 = vmul.f32 %v468, %v465
    %v470 = vadd.f32 %v441, %v469
    %v471 = vmax.f32 %v440, %v465
    %vm472 = vcmp.gt.f32.partialorder %v471, 0.0
    %v473 = vsel %vm472, 1, 0
    %vm474 = vcmp.eq.s32.totalorder %v473, 1
    %v475 = vsel %vm474, %v208, 1e+30
    %v476 = vsel %vm381, %v475, inf
    %477 = vmin.xlane.f32.xlu0 %v476
    %v478 = vpop.xlane.xlu0 %477
    %v479 = vrot.slane %v478, 4
    %v480 = vmax.f32 %v478, %v479
    %v481 = vrot.slane %v480, 2
    %v482 = vmax.f32 %v480, %v481
    %v483 = vrot.slane %v482, 1
    %v484 = vmax.f32 %v482, %v483
    %vm485 = vcmp.ge.f32.partialorder %v478, %v484
    %v486 = vsel %vm485, %v434, 8.0
    %v487 = vrot.slane %v486, 4
    %v488 = vmin.f32 %v486, %v487
    %v489 = vrot.slane %v488, 2
    %v490 = vmin.f32 %v488, %v489
    %v491 = vrot.slane %v490, 1
    %v492 = vmin.f32 %v490, %v491
    %vm493 = vcmp.eq.f32.partialorder %v433, %v492
    %v494 = vsel %vm493, 1, 0
    %v495 = vcvt.s32.f32 %v494
    %vm496 = vcmp.eq.s32.totalorder %v429, 2
    %v497 = vsel %vm496, 1, 0
    %v498 = vcvt.s32.f32 %v497
    %v499 = vmul.f32 %v498, %v495
    %v500 = vadd.f32 %v470, %v499
    %v501 = vmax.f32 %v471, %v495
    %vm502 = vcmp.gt.f32.partialorder %v501, 0.0
    %v503 = vsel %vm502, 1, 0
    %vm504 = vcmp.eq.s32.totalorder %v503, 1
    %v505 = vsel %vm504, %v208, 1e+30
    %v506 = vsel %vm381, %v505, inf
    %507 = vmin.xlane.f32.xlu0 %v506
    %v508 = vpop.xlane.xlu0 %507
    %v509 = vrot.slane %v508, 4
    %v510 = vmax.f32 %v508, %v509
    %v511 = vrot.slane %v510, 2
    %v512 = vmax.f32 %v510, %v511
    %v513 = vrot.slane %v512, 1
    %v514 = vmax.f32 %v512, %v513
    %vm515 = vcmp.ge.f32.partialorder %v508, %v514
    %v516 = vsel %vm515, %v434, 8.0
    %v517 = vrot.slane %v516, 4
    %v518 = vmin.f32 %v516, %v517
    %v519 = vrot.slane %v518, 2
    %v520 = vmin.f32 %v518, %v519
    %v521 = vrot.slane %v520, 1
    %v522 = vmin.f32 %v520, %v521
    %vm523 = vcmp.eq.f32.partialorder %v433, %v522
    %v524 = vsel %vm523, 1, 0
    %v525 = vcvt.s32.f32 %v524
    %vm526 = vcmp.eq.s32.totalorder %v429, 3
    %v527 = vsel %vm526, 1, 0
    %v528 = vcvt.s32.f32 %v527
    %v529 = vmul.f32 %v528, %v525
    %v530 = vadd.f32 %v500, %v529
    %v531 = vmax.f32 %v501, %v525
    %vm532 = vcmp.gt.f32.partialorder %v531, 0.0
    %v533 = vsel %vm532, 1, 0
    %vm534 = vcmp.eq.s32.totalorder %v533, 1
    %v535 = vsel %vm534, %v208, 1e+30
    %v536 = vsel %vm381, %v535, inf
    %537 = vmin.xlane.f32.xlu0 %v536
    %v538 = vpop.xlane.xlu0 %537
    %v539 = vrot.slane %v538, 4
    %v540 = vmax.f32 %v538, %v539
    %v541 = vrot.slane %v540, 2
    %v542 = vmax.f32 %v540, %v541
    %v543 = vrot.slane %v542, 1
    %v544 = vmax.f32 %v542, %v543
    %vm545 = vcmp.ge.f32.partialorder %v538, %v544
    %v546 = vsel %vm545, %v434, 8.0
    %v547 = vrot.slane %v546, 4
    %v548 = vmin.f32 %v546, %v547
    %v549 = vrot.slane %v548, 2
    %v550 = vmin.f32 %v548, %v549
    %v551 = vrot.slane %v550, 1
    %v552 = vmin.f32 %v550, %v551
    %vm553 = vcmp.eq.f32.partialorder %v433, %v552
    %v554 = vsel %vm553, 1, 0
    %v555 = vcvt.s32.f32 %v554
    %vm556 = vcmp.eq.s32.totalorder %v429, 4
    %v557 = vsel %vm556, 1, 0
    %v558 = vcvt.s32.f32 %v557
    %v559 = vmul.f32 %v558, %v555
    %v560 = vadd.f32 %v530, %v559
    %v561 = vmax.f32 %v531, %v555
    %vm562 = vcmp.gt.f32.partialorder %v561, 0.0
    %v563 = vsel %vm562, 1, 0
    %vm564 = vcmp.eq.s32.totalorder %v563, 1
    %v565 = vsel %vm564, %v208, 1e+30
    %v566 = vsel %vm381, %v565, inf
    %567 = vmin.xlane.f32.xlu0 %v566
    %v568 = vpop.xlane.xlu0 %567
    %v569 = vrot.slane %v568, 4
    %v570 = vmax.f32 %v568, %v569
    %v571 = vrot.slane %v570, 2
    %v572 = vmax.f32 %v570, %v571
    %v573 = vrot.slane %v572, 1
    %v574 = vmax.f32 %v572, %v573
    %vm575 = vcmp.ge.f32.partialorder %v568, %v574
    %v576 = vsel %vm575, %v434, 8.0
    %v577 = vrot.slane %v576, 4
    %v578 = vmin.f32 %v576, %v577
    %v579 = vrot.slane %v578, 2
    %v580 = vmin.f32 %v578, %v579
    %v581 = vrot.slane %v580, 1
    %v582 = vmin.f32 %v580, %v581
    %vm583 = vcmp.eq.f32.partialorder %v433, %v582
    %v584 = vsel %vm583, 1, 0
    %v585 = vcvt.s32.f32 %v584
    %vm586 = vcmp.eq.s32.totalorder %v429, 5
    %v587 = vsel %vm586, 1, 0
    %v588 = vcvt.s32.f32 %v587
    %v589 = vmul.f32 %v588, %v585
    %v590 = vadd.f32 %v560, %v589
    %v591 = vmax.f32 %v561, %v585
    %vm592 = vcmp.gt.f32.partialorder %v591, 0.0
    %v593 = vsel %vm592, 1, 0
    %vm594 = vcmp.eq.s32.totalorder %v593, 1
    %v595 = vsel %vm594, %v208, 1e+30
    %v596 = vsel %vm381, %v595, inf
    %597 = vmin.xlane.f32.xlu0 %v596
    %v598 = vpop.xlane.xlu0 %597
    %v599 = vrot.slane %v598, 4
    %v600 = vmax.f32 %v598, %v599
    %v601 = vrot.slane %v600, 2
    %v602 = vmax.f32 %v600, %v601
    %v603 = vrot.slane %v602, 1
    %v604 = vmax.f32 %v602, %v603
    %vm605 = vcmp.ge.f32.partialorder %v598, %v604
    %v606 = vsel %vm605, %v434, 8.0
    %v607 = vrot.slane %v606, 4
    %v608 = vmin.f32 %v606, %v607
    %v609 = vrot.slane %v608, 2
    %v610 = vmin.f32 %v608, %v609
    %v611 = vrot.slane %v610, 1
    %v612 = vmin.f32 %v610, %v611
    %vm613 = vcmp.eq.f32.partialorder %v433, %v612
    %v614 = vsel %vm613, 1, 0
    %v615 = vcvt.s32.f32 %v614
    %vm616 = vcmp.eq.s32.totalorder %v429, 6
    %v617 = vsel %vm616, 1, 0
    %v618 = vcvt.s32.f32 %v617
    %v619 = vmul.f32 %v618, %v615
    %v620 = vadd.f32 %v590, %v619
    %621 = vxpose.xlu0.b32.start [1/16] %v47, 128
    %622 = vxpose.xlu0.b32.cont [2/16] 0.0, 128
    %623 = vxpose.xlu0.b32.cont [3/16] 0.0, 128
    %624 = vxpose.xlu0.b32.cont [4/16] 0.0, 128
    %625 = vxpose.xlu0.b32.cont [5/16] 0.0, 128
    %626 = vxpose.xlu0.b32.cont [6/16] 0.0, 128
    %627 = vxpose.xlu0.b32.cont [7/16] 0.0, 128
    %628 = vxpose.xlu0.b32.cont [8/16] 0.0, 128
    %629 = vxpose.xlu0.b32.cont [9/16] 0.0, 128
    %630 = vxpose.xlu0.b32.cont [10/16] 0.0, 128
    %631 = vxpose.xlu0.b32.cont [11/16] 0.0, 128
    %632 = vxpose.xlu0.b32.cont [12/16] 0.0, 128
    %633 = vxpose.xlu0.b32.cont [13/16] 0.0, 128
    %634 = vxpose.xlu0.b32.cont [14/16] 0.0, 128
    %635 = vxpose.xlu0.b32.cont [15/16] 0.0, 128
    %636 = vxpose.xlu0.b32.end [16/16] 0.0, 128
    %v637 = vpop.trf.xlu0
    %v638 = vpop.trf.xlu0
    %v639 = vpop.trf.xlu0
    %v640 = vpop.trf.xlu0
    %v641 = vpop.trf.xlu0
    %v642 = vpop.trf.xlu0
    %v643 = vpop.trf.xlu0
    %v644 = vpop.trf.xlu0
    %v645 = vpop.trf.xlu0
    %v646 = vpop.trf.xlu0
    %v647 = vpop.trf.xlu0
    %v648 = vpop.trf.xlu0
    %v649 = vpop.trf.xlu0
    %v650 = vpop.trf.xlu0
    %v651 = vpop.trf.xlu0
    %v652 = vpop.trf.xlu0
    %v654 = vsel %vm381, %v637, 0
    %v657 = vsel %vm381, %v638, 0
    %v660 = vsel %vm381, %v639, 0
    %v663 = vsel %vm381, %v640, 0
    %v666 = vsel %vm381, %v620, 0
    %668 = vmatprep.subr.mxu0 0.0
    %669 = vmatpush1.xpose.msra.mxu0 0.0
    %670 = vmatprep.subr.mxu0 0.0
    %671 = vmatpush1.xpose.msra.mxu0 0.0
    %672 = vmatprep.subr.mxu0 0.0
    %673 = vmatpush1.xpose.msra.mxu0 0.0
    %674 = vmatprep.subr.mxu0 0.0
    %675 = vmatpush1.xpose.msra.mxu0 0.0
    %676 = vmatprep.subr.mxu0 0.0
    %677 = vmatpush1.xpose.msra.mxu0 0.0
    %678 = vmatprep.subr.mxu0 0.0
    %679 = vmatpush1.xpose.msra.mxu0 0.0
    %680 = vmatprep.subr.mxu0 0.0
    %681 = vmatpush1.xpose.msra.mxu0 0.0
    %682 = vmatprep.subr.mxu0 0.0
    %683 = vmatpush1.xpose.msra.mxu0 0.0
    %684 = vmatprep.subr.mxu0 0.0
    %685 = vmatpush1.xpose.msra.mxu0 0.0
    %686 = vmatprep.subr.mxu0 0.0
    %687 = vmatpush1.xpose.msra.mxu0 0.0
    %688 = vmatprep.subr.mxu0 0.0
    %689 = vmatpush1.xpose.msra.mxu0 0.0
    %690 = vmatprep.subr.mxu0 0.0
    %691 = vmatpush1.xpose.msra.mxu0 0.0
    %692 = vmatprep.subr.mxu0 0.0
    %693 = vmatpush1.xpose.msra.mxu0 0.0
    %694 = vmatprep.subr.mxu0 0.0
    %695 = vmatpush1.xpose.msra.mxu0 0.0
    %696 = vmatprep.subr.mxu0 0.0
    %697 = vmatpush1.xpose.msra.mxu0 0.0
    %698 = vmatprep.subr.mxu0 0.0
    %699 = vmatpush1.xpose.msra.mxu0 %v666
    %700 = vmatprep.subr.mxu0 0.0
    %701 = vmatpush2.xpose.msra.mxu0 0.0
    %702 = vmatprep.subr.mxu0 0.0
    %703 = vmatpush2.xpose.msra.mxu0 0.0
    %704 = vmatprep.subr.mxu0 0.0
    %705 = vmatpush2.xpose.msra.mxu0 0.0
    %706 = vmatprep.subr.mxu0 0.0
    %707 = vmatpush2.xpose.msra.mxu0 0.0
    %708 = vmatprep.subr.mxu0 0.0
    %709 = vmatpush2.xpose.msra.mxu0 0.0
    %710 = vmatprep.subr.mxu0 0.0
    %711 = vmatpush2.xpose.msra.mxu0 0.0
    %712 = vmatprep.subr.mxu0 0.0
    %713 = vmatpush2.xpose.msra.mxu0 0.0
    %714 = vmatprep.subr.mxu0 0.0
    %715 = vmatpush2.xpose.msra.mxu0 0.0
    %716 = vmatprep.subr.mxu0 0.0
    %717 = vmatpush2.xpose.msra.mxu0 0.0
    %718 = vmatprep.subr.mxu0 0.0
    %719 = vmatpush2.xpose.msra.mxu0 0.0
    %720 = vmatprep.subr.mxu0 0.0
    %721 = vmatpush2.xpose.msra.mxu0 0.0
    %722 = vmatprep.subr.mxu0 0.0
    %723 = vmatpush2.xpose.msra.mxu0 0.0
    %724 = vmatprep.subr.mxu0 0.0
    %725 = vmatpush2.xpose.msra.mxu0 0.0
    %726 = vmatprep.subr.mxu0 0.0
    %727 = vmatpush2.xpose.msra.mxu0 0.0
    %728 = vmatprep.subr.mxu0 0.0
    %729 = vmatpush2.xpose.msra.mxu0 0.0
    %730 = vmatprep.subr.mxu0 0.0
    %731 = vmatpush2.xpose.msra.mxu0 0.0
    %732 = vmatprep.mubr.f32.mxu0 0.0
    %733 = vmatmul.mubr.f32.gmra.mxu0 %v654
    %v734 = vpop.f32.mrf.mxu0
    %v735 = vadd.f32 0.0, %v734
    %v736 = vpop.f32.mrf.mxu0
    %737 = vmatprep.mubr.f32.mxu0 0.0
    %738 = vmatmul.mubr.f32.gmra.mxu0 %v657
    %v739 = vpop.f32.mrf.mxu0
    %v740 = vadd.f32 0.0, %v739
    %v741 = vpop.f32.mrf.mxu0
    %742 = vmatprep.mubr.f32.mxu0 0.0
    %743 = vmatmul.mubr.f32.gmra.mxu0 %v660
    %v744 = vpop.f32.mrf.mxu0
    %v745 = vadd.f32 0.0, %v744
    %v746 = vpop.f32.mrf.mxu0
    %747 = vmatprep.mubr.f32.mxu0 0.0
    %748 = vmatmul.mubr.f32.gmra.mxu0 %v663
    %v749 = vpop.f32.mrf.mxu0
    %v750 = vadd.f32 0.0, %v749
    %v751 = vpop.f32.mrf.mxu0
    %752 = vdwg.mxu0
    %vm753 = vcmp.eq.f32.partialorder %v434, %v414
    %v754 = vsel %vm753, 1, 0
    %v755 = vcvt.s32.f32 %v754
    %vm756 = vcmask 56320
    %v758 = vsel %vm756, %v735, 0
    %v761 = vsel %vm756, %v740, 0
    %v764 = vsel %vm756, %v745, 0
    %v767 = vsel %vm756, %v750, 0
    %vm769 = vcmask 1046528
    %v771 = vsel %vm769, %v755, 0
    %773 = vmatprep.subr.mxu0 0.0
    %774 = vmatpush1.msra.mxu0 0.0
    %775 = vmatprep.subr.mxu0 0.0
    %776 = vmatpush1.msra.mxu0 0.0
    %777 = vmatprep.subr.mxu0 0.0
    %778 = vmatpush1.msra.mxu0 0.0
    %779 = vmatprep.subr.mxu0 0.0
    %780 = vmatpush1.msra.mxu0 0.0
    %781 = vmatprep.subr.mxu0 0.0
    %782 = vmatpush1.msra.mxu0 0.0
    %783 = vmatprep.subr.mxu0 0.0
    %784 = vmatpush1.msra.mxu0 0.0
    %785 = vmatprep.subr.mxu0 0.0
    %786 = vmatpush1.msra.mxu0 0.0
    %787 = vmatprep.subr.mxu0 0.0
    %788 = vmatpush1.msra.mxu0 0.0
    %789 = vmatprep.subr.mxu0 0.0
    %790 = vmatpush1.msra.mxu0 0.0
    %791 = vmatprep.subr.mxu0 0.0
    %792 = vmatpush1.msra.mxu0 0.0
    %793 = vmatprep.subr.mxu0 0.0
    %794 = vmatpush1.msra.mxu0 0.0
    %795 = vmatprep.subr.mxu0 0.0
    %796 = vmatpush1.msra.mxu0 0.0
    %797 = vmatprep.subr.mxu0 0.0
    %798 = vmatpush1.msra.mxu0 0.0
    %799 = vmatprep.subr.mxu0 0.0
    %800 = vmatpush1.msra.mxu0 0.0
    %801 = vmatprep.subr.mxu0 0.0
    %802 = vmatpush1.msra.mxu0 0.0
    %803 = vmatprep.subr.mxu0 0.0
    %804 = vmatpush1.msra.mxu0 %v771
    %805 = vmatprep.subr.mxu0 0.0
    %806 = vmatpush2.msra.mxu0 0.0
    %807 = vmatprep.subr.mxu0 0.0
    %808 = vmatpush2.msra.mxu0 0.0
    %809 = vmatprep.subr.mxu0 0.0
    %810 = vmatpush2.msra.mxu0 0.0
    %811 = vmatprep.subr.mxu0 0.0
    %812 = vmatpush2.msra.mxu0 0.0
    %813 = vmatprep.subr.mxu0 0.0
    %814 = vmatpush2.msra.mxu0 0.0
    %815 = vmatprep.subr.mxu0 0.0
    %816 = vmatpush2.msra.mxu0 0.0
    %817 = vmatprep.subr.mxu0 0.0
    %818 = vmatpush2.msra.mxu0 0.0
    %819 = vmatprep.subr.mxu0 0.0
    %820 = vmatpush2.msra.mxu0 0.0
    %821 = vmatprep.subr.mxu0 0.0
    %822 = vmatpush2.msra.mxu0 0.0
    %823 = vmatprep.subr.mxu0 0.0
    %824 = vmatpush2.msra.mxu0 0.0
    %825 = vmatprep.subr.mxu0 0.0
    %826 = vmatpush2.msra.mxu0 0.0
    %827 = vmatprep.subr.mxu0 0.0
    %828 = vmatpush2.msra.mxu0 0.0
    %829 = vmatprep.subr.mxu0 0.0
    %830 = vmatpush2.msra.mxu0 0.0
    %831 = vmatprep.subr.mxu0 0.0
    %832 = vmatpush2.msra.mxu0 0.0
    %833 = vmatprep.subr.mxu0 0.0
    %834 = vmatpush2.msra.mxu0 0.0
    %835 = vmatprep.subr.mxu0 0.0
    %836 = vmatpush2.msra.mxu0 0.0
    %837 = vmatprep.mubr.f32.mxu0 0.0
    %838 = vmatmul.mubr.f32.gmra.mxu0 %v758
    %v839 = vpop.f32.mrf.mxu0
    %v840 = vadd.f32 0.0, %v839
    %v841 = vpop.f32.mrf.mxu0
    %842 = vmatprep.mubr.f32.mxu0 0.0
    %843 = vmatmul.mubr.f32.gmra.mxu0 %v761
    %v844 = vpop.f32.mrf.mxu0
    %v845 = vadd.f32 0.0, %v844
    %v846 = vpop.f32.mrf.mxu0
    %847 = vmatprep.mubr.f32.mxu0 0.0
    %848 = vmatmul.mubr.f32.gmra.mxu0 %v764
    %v849 = vpop.f32.mrf.mxu0
    %v850 = vadd.f32 0.0, %v849
    %v851 = vpop.f32.mrf.mxu0
    %852 = vmatprep.mubr.f32.mxu0 0.0
    %853 = vmatmul.mubr.f32.gmra.mxu0 %v767
    %v854 = vpop.f32.mrf.mxu0
    %v855 = vadd.f32 0.0, %v854
    %v856 = vpop.f32.mrf.mxu0
    %857 = vdwg.mxu0
    // While loop
    $region10: #{_device_forward.1} parent=1 // loop_pre_header
      _
    $region11: #{_device_forward.1} parent=1 // loop_header
      %s859 = sphi 0, %s1219
      %v860 = vphi %v840, %v1177
      %v861 = vphi %v845, %v1178
      %v862 = vphi %v850, %v1179
      %v863 = vphi %v855, %v1180
      %v864 = vphi 0.0, %v1218
      %p865 = scmp.lt.s32.totalorder %s859, 500
      %vm866 = vcmask 220160
      %v867 = vsel %vm866, %v864, inf
      %868 = vmin.xlane.f32.xlu0 %v867
      %v869 = vpop.xlane.xlu0 %868
      %s870 = vtos %v869
      %p871 = scmp.lt.f32.partialorder %s870, 0.5
      %p872 = pnand %p865, %p871
      %p873 = pneg %p872
    $region12: #{_device_forward.1} parent=1 // loop_header_branch
      %875 = sbr.rel (%p872) target = $region16
    $region13: #{_device_forward.1} parent=1 // loop_body
      %v876 = vmul.f32 %v860, %v860
      %v877 = vmul.f32 %v861, %v861
      %v878 = vmul.f32 %v862, %v862
      %v879 = vmul.f32 %v863, %v863
      %vm880 = vcmask 220160
      %v881 = vsel %vm880, %v876, 0.0
      %v882 = vsel %vm880, %v877, 0.0
      %v883 = vadd.f32 %v881, %v882
      %v884 = vsel %vm880, %v878, 0.0
      %v885 = vadd.f32 %v883, %v884
      %v886 = vsel %vm880, %v879, 0.0
      %v887 = vadd.f32 %v885, %v886
      %v888 = vrot.slane %v887, 4
      %v889 = vadd.f32 %v887, %v888
      %v890 = vrot.slane %v889, 2
      %v891 = vadd.f32 %v889, %v890
      %v892 = vrot.slane %v891, 1
      %v893 = vadd.f32 %v891, %v892
      %894 = vmatprep.subr.mxu0 0.0
      %895 = vmatpush1.msra.mxu0 0.0
      %896 = vmatprep.subr.mxu0 0.0
      %897 = vmatpush1.msra.mxu0 0.0
      %898 = vmatprep.subr.mxu0 0.0
      %899 = vmatpush1.msra.mxu0 0.0
      %900 = vmatprep.subr.mxu0 0.0
      %901 = vmatpush1.msra.mxu0 0.0
      %902 = vmatprep.subr.mxu0 0.0
      %903 = vmatpush1.msra.mxu0 0.0
      %904 = vmatprep.subr.mxu0 0.0
      %905 = vmatpush1.msra.mxu0 0.0
      %906 = vmatprep.subr.mxu0 0.0
      %907 = vmatpush1.msra.mxu0 0.0
      %908 = vmatprep.subr.mxu0 0.0
      %909 = vmatpush1.msra.mxu0 0.0
      %910 = vmatprep.subr.mxu0 0.0
      %911 = vmatpush1.msra.mxu0 0.0
      %912 = vmatprep.subr.mxu0 0.0
      %913 = vmatpush1.msra.mxu0 0.0
      %914 = vmatprep.subr.mxu0 0.0
      %915 = vmatpush1.msra.mxu0 0.0
      %916 = vmatprep.subr.mxu0 0.0
      %917 = vmatpush1.msra.mxu0 0.0
      %918 = vmatprep.subr.mxu0 0.0
      %919 = vmatpush1.msra.mxu0 %v863
      %920 = vmatprep.subr.mxu0 0.0
      %921 = vmatpush1.msra.mxu0 %v862
      %922 = vmatprep.subr.mxu0 0.0
      %923 = vmatpush1.msra.mxu0 %v861
      %924 = vmatprep.subr.mxu0 0.0
      %925 = vmatpush1.msra.mxu0 %v860
      %926 = vmatprep.subr.mxu0 0.0
      %927 = vmatpush2.msra.mxu0 0.0
      %928 = vmatprep.subr.mxu0 0.0
      %929 = vmatpush2.msra.mxu0 0.0
      %930 = vmatprep.subr.mxu0 0.0
      %931 = vmatpush2.msra.mxu0 0.0
      %932 = vmatprep.subr.mxu0 0.0
      %933 = vmatpush2.msra.mxu0 0.0
      %934 = vmatprep.subr.mxu0 0.0
      %935 = vmatpush2.msra.mxu0 0.0
      %936 = vmatprep.subr.mxu0 0.0
      %937 = vmatpush2.msra.mxu0 0.0
      %938 = vmatprep.subr.mxu0 0.0
      %939 = vmatpush2.msra.mxu0 0.0
      %940 = vmatprep.subr.mxu0 0.0
      %941 = vmatpush2.msra.mxu0 0.0
      %942 = vmatprep.subr.mxu0 0.0
      %943 = vmatpush2.msra.mxu0 0.0
      %944 = vmatprep.subr.mxu0 0.0
      %945 = vmatpush2.msra.mxu0 0.0
      %946 = vmatprep.subr.mxu0 0.0
      %947 = vmatpush2.msra.mxu0 0.0
      %948 = vmatprep.subr.mxu0 0.0
      %949 = vmatpush2.msra.mxu0 0.0
      %950 = vmatprep.subr.mxu0 0.0
      %951 = vmatpush2.msra.mxu0 0.0
      %952 = vmatprep.subr.mxu0 0.0
      %953 = vmatpush2.msra.mxu0 0.0
      %954 = vmatprep.subr.mxu0 0.0
      %955 = vmatpush2.msra.mxu0 0.0
      %956 = vmatprep.subr.mxu0 0.0
      %957 = vmatpush2.msra.mxu0 0.0
      %958 = vmatprep.mubr.f32.mxu0 0.0
      %959 = vmatmul.mubr.f32.gmra.mxu0 %v129
      %v960 = vpop.f32.mrf.mxu0
      %v961 = vadd.f32 0.0, %v960
      %v962 = vpop.f32.mrf.mxu0
      %963 = vdwg.mxu0
      %v964 = vmul.f32 %v961, 2.0
      %v965 = vsub.f32 %v893, %v964
      %vm966 = vcmp.gt.f32.partialorder %v417, 0.0
      %v967 = vsel %vm966, 1, 0
      %vm968 = vcmp.eq.s32.totalorder %v967, 1
      %v969 = vsel %vm968, %v965, 1e+30
      %v970 = vsel %vm880, %v969, inf
      %971 = vmin.xlane.f32.xlu0 %v970
      %v972 = vpop.xlane.xlu0 %971
      %vm973 = vcmp.le.f32.partialorder %v969, %v972
      %v974 = vsel %vm973, %v414, 27.0
      %v975 = vsel %vm880, %v974, inf
      %976 = vmin.xlane.f32.xlu0 %v975
      %v977 = vpop.xlane.xlu0 %976
      %vm978 = vcmp.eq.f32.partialorder %v414, %v977
      %v979 = vsel %vm978, 1, 0
      %v980 = vcvt.s32.f32 %v979
      %v981 = vmul.f32 %v417, %v980
      %v982 = vadd.f32 %v981, 0.0
      %vm983 = vcmp.gt.f32.partialorder %v419, 0.0
      %v984 = vsel %vm983, 1, 0
      %vm985 = vcmp.eq.s32.totalorder %v984, 1
      %v986 = vsel %vm985, %v965, 1e+30
      %v987 = vsel %vm880, %v986, inf
      %988 = vmin.xlane.f32.xlu0 %v987
      %v989 = vpop.xlane.xlu0 %988
      %vm990 = vcmp.le.f32.partialorder %v986, %v989
      %v991 = vsel %vm990, %v414, 27.0
      %v992 = vsel %vm880, %v991, inf
      %993 = vmin.xlane.f32.xlu0 %v992
      %v994 = vpop.xlane.xlu0 %993
      %vm995 = vcmp.eq.f32.partialorder %v414, %v994
      %v996 = vsel %vm995, 1, 0
      %v997 = vcvt.s32.f32 %v996
      %v998 = vmul.f32 %v419, %v997
      %v999 = vadd.f32 %v982, %v998
      %vm1000 = vcmp.gt.f32.partialorder %v421, 0.0
      %v1001 = vsel %vm1000, 1, 0
      %vm1002 = vcmp.eq.s32.totalorder %v1001, 1
      %v1003 = vsel %vm1002, %v965, 1e+30
      %v1004 = vsel %vm880, %v1003, inf
      %1005 = vmin.xlane.f32.xlu0 %v1004
      %v1006 = vpop.xlane.xlu0 %1005
      %vm1007 = vcmp.le.f32.partialorder %v1003, %v1006
      %v1008 = vsel %vm1007, %v414, 27.0
      %v1009 = vsel %vm880, %v1008, inf
      %1010 = vmin.xlane.f32.xlu0 %v1009
      %v1011 = vpop.xlane.xlu0 %1010
      %vm1012 = vcmp.eq.f32.partialorder %v414, %v1011
      %v1013 = vsel %vm1012, 1, 0
      %v1014 = vcvt.s32.f32 %v1013
      %v1015 = vmul.f32 %v421, %v1014
      %v1016 = vadd.f32 %v999, %v1015
      %vm1017 = vcmp.gt.f32.partialorder %v423, 0.0
      %v1018 = vsel %vm1017, 1, 0
      %vm1019 = vcmp.eq.s32.totalorder %v1018, 1
      %v1020 = vsel %vm1019, %v965, 1e+30
      %v1021 = vsel %vm880, %v1020, inf
      %1022 = vmin.xlane.f32.xlu0 %v1021
      %v1023 = vpop.xlane.xlu0 %1022
      %vm1024 = vcmp.le.f32.partialorder %v1020, %v1023
      %v1025 = vsel %vm1024, %v414, 27.0
      %v1026 = vsel %vm880, %v1025, inf
      %1027 = vmin.xlane.f32.xlu0 %v1026
      %v1028 = vpop.xlane.xlu0 %1027
      %vm1029 = vcmp.eq.f32.partialorder %v414, %v1028
      %v1030 = vsel %vm1029, 1, 0
      %v1031 = vcvt.s32.f32 %v1030
      %v1032 = vmul.f32 %v423, %v1031
      %v1033 = vadd.f32 %v1016, %v1032
      %vm1034 = vcmp.gt.f32.partialorder %v425, 0.0
      %v1035 = vsel %vm1034, 1, 0
      %vm1036 = vcmp.eq.s32.totalorder %v1035, 1
      %v1037 = vsel %vm1036, %v965, 1e+30
      %v1038 = vsel %vm880, %v1037, inf
      %1039 = vmin.xlane.f32.xlu0 %v1038
      %v1040 = vpop.xlane.xlu0 %1039
      %vm1041 = vcmp.le.f32.partialorder %v1037, %v1040
      %v1042 = vsel %vm1041, %v414, 27.0
      %v1043 = vsel %vm880, %v1042, inf
      %1044 = vmin.xlane.f32.xlu0 %v1043
      %v1045 = vpop.xlane.xlu0 %1044
      %vm1046 = vcmp.eq.f32.partialorder %v414, %v1045
      %v1047 = vsel %vm1046, 1, 0
      %v1048 = vcvt.s32.f32 %v1047
      %v1049 = vmul.f32 %v425, %v1048
      %v1050 = vadd.f32 %v1033, %v1049
      %vm1051 = vcmp.gt.f32.partialorder %v427, 0.0
      %v1052 = vsel %vm1051, 1, 0
      %vm1053 = vcmp.eq.s32.totalorder %v1052, 1
      %v1054 = vsel %vm1053, %v965, 1e+30
      %v1055 = vsel %vm880, %v1054, inf
      %1056 = vmin.xlane.f32.xlu0 %v1055
      %v1057 = vpop.xlane.xlu0 %1056
      %vm1058 = vcmp.le.f32.partialorder %v1054, %v1057
      %v1059 = vsel %vm1058, %v414, 27.0
      %v1060 = vsel %vm880, %v1059, inf
      %1061 = vmin.xlane.f32.xlu0 %v1060
      %v1062 = vpop.xlane.xlu0 %1061
      %vm1063 = vcmp.eq.f32.partialorder %v414, %v1062
      %v1064 = vsel %vm1063, 1, 0
      %v1065 = vcvt.s32.f32 %v1064
      %v1066 = vmul.f32 %v427, %v1065
      %v1067 = vadd.f32 %v1050, %v1066
      %v1068 = vsel %vm880, %v1067, 0.0
      %v1069 = vrot.slane %v1068, 4
      %v1070 = vadd.f32 %v1068, %v1069
      %v1071 = vrot.slane %v1070, 2
      %v1072 = vadd.f32 %v1070, %v1071
      %v1073 = vrot.slane %v1072, 1
      %v1074 = vadd.f32 %v1072, %v1073
      %1075 = vmatprep.subr.mxu0 0.0
      %1076 = vmatpush1.msra.mxu0 0.0
      %1077 = vmatprep.subr.mxu0 0.0
      %1078 = vmatpush1.msra.mxu0 0.0
      %1079 = vmatprep.subr.mxu0 0.0
      %1080 = vmatpush1.msra.mxu0 0.0
      %1081 = vmatprep.subr.mxu0 0.0
      %1082 = vmatpush1.msra.mxu0 0.0
      %1083 = vmatprep.subr.mxu0 0.0
      %1084 = vmatpush1.msra.mxu0 0.0
      %1085 = vmatprep.subr.mxu0 0.0
      %1086 = vmatpush1.msra.mxu0 0.0
      %1087 = vmatprep.subr.mxu0 0.0
      %1088 = vmatpush1.msra.mxu0 0.0
      %1089 = vmatprep.subr.mxu0 0.0
      %1090 = vmatpush1.msra.mxu0 0.0
      %1091 = vmatprep.subr.mxu0 0.0
      %1092 = vmatpush1.msra.mxu0 0.0
      %1093 = vmatprep.subr.mxu0 0.0
      %1094 = vmatpush1.msra.mxu0 0.0
      %1095 = vmatprep.subr.mxu0 0.0
      %1096 = vmatpush1.msra.mxu0 0.0
      %1097 = vmatprep.subr.mxu0 0.0
      %1098 = vmatpush1.msra.mxu0 0.0
      %1099 = vmatprep.subr.mxu0 0.0
      %1100 = vmatpush1.msra.mxu0 0.0
      %1101 = vmatprep.subr.mxu0 0.0
      %1102 = vmatpush1.msra.mxu0 0.0
      %1103 = vmatprep.subr.mxu0 0.0
      %1104 = vmatpush1.msra.mxu0 0.0
      %1105 = vmatprep.subr.mxu0 0.0
      %1106 = vmatpush1.msra.mxu0 %v1067
      %1107 = vmatprep.subr.mxu0 0.0
      %1108 = vmatpush2.msra.mxu0 0.0
      %1109 = vmatprep.subr.mxu0 0.0
      %1110 = vmatpush2.msra.mxu0 0.0
      %1111 = vmatprep.subr.mxu0 0.0
      %1112 = vmatpush2.msra.mxu0 0.0
      %1113 = vmatprep.subr.mxu0 0.0
      %1114 = vmatpush2.msra.mxu0 0.0
      %1115 = vmatprep.subr.mxu0 0.0
      %1116 = vmatpush2.msra.mxu0 0.0
      %1117 = vmatprep.subr.mxu0 0.0
      %1118 = vmatpush2.msra.mxu0 0.0
      %1119 = vmatprep.subr.mxu0 0.0
      %1120 = vmatpush2.msra.mxu0 0.0
      %1121 = vmatprep.subr.mxu0 0.0
      %1122 = vmatpush2.msra.mxu0 0.0
      %1123 = vmatprep.subr.mxu0 0.0
      %1124 = vmatpush2.msra.mxu0 0.0
      %1125 = vmatprep.subr.mxu0 0.0
      %1126 = vmatpush2.msra.mxu0 0.0
      %1127 = vmatprep.subr.mxu0 0.0
      %1128 = vmatpush2.msra.mxu0 0.0
      %1129 = vmatprep.subr.mxu0 0.0
      %1130 = vmatpush2.msra.mxu0 0.0
      %1131 = vmatprep.subr.mxu0 0.0
      %1132 = vmatpush2.msra.mxu0 0.0
      %1133 = vmatprep.subr.mxu0 0.0
      %1134 = vmatpush2.msra.mxu0 0.0
      %1135 = vmatprep.subr.mxu0 0.0
      %1136 = vmatpush2.msra.mxu0 0.0
      %1137 = vmatprep.subr.mxu0 0.0
      %1138 = vmatpush2.msra.mxu0 0.0
      %1139 = vmatprep.mubr.f32.mxu0 0.0
      %1140 = vmatmul.mubr.f32.gmra.mxu0 %v654
      %v1141 = vpop.f32.mrf.mxu0
      %v1142 = vadd.f32 0.0, %v1141
      %v1143 = vpop.f32.mrf.mxu0
      %1144 = vmatprep.mubr.f32.mxu0 0.0
      %1145 = vmatmul.mubr.f32.gmra.mxu0 %v657
      %v1146 = vpop.f32.mrf.mxu0
      %v1147 = vadd.f32 0.0, %v1146
      %v1148 = vpop.f32.mrf.mxu0
      %1149 = vmatprep.mubr.f32.mxu0 0.0
      %1150 = vmatmul.mubr.f32.gmra.mxu0 %v660
      %v1151 = vpop.f32.mrf.mxu0
      %v1152 = vadd.f32 0.0, %v1151
      %v1153 = vpop.f32.mrf.mxu0
      %1154 = vmatprep.mubr.f32.mxu0 0.0
      %1155 = vmatmul.mubr.f32.gmra.mxu0 %v663
      %v1156 = vpop.f32.mrf.mxu0
      %v1157 = vadd.f32 0.0, %v1156
      %v1158 = vpop.f32.mrf.mxu0
      %1159 = vdwg.mxu0
      %v1160 = vmax.f32 %v1074, 1.0
      %v1161 = vrcp.pop %v1160
      %v1162 = vmul.f32 1.0, %v1161
      %v1163 = vmul.f32 %v1142, %v1162
      %v1164 = vmul.f32 %v1147, %v1162
      %v1165 = vmul.f32 %v1152, %v1162
      %v1166 = vmul.f32 %v1157, %v1162
      %vm1167 = vcmp.gt.f32.partialorder %v1074, 0.0
      %v1168 = vsel %vm1167, 1, 0
      %vm1169 = vcmp.eq.s32.totalorder %v1168, 1
      %v1170 = vsel %vm1169, %v1163, %v860
      %v1171 = vsel %vm1169, %v1164, %v861
      %v1172 = vsel %vm1169, %v1165, %v862
      %v1173 = vsel %vm1169, %v1166, %v863
      %vm1174 = vcmp.gt.f32.partialorder %v864, 0.0
      %v1175 = vsel %vm1174, 1, 0
      %vm1176 = vcmp.eq.s32.totalorder %v1175, 1
      %v1177 = vsel %vm1176, %v860, %v1170
      %v1178 = vsel %vm1176, %v861, %v1171
      %v1179 = vsel %vm1176, %v862, %v1172
      %v1180 = vsel %vm1176, %v863, %v1173
      %v1181 = vsub.f32 %v1177, %v860
      %v1182 = vsub.f32 %v1178, %v861
      %v1183 = vsub.f32 %v1179, %v862
      %v1184 = vsub.f32 %v1180, %v863
      %v1185 = vmul.f32 %v1181, %v1181
      %v1186 = vmul.f32 %v1182, %v1182
      %v1187 = vmul.f32 %v1183, %v1183
      %v1188 = vmul.f32 %v1184, %v1184
      %v1189 = vsel %vm880, %v1185, 0.0
      %v1190 = vsel %vm880, %v1186, 0.0
      %v1191 = vadd.f32 %v1189, %v1190
      %v1192 = vsel %vm880, %v1187, 0.0
      %v1193 = vadd.f32 %v1191, %v1192
      %v1194 = vsel %vm880, %v1188, 0.0
      %v1195 = vadd.f32 %v1193, %v1194
      %v1196 = vrot.slane %v1195, 4
      %v1197 = vadd.f32 %v1195, %v1196
      %v1198 = vrot.slane %v1197, 2
      %v1199 = vadd.f32 %v1197, %v1198
      %v1200 = vrot.slane %v1199, 1
      %v1201 = vadd.f32 %v1199, %v1200
      %v1202 = vmul.f32 %v432, %v1201
      %vm1203 = vcmask 218112
      %v1204 = vsel %vm1203, %v1202, -inf
      %1205 = vmax.xlane.f32.xlu0 %v1204
      %v1206 = vpop.xlane.xlu0 %1205
      %vm1207 = vcmp.lt.f32.partialorder %v1206, 9.999999e-09
      %v1208 = vsel %vm1207, 1, 0
      %v1209 = vcvt.s32.f32 %v1208
      %v1210 = vmul.f32 %v432, %v1209
      %v1211 = vsel %vm1203, %v1210, -inf
      %v1212 = vrot.slane %v1211, 4
      %v1213 = vmax.f32 %v1211, %v1212
      %v1214 = vrot.slane %v1213, 2
      %v1215 = vmax.f32 %v1213, %v1214
      %v1216 = vrot.slane %v1215, 1
      %v1217 = vmax.f32 %v1215, %v1216
      %v1218 = vmax.f32 %v864, %v1217
      %s1219 = sadd.s32 %s859, 1
    $region14: #{_device_forward.1} parent=1 // loop_footer
      _
    $region15: #{_device_forward.1} parent=1 // loop_footer_branch
      %858 = sbr.rel target = $region11
    $region16: #{_device_forward.1} parent=1 // loop_exit
      _
    %v1220 = vmul.f32 %v860, %v860
    %v1221 = vmul.f32 %v861, %v861
    %v1222 = vmul.f32 %v862, %v862
    %v1223 = vmul.f32 %v863, %v863
    %vm1224 = vcmask 220160
    %v1225 = vsel %vm1224, %v1220, 0.0
    %v1226 = vsel %vm1224, %v1221, 0.0
    %v1227 = vadd.f32 %v1225, %v1226
    %v1228 = vsel %vm1224, %v1222, 0.0
    %v1229 = vadd.f32 %v1227, %v1228
    %v1230 = vsel %vm1224, %v1223, 0.0
    %v1231 = vadd.f32 %v1229, %v1230
    %v1232 = vrot.slane %v1231, 4
    %v1233 = vadd.f32 %v1231, %v1232
    %v1234 = vrot.slane %v1233, 2
    %v1235 = vadd.f32 %v1233, %v1234
    %v1236 = vrot.slane %v1235, 1
    %v1237 = vadd.f32 %v1235, %v1236
    %1238 = vmatprep.subr.mxu0 0.0
    %1239 = vmatpush1.msra.mxu0 0.0
    %1240 = vmatprep.subr.mxu0 0.0
    %1241 = vmatpush1.msra.mxu0 0.0
    %1242 = vmatprep.subr.mxu0 0.0
    %1243 = vmatpush1.msra.mxu0 0.0
    %1244 = vmatprep.subr.mxu0 0.0
    %1245 = vmatpush1.msra.mxu0 0.0
    %1246 = vmatprep.subr.mxu0 0.0
    %1247 = vmatpush1.msra.mxu0 0.0
    %1248 = vmatprep.subr.mxu0 0.0
    %1249 = vmatpush1.msra.mxu0 0.0
    %1250 = vmatprep.subr.mxu0 0.0
    %1251 = vmatpush1.msra.mxu0 0.0
    %1252 = vmatprep.subr.mxu0 0.0
    %1253 = vmatpush1.msra.mxu0 0.0
    %1254 = vmatprep.subr.mxu0 0.0
    %1255 = vmatpush1.msra.mxu0 0.0
    %1256 = vmatprep.subr.mxu0 0.0
    %1257 = vmatpush1.msra.mxu0 0.0
    %1258 = vmatprep.subr.mxu0 0.0
    %1259 = vmatpush1.msra.mxu0 0.0
    %1260 = vmatprep.subr.mxu0 0.0
    %1261 = vmatpush1.msra.mxu0 0.0
    %1262 = vmatprep.subr.mxu0 0.0
    %1263 = vmatpush1.msra.mxu0 %v863
    %1264 = vmatprep.subr.mxu0 0.0
    %1265 = vmatpush1.msra.mxu0 %v862
    %1266 = vmatprep.subr.mxu0 0.0
    %1267 = vmatpush1.msra.mxu0 %v861
    %1268 = vmatprep.subr.mxu0 0.0
    %1269 = vmatpush1.msra.mxu0 %v860
    %1270 = vmatprep.subr.mxu0 0.0
    %1271 = vmatpush2.msra.mxu0 0.0
    %1272 = vmatprep.subr.mxu0 0.0
    %1273 = vmatpush2.msra.mxu0 0.0
    %1274 = vmatprep.subr.mxu0 0.0
    %1275 = vmatpush2.msra.mxu0 0.0
    %1276 = vmatprep.subr.mxu0 0.0
    %1277 = vmatpush2.msra.mxu0 0.0
    %1278 = vmatprep.subr.mxu0 0.0
    %1279 = vmatpush2.msra.mxu0 0.0
    %1280 = vmatprep.subr.mxu0 0.0
    %1281 = vmatpush2.msra.mxu0 0.0
    %1282 = vmatprep.subr.mxu0 0.0
    %1283 = vmatpush2.msra.mxu0 0.0
    %1284 = vmatprep.subr.mxu0 0.0
    %1285 = vmatpush2.msra.mxu0 0.0
    %1286 = vmatprep.subr.mxu0 0.0
    %1287 = vmatpush2.msra.mxu0 0.0
    %1288 = vmatprep.subr.mxu0 0.0
    %1289 = vmatpush2.msra.mxu0 0.0
    %1290 = vmatprep.subr.mxu0 0.0
    %1291 = vmatpush2.msra.mxu0 0.0
    %1292 = vmatprep.subr.mxu0 0.0
    %1293 = vmatpush2.msra.mxu0 0.0
    %1294 = vmatprep.subr.mxu0 0.0
    %1295 = vmatpush2.msra.mxu0 0.0
    %1296 = vmatprep.subr.mxu0 0.0
    %1297 = vmatpush2.msra.mxu0 0.0
    %1298 = vmatprep.subr.mxu0 0.0
    %1299 = vmatpush2.msra.mxu0 0.0
    %1300 = vmatprep.subr.mxu0 0.0
    %1301 = vmatpush2.msra.mxu0 0.0
    %1302 = vmatprep.mubr.f32.mxu0 0.0
    %1303 = vmatmul.mubr.f32.gmra.mxu0 %v129
    %v1304 = vpop.f32.mrf.mxu0
    %v1305 = vadd.f32 0.0, %v1304
    %v1306 = vpop.f32.mrf.mxu0
    %1307 = vdwg.mxu0
    %v1308 = vmul.f32 %v1305, 2.0
    %v1309 = vsub.f32 %v1237, %v1308
    %vm1310 = vcmp.gt.f32.partialorder %v417, 0.0
    %v1311 = vsel %vm1310, 1, 0
    %vm1312 = vcmp.eq.s32.totalorder %v1311, 1
    %v1313 = vsel %vm1312, %v1309, 1e+30
    %v1314 = vsel %vm1224, %v1313, inf
    %1315 = vmin.xlane.f32.xlu0 %v1314
    %v1316 = vpop.xlane.xlu0 %1315
    %vm1317 = vcmp.le.f32.partialorder %v1313, %v1316
    %v1318 = vsel %vm1317, %v414, 27.0
    %v1319 = vsel %vm1224, %v1318, inf
    %1320 = vmin.xlane.f32.xlu0 %v1319
    %v1321 = vpop.xlane.xlu0 %1320
    %vm1322 = vcmp.eq.f32.partialorder %v414, %v1321
    %v1323 = vsel %vm1322, 1, 0
    %v1324 = vcvt.s32.f32 %v1323
    %v1325 = vmul.f32 %v417, %v1324
    %v1326 = vadd.f32 %v1325, 0.0
    %vm1327 = vcmp.gt.f32.partialorder %v419, 0.0
    %v1328 = vsel %vm1327, 1, 0
    %vm1329 = vcmp.eq.s32.totalorder %v1328, 1
    %v1330 = vsel %vm1329, %v1309, 1e+30
    %v1331 = vsel %vm1224, %v1330, inf
    %1332 = vmin.xlane.f32.xlu0 %v1331
    %v1333 = vpop.xlane.xlu0 %1332
    %vm1334 = vcmp.le.f32.partialorder %v1330, %v1333
    %v1335 = vsel %vm1334, %v414, 27.0
    %v1336 = vsel %vm1224, %v1335, inf
    %1337 = vmin.xlane.f32.xlu0 %v1336
    %v1338 = vpop.xlane.xlu0 %1337
    %vm1339 = vcmp.eq.f32.partialorder %v414, %v1338
    %v1340 = vsel %vm1339, 1, 0
    %v1341 = vcvt.s32.f32 %v1340
    %v1342 = vmul.f32 %v419, %v1341
    %v1343 = vadd.f32 %v1326, %v1342
    %vm1344 = vcmp.gt.f32.partialorder %v421, 0.0
    %v1345 = vsel %vm1344, 1, 0
    %vm1346 = vcmp.eq.s32.totalorder %v1345, 1
    %v1347 = vsel %vm1346, %v1309, 1e+30
    %v1348 = vsel %vm1224, %v1347, inf
    %1349 = vmin.xlane.f32.xlu0 %v1348
    %v1350 = vpop.xlane.xlu0 %1349
    %vm1351 = vcmp.le.f32.partialorder %v1347, %v1350
    %v1352 = vsel %vm1351, %v414, 27.0
    %v1353 = vsel %vm1224, %v1352, inf
    %1354 = vmin.xlane.f32.xlu0 %v1353
    %v1355 = vpop.xlane.xlu0 %1354
    %vm1356 = vcmp.eq.f32.partialorder %v414, %v1355
    %v1357 = vsel %vm1356, 1, 0
    %v1358 = vcvt.s32.f32 %v1357
    %v1359 = vmul.f32 %v421, %v1358
    %v1360 = vadd.f32 %v1343, %v1359
    %vm1361 = vcmp.gt.f32.partialorder %v423, 0.0
    %v1362 = vsel %vm1361, 1, 0
    %vm1363 = vcmp.eq.s32.totalorder %v1362, 1
    %v1364 = vsel %vm1363, %v1309, 1e+30
    %v1365 = vsel %vm1224, %v1364, inf
    %1366 = vmin.xlane.f32.xlu0 %v1365
    %v1367 = vpop.xlane.xlu0 %1366
    %vm1368 = vcmp.le.f32.partialorder %v1364, %v1367
    %v1369 = vsel %vm1368, %v414, 27.0
    %v1370 = vsel %vm1224, %v1369, inf
    %1371 = vmin.xlane.f32.xlu0 %v1370
    %v1372 = vpop.xlane.xlu0 %1371
    %vm1373 = vcmp.eq.f32.partialorder %v414, %v1372
    %v1374 = vsel %vm1373, 1, 0
    %v1375 = vcvt.s32.f32 %v1374
    %v1376 = vmul.f32 %v423, %v1375
    %v1377 = vadd.f32 %v1360, %v1376
    %vm1378 = vcmp.gt.f32.partialorder %v425, 0.0
    %v1379 = vsel %vm1378, 1, 0
    %vm1380 = vcmp.eq.s32.totalorder %v1379, 1
    %v1381 = vsel %vm1380, %v1309, 1e+30
    %v1382 = vsel %vm1224, %v1381, inf
    %1383 = vmin.xlane.f32.xlu0 %v1382
    %v1384 = vpop.xlane.xlu0 %1383
    %vm1385 = vcmp.le.f32.partialorder %v1381, %v1384
    %v1386 = vsel %vm1385, %v414, 27.0
    %v1387 = vsel %vm1224, %v1386, inf
    %1388 = vmin.xlane.f32.xlu0 %v1387
    %v1389 = vpop.xlane.xlu0 %1388
    %vm1390 = vcmp.eq.f32.partialorder %v414, %v1389
    %v1391 = vsel %vm1390, 1, 0
    %v1392 = vcvt.s32.f32 %v1391
    %v1393 = vmul.f32 %v425, %v1392
    %v1394 = vadd.f32 %v1377, %v1393
    %vm1395 = vcmp.gt.f32.partialorder %v427, 0.0
    %v1396 = vsel %vm1395, 1, 0
    %vm1397 = vcmp.eq.s32.totalorder %v1396, 1
    %v1398 = vsel %vm1397, %v1309, 1e+30
    %v1399 = vsel %vm1224, %v1398, inf
    %1400 = vmin.xlane.f32.xlu0 %v1399
    %v1401 = vpop.xlane.xlu0 %1400
    %vm1402 = vcmp.le.f32.partialorder %v1398, %v1401
    %v1403 = vsel %vm1402, %v414, 27.0
    %v1404 = vsel %vm1224, %v1403, inf
    %1405 = vmin.xlane.f32.xlu0 %v1404
    %v1406 = vpop.xlane.xlu0 %1405
    %vm1407 = vcmp.eq.f32.partialorder %v414, %v1406
    %v1408 = vsel %vm1407, 1, 0
    %v1409 = vcvt.s32.f32 %v1408
    %v1410 = vmul.f32 %v427, %v1409
    %v1411 = vadd.f32 %v1394, %v1410
    %v1412 = vsel %vm1224, %v1411, 0.0
    %v1413 = vrot.slane %v1412, 4
    %v1414 = vadd.f32 %v1412, %v1413
    %v1415 = vrot.slane %v1414, 2
    %v1416 = vadd.f32 %v1414, %v1415
    %v1417 = vrot.slane %v1416, 1
    %v1418 = vadd.f32 %v1416, %v1417
    %v1420 = vsel %vm381, %v215, 0
    %1422 = vmatprep.subr.mxu0 0.0
    %1423 = vmatpush1.msra.mxu0 0.0
    %1424 = vmatprep.subr.mxu0 0.0
    %1425 = vmatpush1.msra.mxu0 0.0
    %1426 = vmatprep.subr.mxu0 0.0
    %1427 = vmatpush1.msra.mxu0 0.0
    %1428 = vmatprep.subr.mxu0 0.0
    %1429 = vmatpush1.msra.mxu0 0.0
    %1430 = vmatprep.subr.mxu0 0.0
    %1431 = vmatpush1.msra.mxu0 0.0
    %1432 = vmatprep.subr.mxu0 0.0
    %1433 = vmatpush1.msra.mxu0 0.0
    %1434 = vmatprep.subr.mxu0 0.0
    %1435 = vmatpush1.msra.mxu0 0.0
    %1436 = vmatprep.subr.mxu0 0.0
    %1437 = vmatpush1.msra.mxu0 0.0
    %1438 = vmatprep.subr.mxu0 0.0
    %1439 = vmatpush1.msra.mxu0 0.0
    %1440 = vmatprep.subr.mxu0 0.0
    %1441 = vmatpush1.msra.mxu0 0.0
    %1442 = vmatprep.subr.mxu0 0.0
    %1443 = vmatpush1.msra.mxu0 0.0
    %1444 = vmatprep.subr.mxu0 0.0
    %1445 = vmatpush1.msra.mxu0 0.0
    %1446 = vmatprep.subr.mxu0 0.0
    %1447 = vmatpush1.msra.mxu0 0.0
    %1448 = vmatprep.subr.mxu0 0.0
    %1449 = vmatpush1.msra.mxu0 0.0
    %1450 = vmatprep.subr.mxu0 0.0
    %1451 = vmatpush1.msra.mxu0 0.0
    %1452 = vmatprep.subr.mxu0 0.0
    %1453 = vmatpush1.msra.mxu0 %v1411
    %1454 = vmatprep.subr.mxu0 0.0
    %1455 = vmatpush2.msra.mxu0 0.0
    %1456 = vmatprep.subr.mxu0 0.0
    %1457 = vmatpush2.msra.mxu0 0.0
    %1458 = vmatprep.subr.mxu0 0.0
    %1459 = vmatpush2.msra.mxu0 0.0
    %1460 = vmatprep.subr.mxu0 0.0
    %1461 = vmatpush2.msra.mxu0 0.0
    %1462 = vmatprep.subr.mxu0 0.0
    %1463 = vmatpush2.msra.mxu0 0.0
    %1464 = vmatprep.subr.mxu0 0.0
    %1465 = vmatpush2.msra.mxu0 0.0
    %1466 = vmatprep.subr.mxu0 0.0
    %1467 = vmatpush2.msra.mxu0 0.0
    %1468 = vmatprep.subr.mxu0 0.0
    %1469 = vmatpush2.msra.mxu0 0.0
    %1470 = vmatprep.subr.mxu0 0.0
    %1471 = vmatpush2.msra.mxu0 0.0
    %1472 = vmatprep.subr.mxu0 0.0
    %1473 = vmatpush2.msra.mxu0 0.0
    %1474 = vmatprep.subr.mxu0 0.0
    %1475 = vmatpush2.msra.mxu0 0.0
    %1476 = vmatprep.subr.mxu0 0.0
    %1477 = vmatpush2.msra.mxu0 0.0
    %1478 = vmatprep.subr.mxu0 0.0
    %1479 = vmatpush2.msra.mxu0 0.0
    %1480 = vmatprep.subr.mxu0 0.0
    %1481 = vmatpush2.msra.mxu0 0.0
    %1482 = vmatprep.subr.mxu0 0.0
    %1483 = vmatpush2.msra.mxu0 0.0
    %1484 = vmatprep.subr.mxu0 0.0
    %1485 = vmatpush2.msra.mxu0 0.0
    %1486 = vmatprep.mubr.f32.mxu0 0.0
    %1487 = vmatmul.mubr.f32.gmra.mxu0 %v1420
    %v1488 = vpop.f32.mrf.mxu0
    %v1489 = vadd.f32 0.0, %v1488
    %v1490 = vpop.f32.mrf.mxu0
    %1491 = vdwg.mxu0
    %v1492 = vmax.f32 %v1418, 1.0
    %v1493 = vrcp.pop %v1492
    %v1494 = vmul.f32 1.0, %v1493
    %v1495 = vmul.f32 %v1489, %v1494
    %vm1496 = vcmp.gt.f32.partialorder %v1411, 0.0
    %vm1497 = vcmp.eq.f32.partialorder %v1418, 0.0
    %v1498 = vsel %vm1497, 1, 0
    %vm1499 = vcmp.eq.s32.totalorder %v1498, 1
    %vm1500 = vmor %vm1496, %vm1499
    %v1501 = vsel %vm1500, 1e+30, %v1495
    %v1502 = vmul.f32 %v417, %v1411
    %v1503 = vmul.f32 %v1502, %v1418
    %v1504 = vsel %vm1224, %v1503, 0.0
    %1505 = vadd.xlane.f32.xlu0 %v1504
    %v1506 = vpop.xlane.xlu0 %1505
    %v1507 = vmul.f32 %v1502, %v1489
    %v1508 = vsel %vm1224, %v1507, 0.0
    %1509 = vadd.xlane.f32.xlu0 %v1508
    %v1510 = vpop.xlane.xlu0 %1509
    %v1511 = vsub.f32 %v1506, 1.0
    %v1512 = vmax.f32 %v1511, 1.0
    %v1513 = vrcp.pop %v1512
    %v1514 = vmul.f32 %v1510, %v1513
    %v1515 = vsel %vm1312, %v1501, 1e+30
    %v1516 = vsel %vm1224, %v1515, inf
    %1517 = vmin.xlane.f32.xlu0 %v1516
    %v1518 = vpop.xlane.xlu0 %1517
    %v1519 = vmax.f32 %v1514, %v1518
    %vm1520 = vcmp.gt.f32.partialorder %v1506, 1.0
    %vm1521 = vcmp.lt.f32.partialorder %v1518, 1e+30
    %vm1522 = vmand %vm1520, %vm1521
    %vm1523 = vcmp.gt.f32.partialorder %v1519, 0.0
    %vm1524 = vmand %vm1522, %vm1523
    %v1525 = vsub.f32 %v1518, %v1514
    %v1526 = vsel %vm1524, %v1519, 1.0
    %v1527 = vrcp.pop %v1526
    %v1528 = vmul.f32 %v1525, %v1527
    %v1529 = vsel %vm1524, %v1528, 0.0
    %vm1530 = vcmask 7168
    %v1531 = vsel %vm1530, %v1529, 0.0
    %1532 = vadd.xlane.f32.xlu0 %v1531
    %v1533 = vpop.xlane.xlu0 %1532
    %v1534 = vrot.slane %v1533, 4
    %v1535 = vadd.f32 %v1533, %v1534
    %v1536 = vrot.slane %v1535, 2
    %v1537 = vadd.f32 %v1535, %v1536
    %v1538 = vrot.slane %v1537, 1
    %v1539 = vadd.f32 %v1537, %v1538
    %s1540 = vtos %v1539
    %s1541 = smul.f32 %s1540, 0.125
    %v1542 = vstv %s1541
    %v1543 = vsel %vm438, %v1542, 0.0
    %v1544 = vadd.f32 %v1543, 0.0
    %v1545 = vsel %vm438, %v1321, 0.0
    %v1546 = vadd.f32 %v1545, 0.0
    %v1547 = vmul.f32 %v419, %v1411
    %v1548 = vmul.f32 %v1547, %v1418
    %v1549 = vsel %vm1224, %v1548, 0.0
    %1550 = vadd.xlane.f32.xlu0 %v1549
    %v1551 = vpop.xlane.xlu0 %1550
    %v1552 = vmul.f32 %v1547, %v1489
    %v1553 = vsel %vm1224, %v1552, 0.0
    %1554 = vadd.xlane.f32.xlu0 %v1553
    %v1555 = vpop.xlane.xlu0 %1554
    %v1556 = vsub.f32 %v1551, 1.0
    %v1557 = vmax.f32 %v1556, 1.0
    %v1558 = vrcp.pop %v1557
    %v1559 = vmul.f32 %v1555, %v1558
    %v1560 = vsel %vm1329, %v1501, 1e+30
    %v1561 = vsel %vm1224, %v1560, inf
    %1562 = vmin.xlane.f32.xlu0 %v1561
    %v1563 = vpop.xlane.xlu0 %1562
    %v1564 = vmax.f32 %v1559, %v1563
    %vm1565 = vcmp.gt.f32.partialorder %v1551, 1.0
    %vm1566 = vcmp.lt.f32.partialorder %v1563, 1e+30
    %vm1567 = vmand %vm1565, %vm1566
    %vm1568 = vcmp.gt.f32.partialorder %v1564, 0.0
    %vm1569 = vmand %vm1567, %vm1568
    %v1570 = vsub.f32 %v1563, %v1559
    %v1571 = vsel %vm1569, %v1564, 1.0
    %v1572 = vrcp.pop %v1571
    %v1573 = vmul.f32 %v1570, %v1572
    %v1574 = vsel %vm1569, %v1573, 0.0
    %vm1575 = vcmp.eq.s32.totalorder %v384, 1
    %v1576 = vsel %vm1530, %v1574, 0.0
    %1577 = vadd.xlane.f32.xlu0 %v1576
    %v1578 = vpop.xlane.xlu0 %1577
    %v1579 = vrot.slane %v1578, 4
    %v1580 = vadd.f32 %v1578, %v1579
    %v1581 = vrot.slane %v1580, 2
    %v1582 = vadd.f32 %v1580, %v1581
    %v1583 = vrot.slane %v1582, 1
    %v1584 = vadd.f32 %v1582, %v1583
    %s1585 = vtos %v1584
    %s1586 = smul.f32 %s1585, 0.125
    %v1587 = vstv %s1586
    %v1588 = vsel %vm1575, %v1587, 0.0
    %v1589 = vadd.f32 %v1544, %v1588
    %v1590 = vsel %vm1575, %v1338, 0.0
    %v1591 = vadd.f32 %v1546, %v1590
    %v1592 = vmul.f32 %v421, %v1411
    %v1593 = vmul.f32 %v1592, %v1418
    %v1594 = vsel %vm1224, %v1593, 0.0
    %1595 = vadd.xlane.f32.xlu0 %v1594
    %v1596 = vpop.xlane.xlu0 %1595
    %v1597 = vmul.f32 %v1592, %v1489
    %v1598 = vsel %vm1224, %v1597, 0.0
    %1599 = vadd.xlane.f32.xlu0 %v1598
    %v1600 = vpop.xlane.xlu0 %1599
    %v1601 = vsub.f32 %v1596, 1.0
    %v1602 = vmax.f32 %v1601, 1.0
    %v1603 = vrcp.pop %v1602
    %v1604 = vmul.f32 %v1600, %v1603
    %v1605 = vsel %vm1346, %v1501, 1e+30
    %v1606 = vsel %vm1224, %v1605, inf
    %1607 = vmin.xlane.f32.xlu0 %v1606
    %v1608 = vpop.xlane.xlu0 %1607
    %v1609 = vmax.f32 %v1604, %v1608
    %vm1610 = vcmp.gt.f32.partialorder %v1596, 1.0
    %vm1611 = vcmp.lt.f32.partialorder %v1608, 1e+30
    %vm1612 = vmand %vm1610, %vm1611
    %vm1613 = vcmp.gt.f32.partialorder %v1609, 0.0
    %vm1614 = vmand %vm1612, %vm1613
    %v1615 = vsub.f32 %v1608, %v1604
    %v1616 = vsel %vm1614, %v1609, 1.0
    %v1617 = vrcp.pop %v1616
    %v1618 = vmul.f32 %v1615, %v1617
    %v1619 = vsel %vm1614, %v1618, 0.0
    %vm1620 = vcmp.eq.s32.totalorder %v384, 2
    %v1621 = vsel %vm1530, %v1619, 0.0
    %1622 = vadd.xlane.f32.xlu0 %v1621
    %v1623 = vpop.xlane.xlu0 %1622
    %v1624 = vrot.slane %v1623, 4
    %v1625 = vadd.f32 %v1623, %v1624
    %v1626 = vrot.slane %v1625, 2
    %v1627 = vadd.f32 %v1625, %v1626
    %v1628 = vrot.slane %v1627, 1
    %v1629 = vadd.f32 %v1627, %v1628
    %s1630 = vtos %v1629
    %s1631 = smul.f32 %s1630, 0.125
    %v1632 = vstv %s1631
    %v1633 = vsel %vm1620, %v1632, 0.0
    %v1634 = vadd.f32 %v1589, %v1633
    %v1635 = vsel %vm1620, %v1355, 0.0
    %v1636 = vadd.f32 %v1591, %v1635
    %v1637 = vmul.f32 %v423, %v1411
    %v1638 = vmul.f32 %v1637, %v1418
    %v1639 = vsel %vm1224, %v1638, 0.0
    %1640 = vadd.xlane.f32.xlu0 %v1639
    %v1641 = vpop.xlane.xlu0 %1640
    %v1642 = vmul.f32 %v1637, %v1489
    %v1643 = vsel %vm1224, %v1642, 0.0
    %1644 = vadd.xlane.f32.xlu0 %v1643
    %v1645 = vpop.xlane.xlu0 %1644
    %v1646 = vsub.f32 %v1641, 1.0
    %v1647 = vmax.f32 %v1646, 1.0
    %v1648 = vrcp.pop %v1647
    %v1649 = vmul.f32 %v1645, %v1648
    %v1650 = vsel %vm1363, %v1501, 1e+30
    %v1651 = vsel %vm1224, %v1650, inf
    %1652 = vmin.xlane.f32.xlu0 %v1651
    %v1653 = vpop.xlane.xlu0 %1652
    %v1654 = vmax.f32 %v1649, %v1653
    %vm1655 = vcmp.gt.f32.partialorder %v1641, 1.0
    %vm1656 = vcmp.lt.f32.partialorder %v1653, 1e+30
    %vm1657 = vmand %vm1655, %vm1656
    %vm1658 = vcmp.gt.f32.partialorder %v1654, 0.0
    %vm1659 = vmand %vm1657, %vm1658
    %v1660 = vsub.f32 %v1653, %v1649
    %v1661 = vsel %vm1659, %v1654, 1.0
    %v1662 = vrcp.pop %v1661
    %v1663 = vmul.f32 %v1660, %v1662
    %v1664 = vsel %vm1659, %v1663, 0.0
    %vm1665 = vcmp.eq.s32.totalorder %v384, 3
    %v1666 = vsel %vm1530, %v1664, 0.0
    %1667 = vadd.xlane.f32.xlu0 %v1666
    %v1668 = vpop.xlane.xlu0 %1667
    %v1669 = vrot.slane %v1668, 4
    %v1670 = vadd.f32 %v1668, %v1669
    %v1671 = vrot.slane %v1670, 2
    %v1672 = vadd.f32 %v1670, %v1671
    %v1673 = vrot.slane %v1672, 1
    %v1674 = vadd.f32 %v1672, %v1673
    %s1675 = vtos %v1674
    %s1676 = smul.f32 %s1675, 0.125
    %v1677 = vstv %s1676
    %v1678 = vsel %vm1665, %v1677, 0.0
    %v1679 = vadd.f32 %v1634, %v1678
    %v1680 = vsel %vm1665, %v1372, 0.0
    %v1681 = vadd.f32 %v1636, %v1680
    %v1682 = vmul.f32 %v425, %v1411
    %v1683 = vmul.f32 %v1682, %v1418
    %v1684 = vsel %vm1224, %v1683, 0.0
    %1685 = vadd.xlane.f32.xlu0 %v1684
    %v1686 = vpop.xlane.xlu0 %1685
    %v1687 = vmul.f32 %v1682, %v1489
    %v1688 = vsel %vm1224, %v1687, 0.0
    %1689 = vadd.xlane.f32.xlu0 %v1688
    %v1690 = vpop.xlane.xlu0 %1689
    %v1691 = vsub.f32 %v1686, 1.0
    %v1692 = vmax.f32 %v1691, 1.0
    %v1693 = vrcp.pop %v1692
    %v1694 = vmul.f32 %v1690, %v1693
    %v1695 = vsel %vm1380, %v1501, 1e+30
    %v1696 = vsel %vm1224, %v1695, inf
    %1697 = vmin.xlane.f32.xlu0 %v1696
    %v1698 = vpop.xlane.xlu0 %1697
    %v1699 = vmax.f32 %v1694, %v1698
    %vm1700 = vcmp.gt.f32.partialorder %v1686, 1.0
    %vm1701 = vcmp.lt.f32.partialorder %v1698, 1e+30
    %vm1702 = vmand %vm1700, %vm1701
    %vm1703 = vcmp.gt.f32.partialorder %v1699, 0.0
    %vm1704 = vmand %vm1702, %vm1703
    %v1705 = vsub.f32 %v1698, %v1694
    %v1706 = vsel %vm1704, %v1699, 1.0
    %v1707 = vrcp.pop %v1706
    %v1708 = vmul.f32 %v1705, %v1707
    %v1709 = vsel %vm1704, %v1708, 0.0
    %vm1710 = vcmp.eq.s32.totalorder %v384, 4
    %v1711 = vsel %vm1530, %v1709, 0.0
    %1712 = vadd.xlane.f32.xlu0 %v1711
    %v1713 = vpop.xlane.xlu0 %1712
    %v1714 = vrot.slane %v1713, 4
    %v1715 = vadd.f32 %v1713, %v1714
    %v1716 = vrot.slane %v1715, 2
    %v1717 = vadd.f32 %v1715, %v1716
    %v1718 = vrot.slane %v1717, 1
    %v1719 = vadd.f32 %v1717, %v1718
    %s1720 = vtos %v1719
    %s1721 = smul.f32 %s1720, 0.125
    %v1722 = vstv %s1721
    %v1723 = vsel %vm1710, %v1722, 0.0
    %v1724 = vadd.f32 %v1679, %v1723
    %v1725 = vsel %vm1710, %v1389, 0.0
    %v1726 = vadd.f32 %v1681, %v1725
    %v1727 = vmul.f32 %v427, %v1411
    %v1728 = vmul.f32 %v1727, %v1418
    %v1729 = vsel %vm1224, %v1728, 0.0
    %1730 = vadd.xlane.f32.xlu0 %v1729
    %v1731 = vpop.xlane.xlu0 %1730
    %v1732 = vmul.f32 %v1727, %v1489
    %v1733 = vsel %vm1224, %v1732, 0.0
    %1734 = vadd.xlane.f32.xlu0 %v1733
    %v1735 = vpop.xlane.xlu0 %1734
    %v1736 = vsub.f32 %v1731, 1.0
    %v1737 = vmax.f32 %v1736, 1.0
    %v1738 = vrcp.pop %v1737
    %v1739 = vmul.f32 %v1735, %v1738
    %v1740 = vsel %vm1397, %v1501, 1e+30
    %v1741 = vsel %vm1224, %v1740, inf
    %1742 = vmin.xlane.f32.xlu0 %v1741
    %v1743 = vpop.xlane.xlu0 %1742
    %v1744 = vmax.f32 %v1739, %v1743
    %vm1745 = vcmp.gt.f32.partialorder %v1731, 1.0
    %vm1746 = vcmp.lt.f32.partialorder %v1743, 1e+30
    %vm1747 = vmand %vm1745, %vm1746
    %vm1748 = vcmp.gt.f32.partialorder %v1744, 0.0
    %vm1749 = vmand %vm1747, %vm1748
    %v1750 = vsub.f32 %v1743, %v1739
    %v1751 = vsel %vm1749, %v1744, 1.0
    %v1752 = vrcp.pop %v1751
    %v1753 = vmul.f32 %v1750, %v1752
    %v1754 = vsel %vm1749, %v1753, 0.0
    %vm1755 = vcmp.eq.s32.totalorder %v384, 5
    %v1756 = vsel %vm1530, %v1754, 0.0
    %1757 = vadd.xlane.f32.xlu0 %v1756
    %v1758 = vpop.xlane.xlu0 %1757
    %v1759 = vrot.slane %v1758, 4
    %v1760 = vadd.f32 %v1758, %v1759
    %v1761 = vrot.slane %v1760, 2
    %v1762 = vadd.f32 %v1760, %v1761
    %v1763 = vrot.slane %v1762, 1
    %v1764 = vadd.f32 %v1762, %v1763
    %s1765 = vtos %v1764
    %s1766 = smul.f32 %s1765, 0.125
    %v1767 = vstv %s1766
    %v1768 = vsel %vm1755, %v1767, 0.0
    %v1769 = vadd.f32 %v1724, %v1768
    %v1770 = vsel %vm1755, %v1406, 0.0
    %v1771 = vadd.f32 %v1726, %v1770
    %vm1772 = vcmask 40960
    %1773 = vst.msk [vmem:[%s1] sm:$0x1] %vm1772, %v1769
    %vm1774 = vcmask 48128
    %1775 = vst.msk [vmem:[%s2] sm:$0xff] %vm1774, %v1771
    // Predicated region
    $region17: #{_device_forward.1} parent=1 // pred_check
      _
    $region18: #{_device_forward.1} parent=1 // pred_check_branch
      %1777 = sbr.rel (0) target = $region20
    $region19: #{_device_forward.1} parent=1 // pred_region
      _
    $region20: #{_device_forward.1} parent=1 // pred_fallthru
      _
    // Predicated region
    $region21: #{_device_forward.1} parent=1 // pred_check
      _
    $region22: #{_device_forward.1} parent=1 // pred_check_branch
      %1779 = sbr.rel (0) target = $region24
    $region23: #{_device_forward.1} parent=1 // pred_region
      _
    $region24: #{_device_forward.1} parent=1 // pred_fallthru
      _
    // Predicated region
    $region25: #{_device_forward.1} parent=1 // pred_check
      _
    $region26: #{_device_forward.1} parent=1 // pred_check_branch
      %1781 = sbr.rel (0) target = $region28
    $region27: #{_device_forward.1} parent=1 // pred_region
      _
    $region28: #{_device_forward.1} parent=1 // pred_fallthru
      _
    // Predicated region
    $region29: #{_device_forward.1} parent=1 // pred_check
      _
    $region30: #{_device_forward.1} parent=1 // pred_check_branch
      %1783 = sbr.rel (0) target = $region32
    $region31: #{_device_forward.1} parent=1 // pred_region
      _
    $region32: #{_device_forward.1} parent=1 // pred_fallthru
      _
    // Predicated region
    $region33: #{_device_forward.1} parent=1 // pred_check
      _
    $region34: #{_device_forward.1} parent=1 // pred_check_branch
      %1785 = sbr.rel (0) target = $region36
    $region35: #{_device_forward.1} parent=1 // pred_region
      _
    $region36: #{_device_forward.1} parent=1 // pred_fallthru
      _
    // Predicated region
    $region37: #{_device_forward.1} parent=1 // pred_check
      _
    $region38: #{_device_forward.1} parent=1 // pred_check_branch
      %1787 = sbr.rel (0) target = $region40
    $region39: #{_device_forward.1} parent=1 // pred_region
      _
    $region40: #{_device_forward.1} parent=1 // pred_fallthru
      _
    %1788 = vsyncpa [#allocation3], 1

</llo_original>
